<compile_context>
chip_gen: v6e
topology: v6e:2x2x1
jax: 0.10.0
libtpu: 0.0.40
codegen_flags: <defaults>
</compile_context>

<pallas_src>
import jax
import jax.numpy as jnp
from jax import lax
from jax.experimental import pallas as pl
from jax.experimental.pallas import tpu as pltpu

EPS = 1e-5                 # PyTorch BatchNorm3d default eps
LANE = 128                 # TPU lane width


def _round_up(a, b):
    return (a + b - 1) // b * b


def _vmem_limit_bytes():
    # Budget ~60% of physical VMEM, capped at 48 MiB (v5e/v6e have 128 MiB, v7x only 64 MiB).
    try:
        cap = pltpu.get_tpu_info().vmem_capacity_bytes
    except Exception:
        cap = 128 * 1024 * 1024
    return min(48 * 1024 * 1024, int(cap * 0.6))


VMEM_LIMIT = _vmem_limit_bytes()


# ---------------------------------------------------------------------------
# Pallas kernels
# ---------------------------------------------------------------------------
def _make_conv_kernel(H, W, Cp):
    """Conv3x3x3 (stride 1, pad 1) over one (n, d) output plane.

    Inputs are 3 consecutive padded D-planes, each flattened to [Pq, Cp] bf16 (row stride
    W+2, zero halo).  The output tile has Mt = H*(W+2) rows; columns w in [0, W) of each row
    are valid conv results, the last 2 are wrap-around garbage (masked out of the BN stats
    and never written to the final output).
    """
    Wr = W + 2
    Mt = H * Wr
    # Bound the f32 accumulator to ~128 KiB (<= ~32 vregs at Cp=128) per row sub-block.
    MR = max(8, min(_round_up(Mt, 8), (131072 // (4 * Cp)) // 8 * 8))
    n_rb = -(-Mt // MR)

    def kernel(x0_ref, x1_ref, x2_ref, w_ref, out_ref, stats_ref):
        planes = (x0_ref, x1_ref, x2_ref)
        s1 = jnp.zeros((1, Cp), jnp.float32)
        s2 = jnp.zeros((1, Cp), jnp.float32)
        for rb in range(n_rb):
            r0 = rb * MR
            mr = min(MR, Mt - r0)
            acc = jnp.zeros((mr, Cp), jnp.float32)
            for kh in range(3):
                for kw in range(3):
                    s = kh * Wr + kw
                    # bf16 shifted windows straight from VMEM, lane-concat over kd -> K = 3*Cp
                    tap = jnp.concatenate(
                        [p[0, 0, r0 + s:r0 + s + mr, :] for p in planes], axis=-1)
                    acc = acc + jnp.dot(tap, w_ref[kh * 3 + kw],
                                        preferred_element_type=jnp.float32)
            out_ref[0, 0, r0:r0 + mr, :] = acc.astype(out_ref.dtype)

            # masked per-sub-block BN partials (exclude the 2 wrap columns of each row)
            col = (lax.broadcasted_iota(jnp.int32, (mr, 1), 0) + r0) % Wr
            am = jnp.where(col < W, acc, 0.0)
            s1 = s1 + jnp.sum(am, axis=0, keepdims=True)
            s2 = s2 + jnp.sum(am * am, axis=0, keepdims=True)
        stats_ref[0, 0] = jnp.concatenate([s1, s2], axis=0)

    return kernel


# ---------------------------------------------------------------------------
# pallas_call wrappers
# ---------------------------------------------------------------------------
def _conv3x3x3(xh, w9, N, D, H, W, Cp):
    """xh: [N, D+2, Pq, Cp] bf16 (zero-halo'd, plane-flattened).
    Returns conv output [N, D, Mt, Cp] bf16 and per-tile stats [N, D, 2, Cp] f32."""
    Wr = W + 2
    Mt = H * Wr
    Pq = xh.shape[2]
    kernel = _make_conv_kernel(H, W, Cp)

    # TODO(synk): xh is passed three times (one ref per kd) so each padded plane is DMA'd 3x;
    # a grid=(N,) variant with an in-kernel D loop + rotating plane buffer (manual
    # make_async_copy) would cut that HBM traffic 3x.
    in_specs = [pl.BlockSpec((1, 1, Pq, Cp), lambda n, d, kd=kd: (n, d + kd, 0, 0))
                for kd in range(3)]
    # TODO(synk): on v7x, single-buffer this constant operand (pipeline_mode=pl.Buffered(1))
    # to halve its VMEM footprint; its block index never changes so it is never re-fetched.
    in_specs.append(pl.BlockSpec((9, 3 * Cp, Cp), lambda n, d: (0, 0, 0)))

    return pl.pallas_call(
        kernel,
        out_shape=(jax.ShapeDtypeStruct((N, D, Mt, Cp), jnp.bfloat16),
                   jax.ShapeDtypeStruct((N, D, 2, Cp), jnp.float32)),
        grid=(N, D),
        in_specs=in_specs,
        out_specs=[pl.BlockSpec((1, 1, Mt, Cp), lambda n, d: (n, d, 0, 0)),
                   pl.BlockSpec((1, 1, 2, Cp), lambda n, d: (n, d, 0, 0))],
        compiler_params=pltpu.CompilerParams(
            dimension_semantics=("parallel", "parallel"),
            vmem_limit_bytes=VMEM_LIMIT),
    )(xh, xh, xh, w9)


def _bn_relu_halo(conv_raw, scale, bias, N, D, H, W, Cp, Pq):
    """BN1 + ReLU fused with conv2's halo construction: writes the zero-halo'd,
    plane-flattened bf16 layout [N, D+2, Pq, Cp] that _conv3x3x3 consumes."""
    Wr = W + 2
    Mt = H * Wr

    def kernel(x_ref, s_ref, b_ref, o_ref):
        dp = pl.program_id(1)
        o_ref[0, 0] = jnp.zeros((Pq, Cp), o_ref.dtype)     # halo / border / tail zeros

        @pl.when(jnp.logical_and(dp >= 1, dp <= D))
        def _():
            y = x_ref[0, 0].astype(jnp.float32) * s_ref[...] + b_ref[...]
            y = jnp.maximum(y, 0.0)
            col = lax.broadcasted_iota(jnp.int32, (Mt, 1), 0) % Wr
            y = jnp.where(col < W, y, 0.0)                 # wrap columns become halo zeros
            # interior of padded plane starts at flattened offset (W+2)+1 = W+3
            o_ref[0, 0, W + 3:W + 3 + Mt, :] = y.astype(o_ref.dtype)

    def x_map(n, dp):
        d = jnp.minimum(jnp.maximum(dp - 1, 0), D - 1)     # edge planes fetch a dummy block
        return (n, d, 0, 0)

    return pl.pallas_call(
        kernel,
        out_shape=jax.ShapeDtypeStruct((N, D + 2, Pq, Cp), jnp.bfloat16),
        grid=(N, D + 2),
        in_specs=[pl.BlockSpec((1, 1, Mt, Cp), x_map),
                  pl.BlockSpec((1, Cp), lambda n, dp: (0, 0)),
                  pl.BlockSpec((1, Cp), lambda n, dp: (0, 0))],
        out_specs=pl.BlockSpec((1, 1, Pq, Cp), lambda n, dp: (n, dp, 0, 0)),
        compiler_params=pltpu.CompilerParams(
            dimension_semantics=("parallel", "parallel"),
            vmem_limit_bytes=VMEM_LIMIT),
    )(conv_raw, scale, bias)


def _bn_add_relu(conv_raw, identity_ndhwc, scale, bias, N, D, H, W, Cp):
    """BN2 + residual + ReLU.  Identity is read directly from the bf16 NDHWC input; the
    output is written as lane-dense (1,1,H,W,Cp) blocks (no wrap-column garbage)."""
    Wr = W + 2
    Mt = H * Wr

    def kernel(x_ref, id_ref, s_ref, b_ref, o_ref):
        sc = s_ref[...]
        bi = b_ref[...]
        for h in range(H):   # static unroll; each row skips the 2 wrap columns of the conv tile
            y = x_ref[0, 0, h * Wr:h * Wr + W, :].astype(jnp.float32) * sc + bi
            y = y + id_ref[0, 0, h].astype(jnp.float32)
            o_ref[0, 0, h] = jnp.maximum(y, 0.0).astype(o_ref.dtype)

    return pl.pallas_call(
        kernel,
        out_shape=jax.ShapeDtypeStruct((N, D, H, W, Cp), jnp.float32),
        grid=(N, D),
        in_specs=[pl.BlockSpec((1, 1, Mt, Cp), lambda n, d: (n, d, 0, 0)),
                  pl.BlockSpec((1, 1, H, W, Cp), lambda n, d: (n, d, 0, 0, 0)),
                  pl.BlockSpec((1, Cp), lambda n, d: (0, 0)),
                  pl.BlockSpec((1, Cp), lambda n, d: (0, 0))],
        out_specs=pl.BlockSpec((1, 1, H, W, Cp), lambda n, d: (n, d, 0, 0, 0)),
        compiler_params=pltpu.CompilerParams(
            dimension_semantics=("parallel", "parallel"),
            vmem_limit_bytes=VMEM_LIMIT),
    )(conv_raw, identity_ndhwc, scale, bias)


# ---------------------------------------------------------------------------
# JAX glue (input halo build, weight reshape, tiny BN finalize, final transpose)
# ---------------------------------------------------------------------------
def _halo_flatten(x_ndhwc_bf16, Pq):
    """[N, D, H, W, Cp] bf16 -> zero-halo'd, plane-flattened [N, D+2, Pq, Cp] bf16."""
    N, D, H, W, Cp = x_ndhwc_bf16.shape
    xp = jnp.pad(x_ndhwc_bf16, ((0, 0), (1, 1), (1, 1), (1, 1), (0, 0)))
    xf = xp.reshape(N, D + 2, (H + 2) * (W + 2), Cp)
    return jnp.pad(xf, ((0, 0), (0, 0), (0, Pq - (H + 2) * (W + 2)), (0, 0)))


def _weight_matrix(w_oidhw, Cp):
    """PyTorch Conv3d weight [Cout, Cin, 3, 3, 3] -> [9, 3*Cp, Cp] bf16 (tap=(kh,kw), K=(kd,Cin))."""
    Co, Ci = w_oidhw.shape[0], w_oidhw.shape[1]
    wt = jnp.transpose(w_oidhw, (3, 4, 2, 1, 0))                       # [kh, kw, kd, Ci, Co]
    wt = jnp.pad(wt, ((0, 0), (0, 0), (0, 0), (0, Cp - Ci), (0, Cp - Co)))
    return wt.reshape(9, 3 * Cp, Cp).astype(jnp.bfloat16)


def _bn_affine(stats, gamma, beta, count, Cp):
    """Finalize training-mode BN from masked per-tile (sum, sum_sq) partials."""
    # TODO(synk): E[x^2]-E[x]^2 in f32 can cancel for very large tensors; a Welford-style
    # merge of the per-tile partials would be more robust.
    s = jnp.sum(stats, axis=(0, 1))                                    # [2, Cp]
    mean = s[0] / count
    var = jnp.maximum(s[1] / count - mean * mean, 0.0)                 # biased variance
    C = gamma.shape[0]
    g = jnp.pad(gamma.astype(jnp.float32), (0, Cp - C))
    b = jnp.pad(beta.astype(jnp.float32), (0, Cp - C))
    scale = g * lax.rsqrt(var + EPS)
    bias = b - mean * scale
    return scale.reshape(1, Cp), bias.reshape(1, Cp)


def basic_block_forward(x_ncdhw, w1, g1, b1, w2, g2, b2):
    """Forward of BasicBlock(inplanes=planes, stride=1, downsample=None), training-mode BN."""
    N, Cin, D, H, W = x_ncdhw.shape
    C = w1.shape[0]
    assert Cin == C, "downsample is None -> inplanes must equal planes"
    Cp = _round_up(C, LANE)
    Wr = W + 2
    Mt = H * Wr
    Pq = _round_up(Mt + 2 * W + 6, 8)      # flattened padded-plane length (+ tap overrun)
    count = float(N * D * H * W)

    # NDHWC, lane-padded channels, bf16: conv input source AND residual source.
    xcb = jnp.pad(jnp.transpose(x_ncdhw, (0, 2, 3, 4, 1)),
                  ((0, 0), (0, 0), (0, 0), (0, 0), (0, Cp - C))).astype(jnp.bfloat16)

    w1m = _weight_matrix(w1, Cp)
    w2m = _weight_matrix(w2, Cp)

    # ---- conv1 (+ BN1 partial stats) -> fused BN1 + ReLU + conv2 halo ----------
    conv1_raw, stats1 = _conv3x3x3(_halo_flatten(xcb, Pq), w1m, N, D, H, W, Cp)
    scale1, bias1 = _bn_affine(stats1, g1, b1, count, Cp)
    y1h = _bn_relu_halo(conv1_raw, scale1, bias1, N, D, H, W, Cp, Pq)   # [N, D+2, Pq, Cp]

    # ---- conv2 (+ BN2 partial stats) -> fused BN2 + residual + ReLU ------------
    conv2_raw, stats2 = _conv3x3x3(y1h, w2m, N, D, H, W, Cp)
    scale2, bias2 = _bn_affine(stats2, g2, b2, count, Cp)
    out = _bn_add_relu(conv2_raw, xcb, scale2, bias2, N, D, H, W, Cp)   # [N, D, H, W, Cp] f32

    return jnp.transpose(out[..., :C], (0, 4, 1, 2, 3))                 # back to NCDHW


# ---------------------------------------------------------------------------
# Pure-JAX f32 reference (mirrors the PyTorch forward, training-mode BN)
# ---------------------------------------------------------------------------
def _bn_train(y, gamma, beta):
    mean = y.mean(axis=(0, 2, 3, 4), keepdims=True)
    var = ((y - mean) ** 2).mean(axis=(0, 2, 3, 4), keepdims=True)
    return ((y - mean) / jnp.sqrt(var + EPS) * gamma.reshape(1, -1, 1, 1, 1)
            + beta.reshape(1, -1, 1, 1, 1))


def _conv3_ref(x, w):
    return lax.conv_general_dilated(
        x, w, window_strides=(1, 1, 1), padding=((1, 1), (1, 1), (1, 1)),
        dimension_numbers=("NCDHW", "OIDHW", "NCDHW"))


def reference_forward(x, w1, g1, b1, w2, g2, b2):
    out = jnp.maximum(_bn_train(_conv3_ref(x, w1), g1, b1), 0.0)
    out = _bn_train(_conv3_ref(out, w2), g2, b2) + x
    return jnp.maximum(out, 0.0)


# ---------------------------------------------------------------------------
if __name__ == "__main__":
    key = jax.random.PRNGKey(0)
    kx, kw1, kw2 = jax.random.split(key, 3)

    # small shapes: batch=2, inplanes=planes=8, spatial D=H=W=8 (NCDHW input)
    N, C, D, H, W = 2, 8, 8, 8, 8
    x = jax.random.normal(kx, (N, C, D, H, W), jnp.float32)
    w1 = jax.random.normal(kw1, (C, C, 3, 3, 3), jnp.float32) * 0.1
    w2 = jax.random.normal(kw2, (C, C, 3, 3, 3), jnp.float32) * 0.1
    g1 = jnp.ones((C,), jnp.float32)
    b1 = jnp.zeros((C,), jnp.float32)
    g2 = jnp.ones((C,), jnp.float32)
    b2 = jnp.zeros((C,), jnp.float32)

    fwd = jax.jit(basic_block_forward)
    out = jax.block_until_ready(fwd(x, w1, g1, b1, w2, g2, b2))
    ref = reference_forward(x, w1, g1, b1, w2, g2, b2)

    assert out.shape == x.shape, (out.shape, x.shape)
    # bf16 MXU operands / bf16 intermediates (f32 accumulation) vs an all-f32 reference.
    if not jnp.allclose(out, ref, atol=5e-2, rtol=5e-2):
        err = float(jnp.max(jnp.abs(out - ref)))
        raise AssertionError(f"Pallas BasicBlock output mismatch (max abs err={err})")
    print("KERNEL_OK")
</pallas_src>

<mosaic_0001>
module attributes {stable_mosaic.version = 11 : i64} {
  func.func @kernel(%arg0: i32, %arg1: i32, %arg2: memref<1x1x80x128xbf16, #tpu.memory_space<vmem>>, %arg3: memref<1x128xf32, #tpu.memory_space<vmem>>, %arg4: memref<1x128xf32, #tpu.memory_space<vmem>>, %arg5: memref<1x1x104x128xbf16, #tpu.memory_space<vmem>>) attributes {dimension_semantics = [#tpu.dimension_semantics<parallel>, #tpu.dimension_semantics<parallel>], iteration_bounds = array<i64: 2, 10>, scalar_prefetch = 0 : i64, scratch_operands = 0 : i64, tpu.core_type = #tpu.core_type<tc>, window_params = [{transform_indices = @transform_0, window_bounds = array<i64: 1, 1, 80, 128>}, {pipeline_mode = #tpu.pipeline_mode<synchronous>, transform_indices = @transform_1, window_bounds = array<i64: 1, 128>}, {pipeline_mode = #tpu.pipeline_mode<synchronous>, transform_indices = @transform_2, window_bounds = array<i64: 1, 128>}, {transform_indices = @transform_3, window_bounds = array<i64: 1, 1, 104, 128>}]} {
    %cst = arith.constant 0.000000e+00 : bf16
    %0 = vector.broadcast %cst : bf16 to vector<104x128xbf16>
    %c0 = arith.constant 0 : index
    %c0_0 = arith.constant 0 : index
    %c0_1 = arith.constant 0 : index
    %c0_2 = arith.constant 0 : index
    %1 = vector.load %arg5[%c0, %c0_0, %c0_1, %c0_2] : memref<1x1x104x128xbf16, #tpu.memory_space<vmem>>, vector<1x1x104x128xbf16>
    %2 = vector.shape_cast %1 : vector<1x1x104x128xbf16> to vector<104x128xbf16>
    %3 = vector.shape_cast %0 : vector<104x128xbf16> to vector<1x1x104x128xbf16>
    tpu.vector_store %arg5[%c0, %c0_0, %c0_1, %c0_2], %3 {strides = array<i32>} : memref<1x1x104x128xbf16, #tpu.memory_space<vmem>>, vector<1x1x104x128xbf16>,
    %c1_i32 = arith.constant 1 : i32
    %4 = arith.cmpi sge, %arg1, %c1_i32 : i32
    %c8_i32 = arith.constant 8 : i32
    %5 = arith.cmpi sle, %arg1, %c8_i32 : i32
    %6 = arith.andi %4, %5 : i1
    %7 = arith.extui %6 : i1 to i32
    %c0_i32 = arith.constant 0 : i32
    %8 = arith.cmpi ne, %7, %c0_i32 : i32
    scf.if %8 {
      %c0_3 = arith.constant 0 : index
      %c0_4 = arith.constant 0 : index
      %c0_5 = arith.constant 0 : index
      %c0_6 = arith.constant 0 : index
      %9 = vector.load %arg2[%c0_3, %c0_4, %c0_5, %c0_6] : memref<1x1x80x128xbf16, #tpu.memory_space<vmem>>, vector<1x1x80x128xbf16>
      %10 = vector.shape_cast %9 : vector<1x1x80x128xbf16> to vector<80x128xbf16>
      %11 = arith.extf %10 : vector<80x128xbf16> to vector<80x128xf32>
      %c0_7 = arith.constant 0 : index
      %c0_8 = arith.constant 0 : index
      %12 = vector.load %arg3[%c0_7, %c0_8] : memref<1x128xf32, #tpu.memory_space<vmem>>, vector<1x128xf32>
      %13 = vector.broadcast %12 : vector<1x128xf32> to vector<80x128xf32>
      %14 = arith.mulf %11, %13 : vector<80x128xf32>
      %c0_9 = arith.constant 0 : index
      %c0_10 = arith.constant 0 : index
      %15 = vector.load %arg4[%c0_9, %c0_10] : memref<1x128xf32, #tpu.memory_space<vmem>>, vector<1x128xf32>
      %16 = vector.broadcast %15 : vector<1x128xf32> to vector<80x128xf32>
      %17 = arith.addf %14, %16 : vector<80x128xf32>
      %cst_11 = arith.constant 0.000000e+00 : f32
      %18 = vector.broadcast %cst_11 : f32 to vector<80x128xf32>
      %19 = arith.maximumf %17, %18 : vector<80x128xf32>
      %20 = tpu.iota {dimensions = array<i32: 0>} : vector<80x1xi32>
      %c10_i32 = arith.constant 10 : i32
      %c0_i32_12 = arith.constant 0 : i32
      %21 = arith.cmpi eq, %c10_i32, %c0_i32_12 : i32
      %c1_i32_13 = arith.constant 1 : i32
      %22 = arith.select %21, %c1_i32_13, %c10_i32 : i32
      %23 = vector.broadcast %22 : i32 to vector<80x1xi32>
      %24 = arith.remsi %20, %23 : vector<80x1xi32>
      %c0_i32_14 = arith.constant 0 : i32
      %25 = vector.broadcast %c0_i32_14 : i32 to vector<80x1xi32>
      %26 = arith.cmpi ne, %24, %25 : vector<80x1xi32>
      %c0_i32_15 = arith.constant 0 : i32
      %27 = vector.broadcast %c0_i32_15 : i32 to vector<80x1xi32>
      %28 = arith.cmpi slt, %24, %27 : vector<80x1xi32>
      %c0_i32_16 = arith.constant 0 : i32
      %29 = arith.cmpi slt, %22, %c0_i32_16 : i32
      %30 = vector.broadcast %29 : i1 to vector<80x1xi1>
      %31 = vector.broadcast %30 : vector<80x1xi1> to vector<80x1xi1>
      %32 = arith.xori %28, %31 : vector<80x1xi1>
      %33 = arith.andi %32, %26 : vector<80x1xi1>
      %34 = vector.broadcast %22 : i32 to vector<80x1xi32>
      %35 = arith.addi %24, %34 : vector<80x1xi32>
      %36 = arith.select %33, %35, %24 : vector<80x1xi1>, vector<80x1xi32>
      %c8_i32_17 = arith.constant 8 : i32
      %37 = vector.broadcast %c8_i32_17 : i32 to vector<80x1xi32>
      %38 = arith.cmpi slt, %36, %37 : vector<80x1xi32>
      %cst_18 = arith.constant 0.000000e+00 : f32
      %39 = vector.shape_cast %38 : vector<80x1xi1> to vector<80x1xi1>
      %40 = vector.broadcast %39 : vector<80x1xi1> to vector<80x128xi1>
      %41 = vector.broadcast %cst_18 : f32 to vector<80x128xf32>
      %42 = arith.select %40, %19, %41 : vector<80x128xi1>, vector<80x128xf32>
      %43 = arith.truncf %42 : vector<80x128xf32> to vector<80x128xbf16>
      %c0_19 = arith.constant 0 : index
      %c0_20 = arith.constant 0 : index
      %c11 = arith.constant 11 : index
      %c0_21 = arith.constant 0 : index
      %44 = vector.load %arg5[%c0_19, %c0_20, %c11, %c0_21] : memref<1x1x104x128xbf16, #tpu.memory_space<vmem>>, vector<1x1x80x128xbf16>
      %45 = vector.shape_cast %44 : vector<1x1x80x128xbf16> to vector<80x128xbf16>
      %46 = vector.shape_cast %43 : vector<80x128xbf16> to vector<1x1x80x128xbf16>
      tpu.vector_store %arg5[%c0_19, %c0_20, %c11, %c0_21], %46 {strides = array<i32>} : memref<1x1x104x128xbf16, #tpu.memory_space<vmem>>, vector<1x1x80x128xbf16>,
    } else {
    }
    return
  }
  func.func @transform_0(%arg0: i32, %arg1: i32) -> (i32, i32, i32, i32) {
    %c1_i32 = arith.constant 1 : i32
    %0 = arith.subi %arg1, %c1_i32 : i32
    %c0_i32 = arith.constant 0 : i32
    %1 = arith.maxsi %0, %c0_i32 : i32
    %c7_i32 = arith.constant 7 : i32
    %2 = arith.minsi %1, %c7_i32 : i32
    %c0_i32_0 = arith.constant 0 : i32
    %c0_i32_1 = arith.constant 0 : i32
    %c0_i32_2 = arith.constant 0 : i32
    return %arg0, %2, %c0_i32_0, %c0_i32_1 : i32, i32, i32, i32
  }
  func.func @transform_1(%arg0: i32, %arg1: i32) -> (i32, i32) {
    %c0_i32 = arith.constant 0 : i32
    %c0_i32_0 = arith.constant 0 : i32
    %c0_i32_1 = arith.constant 0 : i32
    return %c0_i32, %c0_i32_0 : i32, i32
  }
  func.func @transform_2(%arg0: i32, %arg1: i32) -> (i32, i32) {
    %c0_i32 = arith.constant 0 : i32
    %c0_i32_0 = arith.constant 0 : i32
    %c0_i32_1 = arith.constant 0 : i32
    return %c0_i32, %c0_i32_0 : i32, i32
  }
  func.func @transform_3(%arg0: i32, %arg1: i32) -> (i32, i32, i32, i32) {
    %c0_i32 = arith.constant 0 : i32
    %c0_i32_0 = arith.constant 0 : i32
    %c0_i32_1 = arith.constant 0 : i32
    return %arg0, %arg1, %c0_i32, %c0_i32_0 : i32, i32, i32, i32
  }
}

module attributes {stable_mosaic.version = 11 : i64} {
  func.func @kernel(%arg0: i32, %arg1: i32, %arg2: memref<1x1x80x128xbf16, #tpu.memory_space<vmem>>, %arg3: memref<1x1x8x8x128xbf16, #tpu.memory_space<vmem>>, %arg4: memref<1x128xf32, #tpu.memory_space<vmem>>, %arg5: memref<1x128xf32, #tpu.memory_space<vmem>>, %arg6: memref<1x1x8x8x128xf32, #tpu.memory_space<vmem>>) attributes {dimension_semantics = [#tpu.dimension_semantics<parallel>, #tpu.dimension_semantics<parallel>], iteration_bounds = array<i64: 2, 8>, scalar_prefetch = 0 : i64, scratch_operands = 0 : i64, tpu.core_type = #tpu.core_type<tc>, window_params = [{transform_indices = @transform_0, window_bounds = array<i64: 1, 1, 80, 128>}, {transform_indices = @transform_1, window_bounds = array<i64: 1, 1, 8, 8, 128>}, {pipeline_mode = #tpu.pipeline_mode<synchronous>, transform_indices = @transform_2, window_bounds = array<i64: 1, 128>}, {pipeline_mode = #tpu.pipeline_mode<synchronous>, transform_indices = @transform_3, window_bounds = array<i64: 1, 128>}, {transform_indices = @transform_4, window_bounds = array<i64: 1, 1, 8, 8, 128>}]} {
    %c0 = arith.constant 0 : index
    %c0_0 = arith.constant 0 : index
    %0 = vector.load %arg4[%c0, %c0_0] : memref<1x128xf32, #tpu.memory_space<vmem>>, vector<1x128xf32>
    %c0_1 = arith.constant 0 : index
    %c0_2 = arith.constant 0 : index
    %1 = vector.load %arg5[%c0_1, %c0_2] : memref<1x128xf32, #tpu.memory_space<vmem>>, vector<1x128xf32>
    %c0_3 = arith.constant 0 : index
    %c0_4 = arith.constant 0 : index
    %c0_5 = arith.constant 0 : index
    %c0_6 = arith.constant 0 : index
    %2 = vector.load %arg2[%c0_3, %c0_4, %c0_5, %c0_6] : memref<1x1x80x128xbf16, #tpu.memory_space<vmem>>, vector<1x1x8x128xbf16>
    %3 = vector.shape_cast %2 : vector<1x1x8x128xbf16> to vector<8x128xbf16>
    %4 = arith.extf %3 : vector<8x128xbf16> to vector<8x128xf32>
    %5 = vector.broadcast %0 : vector<1x128xf32> to vector<8x128xf32>
    %6 = arith.mulf %4, %5 : vector<8x128xf32>
    %7 = vector.broadcast %1 : vector<1x128xf32> to vector<8x128xf32>
    %8 = arith.addf %6, %7 : vector<8x128xf32>
    %c0_7 = arith.constant 0 : index
    %c0_8 = arith.constant 0 : index
    %c0_9 = arith.constant 0 : index
    %c0_10 = arith.constant 0 : index
    %c0_11 = arith.constant 0 : index
    %9 = vector.load %arg3[%c0_7, %c0_8, %c0_9, %c0_10, %c0_11] : memref<1x1x8x8x128xbf16, #tpu.memory_space<vmem>>, vector<1x1x1x8x128xbf16>
    %10 = vector.shape_cast %9 : vector<1x1x1x8x128xbf16> to vector<8x128xbf16>
    %11 = arith.extf %10 : vector<8x128xbf16> to vector<8x128xf32>
    %12 = arith.addf %8, %11 : vector<8x128xf32>
    %cst = arith.constant 0.000000e+00 : f32
    %13 = vector.broadcast %cst : f32 to vector<8x128xf32>
    %14 = arith.maximumf %12, %13 : vector<8x128xf32>
    %c0_12 = arith.constant 0 : index
    %c0_13 = arith.constant 0 : index
    %c0_14 = arith.constant 0 : index
    %c0_15 = arith.constant 0 : index
    %c0_16 = arith.constant 0 : index
    %15 = vector.load %arg6[%c0_12, %c0_13, %c0_14, %c0_15, %c0_16] : memref<1x1x8x8x128xf32, #tpu.memory_space<vmem>>, vector<1x1x1x8x128xf32>
    %16 = vector.shape_cast %15 : vector<1x1x1x8x128xf32> to vector<8x128xf32>
    %17 = vector.shape_cast %14 : vector<8x128xf32> to vector<1x1x1x8x128xf32>
    tpu.vector_store %arg6[%c0_12, %c0_13, %c0_14, %c0_15, %c0_16], %17 {strides = array<i32>} : memref<1x1x8x8x128xf32, #tpu.memory_space<vmem>>, vector<1x1x1x8x128xf32>,
    %c0_17 = arith.constant 0 : index
    %c0_18 = arith.constant 0 : index
    %c10 = arith.constant 10 : index
    %c0_19 = arith.constant 0 : index
    %18 = vector.load %arg2[%c0_17, %c0_18, %c10, %c0_19] : memref<1x1x80x128xbf16, #tpu.memory_space<vmem>>, vector<1x1x8x128xbf16>
    %19 = vector.shape_cast %18 : vector<1x1x8x128xbf16> to vector<8x128xbf16>
    %20 = arith.extf %19 : vector<8x128xbf16> to vector<8x128xf32>
    %21 = vector.broadcast %0 : vector<1x128xf32> to vector<8x128xf32>
    %22 = arith.mulf %20, %21 : vector<8x128xf32>
    %23 = vector.broadcast %1 : vector<1x128xf32> to vector<8x128xf32>
    %24 = arith.addf %22, %23 : vector<8x128xf32>
    %c0_20 = arith.constant 0 : index
    %c0_21 = arith.constant 0 : index
    %c1 = arith.constant 1 : index
    %c0_22 = arith.constant 0 : index
    %c0_23 = arith.constant 0 : index
    %25 = vector.load %arg3[%c0_20, %c0_21, %c1, %c0_22, %c0_23] : memref<1x1x8x8x128xbf16, #tpu.memory_space<vmem>>, vector<1x1x1x8x128xbf16>
    %26 = vector.shape_cast %25 : vector<1x1x1x8x128xbf16> to vector<8x128xbf16>
    %27 = arith.extf %26 : vector<8x128xbf16> to vector<8x128xf32>
    %28 = arith.addf %24, %27 : vector<8x128xf32>
    %cst_24 = arith.constant 0.000000e+00 : f32
    %29 = vector.broadcast %cst_24 : f32 to vector<8x128xf32>
    %30 = arith.maximumf %28, %29 : vector<8x128xf32>
    %c0_25 = arith.constant 0 : index
    %c0_26 = arith.constant 0 : index
    %c1_27 = arith.constant 1 : index
    %c0_28 = arith.constant 0 : index
    %c0_29 = arith.constant 0 : index
    %31 = vector.load %arg6[%c0_25, %c0_26, %c1_27, %c0_28, %c0_29] : memref<1x1x8x8x128xf32, #tpu.memory_space<vmem>>, vector<1x1x1x8x128xf32>
    %32 = vector.shape_cast %31 : vector<1x1x1x8x128xf32> to vector<8x128xf32>
    %33 = vector.shape_cast %30 : vector<8x128xf32> to vector<1x1x1x8x128xf32>
    tpu.vector_store %arg6[%c0_25, %c0_26, %c1_27, %c0_28, %c0_29], %33 {strides = array<i32>} : memref<1x1x8x8x128xf32, #tpu.memory_space<vmem>>, vector<1x1x1x8x128xf32>,
    %c0_30 = arith.constant 0 : index
    %c0_31 = arith.constant 0 : index
    %c20 = arith.constant 20 : index
    %c0_32 = arith.constant 0 : index
    %34 = vector.load %arg2[%c0_30, %c0_31, %c20, %c0_32] : memref<1x1x80x128xbf16, #tpu.memory_space<vmem>>, vector<1x1x8x128xbf16>
    %35 = vector.shape_cast %34 : vector<1x1x8x128xbf16> to vector<8x128xbf16>
    %36 = arith.extf %35 : vector<8x128xbf16> to vector<8x128xf32>
    %37 = vector.broadcast %0 : vector<1x128xf32> to vector<8x128xf32>
    %38 = arith.mulf %36, %37 : vector<8x128xf32>
    %39 = vector.broadcast %1 : vector<1x128xf32> to vector<8x128xf32>
    %40 = arith.addf %38, %39 : vector<8x128xf32>
    %c0_33 = arith.constant 0 : index
    %c0_34 = arith.constant 0 : index
    %c2 = arith.constant 2 : index
    %c0_35 = arith.constant 0 : index
    %c0_36 = arith.constant 0 : index
    %41 = vector.load %arg3[%c0_33, %c0_34, %c2, %c0_35, %c0_36] : memref<1x1x8x8x128xbf16, #tpu.memory_space<vmem>>, vector<1x1x1x8x128xbf16>
    %42 = vector.shape_cast %41 : vector<1x1x1x8x128xbf16> to vector<8x128xbf16>
    %43 = arith.extf %42 : vector<8x128xbf16> to vector<8x128xf32>
    %44 = arith.addf %40, %43 : vector<8x128xf32>
    %cst_37 = arith.constant 0.000000e+00 : f32
    %45 = vector.broadcast %cst_37 : f32 to vector<8x128xf32>
    %46 = arith.maximumf %44, %45 : vector<8x128xf32>
    %c0_38 = arith.constant 0 : index
    %c0_39 = arith.constant 0 : index
    %c2_40 = arith.constant 2 : index
    %c0_41 = arith.constant 0 : index
    %c0_42 = arith.constant 0 : index
    %47 = vector.load %arg6[%c0_38, %c0_39, %c2_40, %c0_41, %c0_42] : memref<1x1x8x8x128xf32, #tpu.memory_space<vmem>>, vector<1x1x1x8x128xf32>
    %48 = vector.shape_cast %47 : vector<1x1x1x8x128xf32> to vector<8x128xf32>
    %49 = vector.shape_cast %46 : vector<8x128xf32> to vector<1x1x1x8x128xf32>
    tpu.vector_store %arg6[%c0_38, %c0_39, %c2_40, %c0_41, %c0_42], %49 {strides = array<i32>} : memref<1x1x8x8x128xf32, #tpu.memory_space<vmem>>, vector<1x1x1x8x128xf32>,
    %c0_43 = arith.constant 0 : index
    %c0_44 = arith.constant 0 : index
    %c30 = arith.constant 30 : index
    %c0_45 = arith.constant 0 : index
    %50 = vector.load %arg2[%c0_43, %c0_44, %c30, %c0_45] : memref<1x1x80x128xbf16, #tpu.memory_space<vmem>>, vector<1x1x8x128xbf16>
    %51 = vector.shape_cast %50 : vector<1x1x8x128xbf16> to vector<8x128xbf16>
    %52 = arith.extf %51 : vector<8x128xbf16> to vector<8x128xf32>
    %53 = vector.broadcast %0 : vector<1x128xf32> to vector<8x128xf32>
    %54 = arith.mulf %52, %53 : vector<8x128xf32>
    %55 = vector.broadcast %1 : vector<1x128xf32> to vector<8x128xf32>
    %56 = arith.addf %54, %55 : vector<8x128xf32>
    %c0_46 = arith.constant 0 : index
    %c0_47 = arith.constant 0 : index
    %c3 = arith.constant 3 : index
    %c0_48 = arith.constant 0 : index
    %c0_49 = arith.constant 0 : index
    %57 = vector.load %arg3[%c0_46, %c0_47, %c3, %c0_48, %c0_49] : memref<1x1x8x8x128xbf16, #tpu.memory_space<vmem>>, vector<1x1x1x8x128xbf16>
    %58 = vector.shape_cast %57 : vector<1x1x1x8x128xbf16> to vector<8x128xbf16>
    %59 = arith.extf %58 : vector<8x128xbf16> to vector<8x128xf32>
    %60 = arith.addf %56, %59 : vector<8x128xf32>
    %cst_50 = arith.constant 0.000000e+00 : f32
    %61 = vector.broadcast %cst_50 : f32 to vector<8x128xf32>
    %62 = arith.maximumf %60, %61 : vector<8x128xf32>
    %c0_51 = arith.constant 0 : index
    %c0_52 = arith.constant 0 : index
    %c3_53 = arith.constant 3 : index
    %c0_54 = arith.constant 0 : index
    %c0_55 = arith.constant 0 : index
    %63 = vector.load %arg6[%c0_51, %c0_52, %c3_53, %c0_54, %c0_55] : memref<1x1x8x8x128xf32, #tpu.memory_space<vmem>>, vector<1x1x1x8x128xf32>
    %64 = vector.shape_cast %63 : vector<1x1x1x8x128xf32> to vector<8x128xf32>
    %65 = vector.shape_cast %62 : vector<8x128xf32> to vector<1x1x1x8x128xf32>
    tpu.vector_store %arg6[%c0_51, %c0_52, %c3_53, %c0_54, %c0_55], %65 {strides = array<i32>} : memref<1x1x8x8x128xf32, #tpu.memory_space<vmem>>, vector<1x1x1x8x128xf32>,
    %c0_56 = arith.constant 0 : index
    %c0_57 = arith.constant 0 : index
    %c40 = arith.constant 40 : index
    %c0_58 = arith.constant 0 : index
    %66 = vector.load %arg2[%c0_56, %c0_57, %c40, %c0_58] : memref<1x1x80x128xbf16, #tpu.memory_space<vmem>>, vector<1x1x8x128xbf16>
    %67 = vector.shape_cast %66 : vector<1x1x8x128xbf16> to vector<8x128xbf16>
    %68 = arith.extf %67 : vector<8x128xbf16> to vector<8x128xf32>
    %69 = vector.broadcast %0 : vector<1x128xf32> to vector<8x128xf32>
    %70 = arith.mulf %68, %69 : vector<8x128xf32>
    %71 = vector.broadcast %1 : vector<1x128xf32> to vector<8x128xf32>
    %72 = arith.addf %70, %71 : vector<8x128xf32>
    %c0_59 = arith.constant 0 : index
    %c0_60 = arith.constant 0 : index
    %c4 = arith.constant 4 : index
    %c0_61 = arith.constant 0 : index
    %c0_62 = arith.constant 0 : index
    %73 = vector.load %arg3[%c0_59, %c0_60, %c4, %c0_61, %c0_62] : memref<1x1x8x8x128xbf16, #tpu.memory_space<vmem>>, vector<1x1x1x8x128xbf16>
    %74 = vector.shape_cast %73 : vector<1x1x1x8x128xbf16> to vector<8x128xbf16>
    %75 = arith.extf %74 : vector<8x128xbf16> to vector<8x128xf32>
    %76 = arith.addf %72, %75 : vector<8x128xf32>
    %cst_63 = arith.constant 0.000000e+00 : f32
    %77 = vector.broadcast %cst_63 : f32 to vector<8x128xf32>
    %78 = arith.maximumf %76, %77 : vector<8x128xf32>
    %c0_64 = arith.constant 0 : index
    %c0_65 = arith.constant 0 : index
    %c4_66 = arith.constant 4 : index
    %c0_67 = arith.constant 0 : index
    %c0_68 = arith.constant 0 : index
    %79 = vector.load %arg6[%c0_64, %c0_65, %c4_66, %c0_67, %c0_68] : memref<1x1x8x8x128xf32, #tpu.memory_space<vmem>>, vector<1x1x1x8x128xf32>
    %80 = vector.shape_cast %79 : vector<1x1x1x8x128xf32> to vector<8x128xf32>
    %81 = vector.shape_cast %78 : vector<8x128xf32> to vector<1x1x1x8x128xf32>
    tpu.vector_store %arg6[%c0_64, %c0_65, %c4_66, %c0_67, %c0_68], %81 {strides = array<i32>} : memref<1x1x8x8x128xf32, #tpu.memory_space<vmem>>, vector<1x1x1x8x128xf32>,
    %c0_69 = arith.constant 0 : index
    %c0_70 = arith.constant 0 : index
    %c50 = arith.constant 50 : index
    %c0_71 = arith.constant 0 : index
    %82 = vector.load %arg2[%c0_69, %c0_70, %c50, %c0_71] : memref<1x1x80x128xbf16, #tpu.memory_space<vmem>>, vector<1x1x8x128xbf16>
    %83 = vector.shape_cast %82 : vector<1x1x8x128xbf16> to vector<8x128xbf16>
    %84 = arith.extf %83 : vector<8x128xbf16> to vector<8x128xf32>
    %85 = vector.broadcast %0 : vector<1x128xf32> to vector<8x128xf32>
    %86 = arith.mulf %84, %85 : vector<8x128xf32>
    %87 = vector.broadcast %1 : vector<1x128xf32> to vector<8x128xf32>
    %88 = arith.addf %86, %87 : vector<8x128xf32>
    %c0_72 = arith.constant 0 : index
    %c0_73 = arith.constant 0 : index
    %c5 = arith.constant 5 : index
    %c0_74 = arith.constant 0 : index
    %c0_75 = arith.constant 0 : index
    %89 = vector.load %arg3[%c0_72, %c0_73, %c5, %c0_74, %c0_75] : memref<1x1x8x8x128xbf16, #tpu.memory_space<vmem>>, vector<1x1x1x8x128xbf16>
    %90 = vector.shape_cast %89 : vector<1x1x1x8x128xbf16> to vector<8x128xbf16>
    %91 = arith.extf %90 : vector<8x128xbf16> to vector<8x128xf32>
    %92 = arith.addf %88, %91 : vector<8x128xf32>
    %cst_76 = arith.constant 0.000000e+00 : f32
    %93 = vector.broadcast %cst_76 : f32 to vector<8x128xf32>
    %94 = arith.maximumf %92, %93 : vector<8x128xf32>
    %c0_77 = arith.constant 0 : index
    %c0_78 = arith.constant 0 : index
    %c5_79 = arith.constant 5 : index
    %c0_80 = arith.constant 0 : index
    %c0_81 = arith.constant 0 : index
    %95 = vector.load %arg6[%c0_77, %c0_78, %c5_79, %c0_80, %c0_81] : memref<1x1x8x8x128xf32, #tpu.memory_space<vmem>>, vector<1x1x1x8x128xf32>
    %96 = vector.shape_cast %95 : vector<1x1x1x8x128xf32> to vector<8x128xf32>
    %97 = vector.shape_cast %94 : vector<8x128xf32> to vector<1x1x1x8x128xf32>
    tpu.vector_store %arg6[%c0_77, %c0_78, %c5_79, %c0_80, %c0_81], %97 {strides = array<i32>} : memref<1x1x8x8x128xf32, #tpu.memory_space<vmem>>, vector<1x1x1x8x128xf32>,
    %c0_82 = arith.constant 0 : index
    %c0_83 = arith.constant 0 : index
    %c60 = arith.constant 60 : index
    %c0_84 = arith.constant 0 : index
    %98 = vector.load %arg2[%c0_82, %c0_83, %c60, %c0_84] : memref<1x1x80x128xbf16, #tpu.memory_space<vmem>>, vector<1x1x8x128xbf16>
    %99 = vector.shape_cast %98 : vector<1x1x8x128xbf16> to vector<8x128xbf16>
    %100 = arith.extf %99 : vector<8x128xbf16> to vector<8x128xf32>
    %101 = vector.broadcast %0 : vector<1x128xf32> to vector<8x128xf32>
    %102 = arith.mulf %100, %101 : vector<8x128xf32>
    %103 = vector.broadcast %1 : vector<1x128xf32> to vector<8x128xf32>
    %104 = arith.addf %102, %103 : vector<8x128xf32>
    %c0_85 = arith.constant 0 : index
    %c0_86 = arith.constant 0 : index
    %c6 = arith.constant 6 : index
    %c0_87 = arith.constant 0 : index
    %c0_88 = arith.constant 0 : index
    %105 = vector.load %arg3[%c0_85, %c0_86, %c6, %c0_87, %c0_88] : memref<1x1x8x8x128xbf16, #tpu.memory_space<vmem>>, vector<1x1x1x8x128xbf16>
    %106 = vector.shape_cast %105 : vector<1x1x1x8x128xbf16> to vector<8x128xbf16>
    %107 = arith.extf %106 : vector<8x128xbf16> to vector<8x128xf32>
    %108 = arith.addf %104, %107 : vector<8x128xf32>
    %cst_89 = arith.constant 0.000000e+00 : f32
    %109 = vector.broadcast %cst_89 : f32 to vector<8x128xf32>
    %110 = arith.maximumf %108, %109 : vector<8x128xf32>
    %c0_90 = arith.constant 0 : index
    %c0_91 = arith.constant 0 : index
    %c6_92 = arith.constant 6 : index
    %c0_93 = arith.constant 0 : index
    %c0_94 = arith.constant 0 : index
    %111 = vector.load %arg6[%c0_90, %c0_91, %c6_92, %c0_93, %c0_94] : memref<1x1x8x8x128xf32, #tpu.memory_space<vmem>>, vector<1x1x1x8x128xf32>
    %112 = vector.shape_cast %111 : vector<1x1x1x8x128xf32> to vector<8x128xf32>
    %113 = vector.shape_cast %110 : vector<8x128xf32> to vector<1x1x1x8x128xf32>
    tpu.vector_store %arg6[%c0_90, %c0_91, %c6_92, %c0_93, %c0_94], %113 {strides = array<i32>} : memref<1x1x8x8x128xf32, #tpu.memory_space<vmem>>, vector<1x1x1x8x128xf32>,
    %c0_95 = arith.constant 0 : index
    %c0_96 = arith.constant 0 : index
    %c70 = arith.constant 70 : index
    %c0_97 = arith.constant 0 : index
    %114 = vector.load %arg2[%c0_95, %c0_96, %c70, %c0_97] : memref<1x1x80x128xbf16, #tpu.memory_space<vmem>>, vector<1x1x8x128xbf16>
    %115 = vector.shape_cast %114 : vector<1x1x8x128xbf16> to vector<8x128xbf16>
    %116 = arith.extf %115 : vector<8x128xbf16> to vector<8x128xf32>
    %117 = vector.broadcast %0 : vector<1x128xf32> to vector<8x128xf32>
    %118 = arith.mulf %116, %117 : vector<8x128xf32>
    %119 = vector.broadcast %1 : vector<1x128xf32> to vector<8x128xf32>
    %120 = arith.addf %118, %119 : vector<8x128xf32>
    %c0_98 = arith.constant 0 : index
    %c0_99 = arith.constant 0 : index
    %c7 = arith.constant 7 : index
    %c0_100 = arith.constant 0 : index
    %c0_101 = arith.constant 0 : index
    %121 = vector.load %arg3[%c0_98, %c0_99, %c7, %c0_100, %c0_101] : memref<1x1x8x8x128xbf16, #tpu.memory_space<vmem>>, vector<1x1x1x8x128xbf16>
    %122 = vector.shape_cast %121 : vector<1x1x1x8x128xbf16> to vector<8x128xbf16>
    %123 = arith.extf %122 : vector<8x128xbf16> to vector<8x128xf32>
    %124 = arith.addf %120, %123 : vector<8x128xf32>
    %cst_102 = arith.constant 0.000000e+00 : f32
    %125 = vector.broadcast %cst_102 : f32 to vector<8x128xf32>
    %126 = arith.maximumf %124, %125 : vector<8x128xf32>
    %c0_103 = arith.constant 0 : index
    %c0_104 = arith.constant 0 : index
    %c7_105 = arith.constant 7 : index
    %c0_106 = arith.constant 0 : index
    %c0_107 = arith.constant 0 : index
    %127 = vector.load %arg6[%c0_103, %c0_104, %c7_105, %c0_106, %c0_107] : memref<1x1x8x8x128xf32, #tpu.memory_space<vmem>>, vector<1x1x1x8x128xf32>
    %128 = vector.shape_cast %127 : vector<1x1x1x8x128xf32> to vector<8x128xf32>
    %129 = vector.shape_cast %126 : vector<8x128xf32> to vector<1x1x1x8x128xf32>
    tpu.vector_store %arg6[%c0_103, %c0_104, %c7_105, %c0_106, %c0_107], %129 {strides = array<i32>} : memref<1x1x8x8x128xf32, #tpu.memory_space<vmem>>, vector<1x1x1x8x128xf32>,
    return
  }
  func.func @transform_0(%arg0: i32, %arg1: i32) -> (i32, i32, i32, i32) {
    %c0_i32 = arith.constant 0 : i32
    %c0_i32_0 = arith.constant 0 : i32
    %c0_i32_1 = arith.constant 0 : i32
    return %arg0, %arg1, %c0_i32, %c0_i32_0 : i32, i32, i32, i32
  }
  func.func @transform_1(%arg0: i32, %arg1: i32) -> (i32, i32, i32, i32, i32) {
    %c0_i32 = arith.constant 0 : i32
    %c0_i32_0 = arith.constant 0 : i32
    %c0_i32_1 = arith.constant 0 : i32
    %c0_i32_2 = arith.constant 0 : i32
    return %arg0, %arg1, %c0_i32, %c0_i32_0, %c0_i32_1 : i32, i32, i32, i32, i32
  }
  func.func @transform_2(%arg0: i32, %arg1: i32) -> (i32, i32) {
    %c0_i32 = arith.constant 0 : i32
    %c0_i32_0 = arith.constant 0 : i32
    %c0_i32_1 = arith.constant 0 : i32
    return %c0_i32, %c0_i32_0 : i32, i32
  }
  func.func @transform_3(%arg0: i32, %arg1: i32) -> (i32, i32) {
    %c0_i32 = arith.constant 0 : i32
    %c0_i32_0 = arith.constant 0 : i32
    %c0_i32_1 = arith.constant 0 : i32
    return %c0_i32, %c0_i32_0 : i32, i32
  }
  func.func @transform_4(%arg0: i32, %arg1: i32) -> (i32, i32, i32, i32, i32) {
    %c0_i32 = arith.constant 0 : i32
    %c0_i32_0 = arith.constant 0 : i32
    %c0_i32_1 = arith.constant 0 : i32
    %c0_i32_2 = arith.constant 0 : i32
    return %arg0, %arg1, %c0_i32, %c0_i32_0, %c0_i32_1 : i32, i32, i32, i32, i32
  }
}

module attributes {stable_mosaic.version = 11 : i64} {
  func.func @kernel(%arg0: i32, %arg1: i32, %arg2: memref<1x1x104x128xbf16, #tpu.memory_space<vmem>>, %arg3: memref<1x1x104x128xbf16, #tpu.memory_space<vmem>>, %arg4: memref<1x1x104x128xbf16, #tpu.memory_space<vmem>>, %arg5: memref<9x384x128xbf16, #tpu.memory_space<vmem>>, %arg6: memref<1x1x80x128xbf16, #tpu.memory_space<vmem>>, %arg7: memref<1x1x2x128xf32, #tpu.memory_space<vmem>>) attributes {dimension_semantics = [#tpu.dimension_semantics<parallel>, #tpu.dimension_semantics<parallel>], iteration_bounds = array<i64: 2, 8>, scalar_prefetch = 0 : i64, scratch_operands = 0 : i64, tpu.core_type = #tpu.core_type<tc>, window_params = [{transform_indices = @transform_0, window_bounds = array<i64: 1, 1, 104, 128>}, {transform_indices = @transform_1, window_bounds = array<i64: 1, 1, 104, 128>}, {transform_indices = @transform_2, window_bounds = array<i64: 1, 1, 104, 128>}, {pipeline_mode = #tpu.pipeline_mode<synchronous>, transform_indices = @transform_3, window_bounds = array<i64: 9, 384, 128>}, {transform_indices = @transform_4, window_bounds = array<i64: 1, 1, 80, 128>}, {transform_indices = @transform_5, window_bounds = array<i64: 1, 1, 2, 128>}]} {
    %cst = arith.constant 0.000000e+00 : f32
    %0 = vector.broadcast %cst : f32 to vector<1x128xf32>
    %cst_0 = arith.constant 0.000000e+00 : f32
    %1 = vector.broadcast %cst_0 : f32 to vector<1x128xf32>
    %cst_1 = arith.constant 0.000000e+00 : f32
    %2 = vector.broadcast %cst_1 : f32 to vector<80x128xf32>
    %c0 = arith.constant 0 : index
    %c0_2 = arith.constant 0 : index
    %c0_3 = arith.constant 0 : index
    %c0_4 = arith.constant 0 : index
    %3 = vector.load %arg2[%c0, %c0_2, %c0_3, %c0_4] : memref<1x1x104x128xbf16, #tpu.memory_space<vmem>>, vector<1x1x80x128xbf16>
    %4 = vector.shape_cast %3 : vector<1x1x80x128xbf16> to vector<80x128xbf16>
    %c0_5 = arith.constant 0 : index
    %c0_6 = arith.constant 0 : index
    %c0_7 = arith.constant 0 : index
    %c0_8 = arith.constant 0 : index
    %5 = vector.load %arg3[%c0_5, %c0_6, %c0_7, %c0_8] : memref<1x1x104x128xbf16, #tpu.memory_space<vmem>>, vector<1x1x80x128xbf16>
    %6 = vector.shape_cast %5 : vector<1x1x80x128xbf16> to vector<80x128xbf16>
    %c0_9 = arith.constant 0 : index
    %c0_10 = arith.constant 0 : index
    %c0_11 = arith.constant 0 : index
    %c0_12 = arith.constant 0 : index
    %7 = vector.load %arg4[%c0_9, %c0_10, %c0_11, %c0_12] : memref<1x1x104x128xbf16, #tpu.memory_space<vmem>>, vector<1x1x80x128xbf16>
    %8 = vector.shape_cast %7 : vector<1x1x80x128xbf16> to vector<80x128xbf16>
    %9 = tpu.concatenate %4, %6, %8 in 1 : vector<80x128xbf16>, vector<80x128xbf16>, vector<80x128xbf16> -> vector<80x384xbf16>
    %c0_13 = arith.constant 0 : index
    %c0_14 = arith.constant 0 : index
    %c0_15 = arith.constant 0 : index
    %10 = vector.load %arg5[%c0_13, %c0_14, %c0_15] : memref<9x384x128xbf16, #tpu.memory_space<vmem>>, vector<1x384x128xbf16>
    %11 = vector.shape_cast %10 : vector<1x384x128xbf16> to vector<384x128xbf16>
    %cst_16 = arith.constant dense<0.000000e+00> : vector<80x128xf32>
    %12 = tpu.matmul %9, %11, %cst_16 {dimension_numbers = #tpu.dot_dimension_numbers<[1], [0], [0], [1], [0, 0, 1, 1], [], []>} : vector<80x384xbf16>, vector<384x128xbf16>, vector<80x128xf32> -> vector<80x128xf32>
    %13 = arith.addf %2, %12 : vector<80x128xf32>
    %c0_17 = arith.constant 0 : index
    %c0_18 = arith.constant 0 : index
    %c1 = arith.constant 1 : index
    %c0_19 = arith.constant 0 : index
    %14 = vector.load %arg2[%c0_17, %c0_18, %c1, %c0_19] : memref<1x1x104x128xbf16, #tpu.memory_space<vmem>>, vector<1x1x80x128xbf16>
    %15 = vector.shape_cast %14 : vector<1x1x80x128xbf16> to vector<80x128xbf16>
    %c0_20 = arith.constant 0 : index
    %c0_21 = arith.constant 0 : index
    %c1_22 = arith.constant 1 : index
    %c0_23 = arith.constant 0 : index
    %16 = vector.load %arg3[%c0_20, %c0_21, %c1_22, %c0_23] : memref<1x1x104x128xbf16, #tpu.memory_space<vmem>>, vector<1x1x80x128xbf16>
    %17 = vector.shape_cast %16 : vector<1x1x80x128xbf16> to vector<80x128xbf16>
    %c0_24 = arith.constant 0 : index
    %c0_25 = arith.constant 0 : index
    %c1_26 = arith.constant 1 : index
    %c0_27 = arith.constant 0 : index
    %18 = vector.load %arg4[%c0_24, %c0_25, %c1_26, %c0_27] : memref<1x1x104x128xbf16, #tpu.memory_space<vmem>>, vector<1x1x80x128xbf16>
    %19 = vector.shape_cast %18 : vector<1x1x80x128xbf16> to vector<80x128xbf16>
    %20 = tpu.concatenate %15, %17, %19 in 1 : vector<80x128xbf16>, vector<80x128xbf16>, vector<80x128xbf16> -> vector<80x384xbf16>
    %c1_28 = arith.constant 1 : index
    %c0_29 = arith.constant 0 : index
    %c0_30 = arith.constant 0 : index
    %21 = vector.load %arg5[%c1_28, %c0_29, %c0_30] : memref<9x384x128xbf16, #tpu.memory_space<vmem>>, vector<1x384x128xbf16>
    %22 = vector.shape_cast %21 : vector<1x384x128xbf16> to vector<384x128xbf16>
    %cst_31 = arith.constant dense<0.000000e+00> : vector<80x128xf32>
    %23 = tpu.matmul %20, %22, %cst_31 {dimension_numbers = #tpu.dot_dimension_numbers<[1], [0], [0], [1], [0, 0, 1, 1], [], []>} : vector<80x384xbf16>, vector<384x128xbf16>, vector<80x128xf32> -> vector<80x128xf32>
    %24 = arith.addf %13, %23 : vector<80x128xf32>
    %c0_32 = arith.constant 0 : index
    %c0_33 = arith.constant 0 : index
    %c2 = arith.constant 2 : index
    %c0_34 = arith.constant 0 : index
    %25 = vector.load %arg2[%c0_32, %c0_33, %c2, %c0_34] : memref<1x1x104x128xbf16, #tpu.memory_space<vmem>>, vector<1x1x80x128xbf16>
    %26 = vector.shape_cast %25 : vector<1x1x80x128xbf16> to vector<80x128xbf16>
    %c0_35 = arith.constant 0 : index
    %c0_36 = arith.constant 0 : index
    %c2_37 = arith.constant 2 : index
    %c0_38 = arith.constant 0 : index
    %27 = vector.load %arg3[%c0_35, %c0_36, %c2_37, %c0_38] : memref<1x1x104x128xbf16, #tpu.memory_space<vmem>>, vector<1x1x80x128xbf16>
    %28 = vector.shape_cast %27 : vector<1x1x80x128xbf16> to vector<80x128xbf16>
    %c0_39 = arith.constant 0 : index
    %c0_40 = arith.constant 0 : index
    %c2_41 = arith.constant 2 : index
    %c0_42 = arith.constant 0 : index
    %29 = vector.load %arg4[%c0_39, %c0_40, %c2_41, %c0_42] : memref<1x1x104x128xbf16, #tpu.memory_space<vmem>>, vector<1x1x80x128xbf16>
    %30 = vector.shape_cast %29 : vector<1x1x80x128xbf16> to vector<80x128xbf16>
    %31 = tpu.concatenate %26, %28, %30 in 1 : vector<80x128xbf16>, vector<80x128xbf16>, vector<80x128xbf16> -> vector<80x384xbf16>
    %c2_43 = arith.constant 2 : index
    %c0_44 = arith.constant 0 : index
    %c0_45 = arith.constant 0 : index
    %32 = vector.load %arg5[%c2_43, %c0_44, %c0_45] : memref<9x384x128xbf16, #tpu.memory_space<vmem>>, vector<1x384x128xbf16>
    %33 = vector.shape_cast %32 : vector<1x384x128xbf16> to vector<384x128xbf16>
    %cst_46 = arith.constant dense<0.000000e+00> : vector<80x128xf32>
    %34 = tpu.matmul %31, %33, %cst_46 {dimension_numbers = #tpu.dot_dimension_numbers<[1], [0], [0], [1], [0, 0, 1, 1], [], []>} : vector<80x384xbf16>, vector<384x128xbf16>, vector<80x128xf32> -> vector<80x128xf32>
    %35 = arith.addf %24, %34 : vector<80x128xf32>
    %c0_47 = arith.constant 0 : index
    %c0_48 = arith.constant 0 : index
    %c10 = arith.constant 10 : index
    %c0_49 = arith.constant 0 : index
    %36 = vector.load %arg2[%c0_47, %c0_48, %c10, %c0_49] : memref<1x1x104x128xbf16, #tpu.memory_space<vmem>>, vector<1x1x80x128xbf16>
    %37 = vector.shape_cast %36 : vector<1x1x80x128xbf16> to vector<80x128xbf16>
    %c0_50 = arith.constant 0 : index
    %c0_51 = arith.constant 0 : index
    %c10_52 = arith.constant 10 : index
    %c0_53 = arith.constant 0 : index
    %38 = vector.load %arg3[%c0_50, %c0_51, %c10_52, %c0_53] : memref<1x1x104x128xbf16, #tpu.memory_space<vmem>>, vector<1x1x80x128xbf16>
    %39 = vector.shape_cast %38 : vector<1x1x80x128xbf16> to vector<80x128xbf16>
    %c0_54 = arith.constant 0 : index
    %c0_55 = arith.constant 0 : index
    %c10_56 = arith.constant 10 : index
    %c0_57 = arith.constant 0 : index
    %40 = vector.load %arg4[%c0_54, %c0_55, %c10_56, %c0_57] : memref<1x1x104x128xbf16, #tpu.memory_space<vmem>>, vector<1x1x80x128xbf16>
    %41 = vector.shape_cast %40 : vector<1x1x80x128xbf16> to vector<80x128xbf16>
    %42 = tpu.concatenate %37, %39, %41 in 1 : vector<80x128xbf16>, vector<80x128xbf16>, vector<80x128xbf16> -> vector<80x384xbf16>
    %c3 = arith.constant 3 : index
    %c0_58 = arith.constant 0 : index
    %c0_59 = arith.constant 0 : index
    %43 = vector.load %arg5[%c3, %c0_58, %c0_59] : memref<9x384x128xbf16, #tpu.memory_space<vmem>>, vector<1x384x128xbf16>
    %44 = vector.shape_cast %43 : vector<1x384x128xbf16> to vector<384x128xbf16>
    %cst_60 = arith.constant dense<0.000000e+00> : vector<80x128xf32>
    %45 = tpu.matmul %42, %44, %cst_60 {dimension_numbers = #tpu.dot_dimension_numbers<[1], [0], [0], [1], [0, 0, 1, 1], [], []>} : vector<80x384xbf16>, vector<384x128xbf16>, vector<80x128xf32> -> vector<80x128xf32>
    %46 = arith.addf %35, %45 : vector<80x128xf32>
    %c0_61 = arith.constant 0 : index
    %c0_62 = arith.constant 0 : index
    %c11 = arith.constant 11 : index
    %c0_63 = arith.constant 0 : index
    %47 = vector.load %arg2[%c0_61, %c0_62, %c11, %c0_63] : memref<1x1x104x128xbf16, #tpu.memory_space<vmem>>, vector<1x1x80x128xbf16>
    %48 = vector.shape_cast %47 : vector<1x1x80x128xbf16> to vector<80x128xbf16>
    %c0_64 = arith.constant 0 : index
    %c0_65 = arith.constant 0 : index
    %c11_66 = arith.constant 11 : index
    %c0_67 = arith.constant 0 : index
    %49 = vector.load %arg3[%c0_64, %c0_65, %c11_66, %c0_67] : memref<1x1x104x128xbf16, #tpu.memory_space<vmem>>, vector<1x1x80x128xbf16>
    %50 = vector.shape_cast %49 : vector<1x1x80x128xbf16> to vector<80x128xbf16>
    %c0_68 = arith.constant 0 : index
    %c0_69 = arith.constant 0 : index
    %c11_70 = arith.constant 11 : index
    %c0_71 = arith.constant 0 : index
    %51 = vector.load %arg4[%c0_68, %c0_69, %c11_70, %c0_71] : memref<1x1x104x128xbf16, #tpu.memory_space<vmem>>, vector<1x1x80x128xbf16>
    %52 = vector.shape_cast %51 : vector<1x1x80x128xbf16> to vector<80x128xbf16>
    %53 = tpu.concatenate %48, %50, %52 in 1 : vector<80x128xbf16>, vector<80x128xbf16>, vector<80x128xbf16> -> vector<80x384xbf16>
    %c4 = arith.constant 4 : index
    %c0_72 = arith.constant 0 : index
    %c0_73 = arith.constant 0 : index
    %54 = vector.load %arg5[%c4, %c0_72, %c0_73] : memref<9x384x128xbf16, #tpu.memory_space<vmem>>, vector<1x384x128xbf16>
    %55 = vector.shape_cast %54 : vector<1x384x128xbf16> to vector<384x128xbf16>
    %cst_74 = arith.constant dense<0.000000e+00> : vector<80x128xf32>
    %56 = tpu.matmul %53, %55, %cst_74 {dimension_numbers = #tpu.dot_dimension_numbers<[1], [0], [0], [1], [0, 0, 1, 1], [], []>} : vector<80x384xbf16>, vector<384x128xbf16>, vector<80x128xf32> -> vector<80x128xf32>
    %57 = arith.addf %46, %56 : vector<80x128xf32>
    %c0_75 = arith.constant 0 : index
    %c0_76 = arith.constant 0 : index
    %c12 = arith.constant 12 : index
    %c0_77 = arith.constant 0 : index
    %58 = vector.load %arg2[%c0_75, %c0_76, %c12, %c0_77] : memref<1x1x104x128xbf16, #tpu.memory_space<vmem>>, vector<1x1x80x128xbf16>
    %59 = vector.shape_cast %58 : vector<1x1x80x128xbf16> to vector<80x128xbf16>
    %c0_78 = arith.constant 0 : index
    %c0_79 = arith.constant 0 : index
    %c12_80 = arith.constant 12 : index
    %c0_81 = arith.constant 0 : index
    %60 = vector.load %arg3[%c0_78, %c0_79, %c12_80, %c0_81] : memref<1x1x104x128xbf16, #tpu.memory_space<vmem>>, vector<1x1x80x128xbf16>
    %61 = vector.shape_cast %60 : vector<1x1x80x128xbf16> to vector<80x128xbf16>
    %c0_82 = arith.constant 0 : index
    %c0_83 = arith.constant 0 : index
    %c12_84 = arith.constant 12 : index
    %c0_85 = arith.constant 0 : index
    %62 = vector.load %arg4[%c0_82, %c0_83, %c12_84, %c0_85] : memref<1x1x104x128xbf16, #tpu.memory_space<vmem>>, vector<1x1x80x128xbf16>
    %63 = vector.shape_cast %62 : vector<1x1x80x128xbf16> to vector<80x128xbf16>
    %64 = tpu.concatenate %59, %61, %63 in 1 : vector<80x128xbf16>, vector<80x128xbf16>, vector<80x128xbf16> -> vector<80x384xbf16>
    %c5 = arith.constant 5 : index
    %c0_86 = arith.constant 0 : index
    %c0_87 = arith.constant 0 : index
    %65 = vector.load %arg5[%c5, %c0_86, %c0_87] : memref<9x384x128xbf16, #tpu.memory_space<vmem>>, vector<1x384x128xbf16>
    %66 = vector.shape_cast %65 : vector<1x384x128xbf16> to vector<384x128xbf16>
    %cst_88 = arith.constant dense<0.000000e+00> : vector<80x128xf32>
    %67 = tpu.matmul %64, %66, %cst_88 {dimension_numbers = #tpu.dot_dimension_numbers<[1], [0], [0], [1], [0, 0, 1, 1], [], []>} : vector<80x384xbf16>, vector<384x128xbf16>, vector<80x128xf32> -> vector<80x128xf32>
    %68 = arith.addf %57, %67 : vector<80x128xf32>
    %c0_89 = arith.constant 0 : index
    %c0_90 = arith.constant 0 : index
    %c20 = arith.constant 20 : index
    %c0_91 = arith.constant 0 : index
    %69 = vector.load %arg2[%c0_89, %c0_90, %c20, %c0_91] : memref<1x1x104x128xbf16, #tpu.memory_space<vmem>>, vector<1x1x80x128xbf16>
    %70 = vector.shape_cast %69 : vector<1x1x80x128xbf16> to vector<80x128xbf16>
    %c0_92 = arith.constant 0 : index
    %c0_93 = arith.constant 0 : index
    %c20_94 = arith.constant 20 : index
    %c0_95 = arith.constant 0 : index
    %71 = vector.load %arg3[%c0_92, %c0_93, %c20_94, %c0_95] : memref<1x1x104x128xbf16, #tpu.memory_space<vmem>>, vector<1x1x80x128xbf16>
    %72 = vector.shape_cast %71 : vector<1x1x80x128xbf16> to vector<80x128xbf16>
    %c0_96 = arith.constant 0 : index
    %c0_97 = arith.constant 0 : index
    %c20_98 = arith.constant 20 : index
    %c0_99 = arith.constant 0 : index
    %73 = vector.load %arg4[%c0_96, %c0_97, %c20_98, %c0_99] : memref<1x1x104x128xbf16, #tpu.memory_space<vmem>>, vector<1x1x80x128xbf16>
    %74 = vector.shape_cast %73 : vector<1x1x80x128xbf16> to vector<80x128xbf16>
    %75 = tpu.concatenate %70, %72, %74 in 1 : vector<80x128xbf16>, vector<80x128xbf16>, vector<80x128xbf16> -> vector<80x384xbf16>
    %c6 = arith.constant 6 : index
    %c0_100 = arith.constant 0 : index
    %c0_101 = arith.constant 0 : index
    %76 = vector.load %arg5[%c6, %c0_100, %c0_101] : memref<9x384x128xbf16, #tpu.memory_space<vmem>>, vector<1x384x128xbf16>
    %77 = vector.shape_cast %76 : vector<1x384x128xbf16> to vector<384x128xbf16>
    %cst_102 = arith.constant dense<0.000000e+00> : vector<80x128xf32>
    %78 = tpu.matmul %75, %77, %cst_102 {dimension_numbers = #tpu.dot_dimension_numbers<[1], [0], [0], [1], [0, 0, 1, 1], [], []>} : vector<80x384xbf16>, vector<384x128xbf16>, vector<80x128xf32> -> vector<80x128xf32>
    %79 = arith.addf %68, %78 : vector<80x128xf32>
    %c0_103 = arith.constant 0 : index
    %c0_104 = arith.constant 0 : index
    %c21 = arith.constant 21 : index
    %c0_105 = arith.constant 0 : index
    %80 = vector.load %arg2[%c0_103, %c0_104, %c21, %c0_105] : memref<1x1x104x128xbf16, #tpu.memory_space<vmem>>, vector<1x1x80x128xbf16>
    %81 = vector.shape_cast %80 : vector<1x1x80x128xbf16> to vector<80x128xbf16>
    %c0_106 = arith.constant 0 : index
    %c0_107 = arith.constant 0 : index
    %c21_108 = arith.constant 21 : index
    %c0_109 = arith.constant 0 : index
    %82 = vector.load %arg3[%c0_106, %c0_107, %c21_108, %c0_109] : memref<1x1x104x128xbf16, #tpu.memory_space<vmem>>, vector<1x1x80x128xbf16>
    %83 = vector.shape_cast %82 : vector<1x1x80x128xbf16> to vector<80x128xbf16>
    %c0_110 = arith.constant 0 : index
    %c0_111 = arith.constant 0 : index
    %c21_112 = arith.constant 21 : index
    %c0_113 = arith.constant 0 : index
    %84 = vector.load %arg4[%c0_110, %c0_111, %c21_112, %c0_113] : memref<1x1x104x128xbf16, #tpu.memory_space<vmem>>, vector<1x1x80x128xbf16>
    %85 = vector.shape_cast %84 : vector<1x1x80x128xbf16> to vector<80x128xbf16>
    %86 = tpu.concatenate %81, %83, %85 in 1 : vector<80x128xbf16>, vector<80x128xbf16>, vector<80x128xbf16> -> vector<80x384xbf16>
    %c7 = arith.constant 7 : index
    %c0_114 = arith.constant 0 : index
    %c0_115 = arith.constant 0 : index
    %87 = vector.load %arg5[%c7, %c0_114, %c0_115] : memref<9x384x128xbf16, #tpu.memory_space<vmem>>, vector<1x384x128xbf16>
    %88 = vector.shape_cast %87 : vector<1x384x128xbf16> to vector<384x128xbf16>
    %cst_116 = arith.constant dense<0.000000e+00> : vector<80x128xf32>
    %89 = tpu.matmul %86, %88, %cst_116 {dimension_numbers = #tpu.dot_dimension_numbers<[1], [0], [0], [1], [0, 0, 1, 1], [], []>} : vector<80x384xbf16>, vector<384x128xbf16>, vector<80x128xf32> -> vector<80x128xf32>
    %90 = arith.addf %79, %89 : vector<80x128xf32>
    %c0_117 = arith.constant 0 : index
    %c0_118 = arith.constant 0 : index
    %c22 = arith.constant 22 : index
    %c0_119 = arith.constant 0 : index
    %91 = vector.load %arg2[%c0_117, %c0_118, %c22, %c0_119] : memref<1x1x104x128xbf16, #tpu.memory_space<vmem>>, vector<1x1x80x128xbf16>
    %92 = vector.shape_cast %91 : vector<1x1x80x128xbf16> to vector<80x128xbf16>
    %c0_120 = arith.constant 0 : index
    %c0_121 = arith.constant 0 : index
    %c22_122 = arith.constant 22 : index
    %c0_123 = arith.constant 0 : index
    %93 = vector.load %arg3[%c0_120, %c0_121, %c22_122, %c0_123] : memref<1x1x104x128xbf16, #tpu.memory_space<vmem>>, vector<1x1x80x128xbf16>
    %94 = vector.shape_cast %93 : vector<1x1x80x128xbf16> to vector<80x128xbf16>
    %c0_124 = arith.constant 0 : index
    %c0_125 = arith.constant 0 : index
    %c22_126 = arith.constant 22 : index
    %c0_127 = arith.constant 0 : index
    %95 = vector.load %arg4[%c0_124, %c0_125, %c22_126, %c0_127] : memref<1x1x104x128xbf16, #tpu.memory_space<vmem>>, vector<1x1x80x128xbf16>
    %96 = vector.shape_cast %95 : vector<1x1x80x128xbf16> to vector<80x128xbf16>
    %97 = tpu.concatenate %92, %94, %96 in 1 : vector<80x128xbf16>, vector<80x128xbf16>, vector<80x128xbf16> -> vector<80x384xbf16>
    %c8 = arith.constant 8 : index
    %c0_128 = arith.constant 0 : index
    %c0_129 = arith.constant 0 : index
    %98 = vector.load %arg5[%c8, %c0_128, %c0_129] : memref<9x384x128xbf16, #tpu.memory_space<vmem>>, vector<1x384x128xbf16>
    %99 = vector.shape_cast %98 : vector<1x384x128xbf16> to vector<384x128xbf16>
    %cst_130 = arith.constant dense<0.000000e+00> : vector<80x128xf32>
    %100 = tpu.matmul %97, %99, %cst_130 {dimension_numbers = #tpu.dot_dimension_numbers<[1], [0], [0], [1], [0, 0, 1, 1], [], []>} : vector<80x384xbf16>, vector<384x128xbf16>, vector<80x128xf32> -> vector<80x128xf32>
    %101 = arith.addf %90, %100 : vector<80x128xf32>
    %102 = arith.truncf %101 : vector<80x128xf32> to vector<80x128xbf16>
    %c0_131 = arith.constant 0 : index
    %c0_132 = arith.constant 0 : index
    %c0_133 = arith.constant 0 : index
    %c0_134 = arith.constant 0 : index
    %103 = vector.load %arg6[%c0_131, %c0_132, %c0_133, %c0_134] : memref<1x1x80x128xbf16, #tpu.memory_space<vmem>>, vector<1x1x80x128xbf16>
    %104 = vector.shape_cast %103 : vector<1x1x80x128xbf16> to vector<80x128xbf16>
    %105 = vector.shape_cast %102 : vector<80x128xbf16> to vector<1x1x80x128xbf16>
    tpu.vector_store %arg6[%c0_131, %c0_132, %c0_133, %c0_134], %105 {strides = array<i32>} : memref<1x1x80x128xbf16, #tpu.memory_space<vmem>>, vector<1x1x80x128xbf16>,
    %106 = tpu.iota {dimensions = array<i32: 0>} : vector<80x1xi32>
    %c0_i32 = arith.constant 0 : i32
    %107 = vector.broadcast %c0_i32 : i32 to vector<80x1xi32>
    %108 = arith.addi %106, %107 : vector<80x1xi32>
    %c10_i32 = arith.constant 10 : i32
    %c0_i32_135 = arith.constant 0 : i32
    %109 = arith.cmpi eq, %c10_i32, %c0_i32_135 : i32
    %c1_i32 = arith.constant 1 : i32
    %110 = arith.select %109, %c1_i32, %c10_i32 : i32
    %111 = vector.broadcast %110 : i32 to vector<80x1xi32>
    %112 = arith.remsi %108, %111 : vector<80x1xi32>
    %c0_i32_136 = arith.constant 0 : i32
    %113 = vector.broadcast %c0_i32_136 : i32 to vector<80x1xi32>
    %114 = arith.cmpi ne, %112, %113 : vector<80x1xi32>
    %c0_i32_137 = arith.constant 0 : i32
    %115 = vector.broadcast %c0_i32_137 : i32 to vector<80x1xi32>
    %116 = arith.cmpi slt, %112, %115 : vector<80x1xi32>
    %c0_i32_138 = arith.constant 0 : i32
    %117 = arith.cmpi slt, %110, %c0_i32_138 : i32
    %118 = vector.broadcast %117 : i1 to vector<80x1xi1>
    %119 = vector.broadcast %118 : vector<80x1xi1> to vector<80x1xi1>
    %120 = arith.xori %116, %119 : vector<80x1xi1>
    %121 = arith.andi %120, %114 : vector<80x1xi1>
    %122 = vector.broadcast %110 : i32 to vector<80x1xi32>
    %123 = arith.addi %112, %122 : vector<80x1xi32>
    %124 = arith.select %121, %123, %112 : vector<80x1xi1>, vector<80x1xi32>
    %c8_i32 = arith.constant 8 : i32
    %125 = vector.broadcast %c8_i32 : i32 to vector<80x1xi32>
    %126 = arith.cmpi slt, %124, %125 : vector<80x1xi32>
    %cst_139 = arith.constant 0.000000e+00 : f32
    %127 = vector.shape_cast %126 : vector<80x1xi1> to vector<80x1xi1>
    %128 = vector.broadcast %127 : vector<80x1xi1> to vector<80x128xi1>
    %129 = vector.broadcast %cst_139 : f32 to vector<80x128xf32>
    %130 = arith.select %128, %101, %129 : vector<80x128xi1>, vector<80x128xf32>
    %cst_140 = arith.constant dense<0.000000e+00> : vector<128xf32>
    %131 = vector.multi_reduction <add>, %130, %cst_140 [0] : vector<80x128xf32> to vector<128xf32>
    %132 = vector.shape_cast %131 : vector<128xf32> to vector<1x128xf32>
    %133 = arith.addf %0, %132 : vector<1x128xf32>
    %134 = arith.mulf %130, %130 : vector<80x128xf32>
    %cst_141 = arith.constant dense<0.000000e+00> : vector<128xf32>
    %135 = vector.multi_reduction <add>, %134, %cst_141 [0] : vector<80x128xf32> to vector<128xf32>
    %136 = vector.shape_cast %135 : vector<128xf32> to vector<1x128xf32>
    %137 = arith.addf %1, %136 : vector<1x128xf32>
    %138 = tpu.concatenate %133, %137 in 0 : vector<1x128xf32>, vector<1x128xf32> -> vector<2x128xf32>
    %c0_142 = arith.constant 0 : index
    %c0_143 = arith.constant 0 : index
    %c0_144 = arith.constant 0 : index
    %c0_145 = arith.constant 0 : index
    %139 = vector.load %arg7[%c0_142, %c0_143, %c0_144, %c0_145] : memref<1x1x2x128xf32, #tpu.memory_space<vmem>>, vector<1x1x2x128xf32>
    %140 = vector.shape_cast %139 : vector<1x1x2x128xf32> to vector<2x128xf32>
    %141 = vector.shape_cast %138 : vector<2x128xf32> to vector<1x1x2x128xf32>
    tpu.vector_store %arg7[%c0_142, %c0_143, %c0_144, %c0_145], %141 {strides = array<i32>} : memref<1x1x2x128xf32, #tpu.memory_space<vmem>>, vector<1x1x2x128xf32>,
    return
  }
  func.func @transform_0(%arg0: i32, %arg1: i32) -> (i32, i32, i32, i32) {
    %c0_i32 = arith.constant 0 : i32
    %0 = arith.addi %arg1, %c0_i32 : i32
    %c0_i32_0 = arith.constant 0 : i32
    %c0_i32_1 = arith.constant 0 : i32
    %c0_i32_2 = arith.constant 0 : i32
    return %arg0, %0, %c0_i32_0, %c0_i32_1 : i32, i32, i32, i32
  }
  func.func @transform_1(%arg0: i32, %arg1: i32) -> (i32, i32, i32, i32) {
    %c1_i32 = arith.constant 1 : i32
    %0 = arith.addi %arg1, %c1_i32 : i32
    %c0_i32 = arith.constant 0 : i32
    %c0_i32_0 = arith.constant 0 : i32
    %c0_i32_1 = arith.constant 0 : i32
    return %arg0, %0, %c0_i32, %c0_i32_0 : i32, i32, i32, i32
  }
  func.func @transform_2(%arg0: i32, %arg1: i32) -> (i32, i32, i32, i32) {
    %c2_i32 = arith.constant 2 : i32
    %0 = arith.addi %arg1, %c2_i32 : i32
    %c0_i32 = arith.constant 0 : i32
    %c0_i32_0 = arith.constant 0 : i32
    %c0_i32_1 = arith.constant 0 : i32
    return %arg0, %0, %c0_i32, %c0_i32_0 : i32, i32, i32, i32
  }
  func.func @transform_3(%arg0: i32, %arg1: i32) -> (i32, i32, i32) {
    %c0_i32 = arith.constant 0 : i32
    %c0_i32_0 = arith.constant 0 : i32
    %c0_i32_1 = arith.constant 0 : i32
    %c0_i32_2 = arith.constant 0 : i32
    return %c0_i32, %c0_i32_0, %c0_i32_1 : i32, i32, i32
  }
  func.func @transform_4(%arg0: i32, %arg1: i32) -> (i32, i32, i32, i32) {
    %c0_i32 = arith.constant 0 : i32
    %c0_i32_0 = arith.constant 0 : i32
    %c0_i32_1 = arith.constant 0 : i32
    return %arg0, %arg1, %c0_i32, %c0_i32_0 : i32, i32, i32, i32
  }
  func.func @transform_5(%arg0: i32, %arg1: i32) -> (i32, i32, i32, i32) {
    %c0_i32 = arith.constant 0 : i32
    %c0_i32_0 = arith.constant 0 : i32
    %c0_i32_1 = arith.constant 0 : i32
    return %arg0, %arg1, %c0_i32, %c0_i32_0 : i32, i32, i32, i32
  }
}

</mosaic_0001>

<llo_original>
// kernel: basic_block_forward.7
$region0: #{basic_block_forward.7}
  #allocation0 [shape = 'u32[]', space=smem, size = 0x4, offset = 0x4, fixed_abs, tag = 'smem constant byte address 0x4 - core index']
  #allocation1 [shape = 'u32[144,128]{1,0:T(1,128)}', space=vmem, size = 0x12000, scoped, tag = 'internal scratch']
  %s0 = inlined_call_operand.vmem [shape: bf16[2,8,80,128], index: 0, kind: input, shape index: {}]
  %s1 = inlined_call_operand.vmem [shape: bf16[2,8,8,8,128], index: 1, kind: input, shape index: {}]
  %s2 = inlined_call_operand.vmem [shape: f32[1,128], index: 2, kind: input, shape index: {}]
  %s3 = inlined_call_operand.vmem [shape: f32[1,128], index: 3, kind: input, shape index: {}]
  %s4 = inlined_call_operand.vmem [shape: f32[2,8,8,8,128], index: 4, kind: output, shape index: {}]
  %s5 = sld [smem:[#allocation0]]
  $region49: #{basic_block_forward.7} parent=0
    _
  %s7 = ssub.s32 1, %s5
  %s8 = scalar_select 0, %s7, %s5
  loop: start=0, step=1, limit=18
  $region2: #{basic_block_forward.7} parent=0 // loop_pre_header
    _
  $region3: #{basic_block_forward.7} parent=0 // loop_header
    %s10 = sphi 0, %s14
    %p11 = scmp.ge.s32.totalorder %s10, 18
    %s17 = sphi 0, %s29
    %s18 = sphi 0, %s25
    %s19 = sphi 0, %s17
    %s20 = sphi 0, %s18
    %s21 = sphi 0, %s19
    %s22 = sphi 0, %s20
    %s34 = sphi 0, %s36
    %s37 = sphi 0, %s34
    %s38 = sphi 0, %s37
    %s54 = sphi 0, %s38
    %s62 = sphi 0, %s64
    %s65 = sphi 0, %s62
    %s66 = sphi 0, %s65
    %s82 = sphi 0, %s66
    %s86 = sphi 0, %s86
    %s88 = sphi 0, %s86
    %s89 = sphi 0, %s88
    %s103 = sphi 0, %s89
    %s107 = sphi 0, %s107
    %s109 = sphi 0, %s107
    %s110 = sphi 0, %s109
    %s124 = sphi 0, %s110
    %s132 = sphi 0, %s134
    %s135 = sphi 0, %s132
    %s136 = sphi 0, %s135
    %s152 = sphi 0, %s136
  $region4: #{basic_block_forward.7} parent=0 // loop_header_branch
    %13 = sbr.rel (%p11) target = $region8
  $region5: #{basic_block_forward.7} parent=0 // loop_body
    %s15 = ssub.s32 %s10, 1
    %s16 = ssub.s32 %s10, 2
    %s23 = sadd.s32 1, %s18
    %p24 = scmp.ge.s32.totalorder %s23, 8
    %s25 = scalar_select %p24, 0, %s23
    %s26 = sadd.s32 1, %s17
    %s27 = scalar_select %p24, %s26, %s17
    %p28 = scmp.ge.s32.totalorder %s27, 2
    %s29 = scalar_select %p28, 0, %s27
    %s30 = ssub.s32 %s17, %s29
    %s31 = ssub.s32 %s18, %s25
    %s32 = sor.u32 %s30, %s31
    %p33 = scmp.eq.s32.totalorder %s32, 0
    %s35 = sadd.s32 %s34, 1
    %s36 = scalar_select %p33, %s34, %s35
    %p39 = pneg %p33
    %p40 = scmp.eq.s32.totalorder %s10, 15
    %p41 = por %p39, %p40
    %p42 = scmp.ne.s32.totalorder %s34, %s37
    %p43 = scmp.eq.s32.totalorder %s10, 0
    %p44 = por %p42, %p43
    %p45 = scmp.ne.s32.totalorder %s34, %s37
    %p46 = scmp.eq.s32.totalorder %s15, 15
    %p47 = por %p45, %p46
    %p48 = scmp.ne.s32.totalorder %s37, %s38
    %p49 = scmp.eq.s32.totalorder %s15, 0
    %p50 = por %p48, %p49
    %p51 = scmp.ne.s32.totalorder %s37, %s38
    %p52 = scmp.eq.s32.totalorder %s16, 15
    %p53 = por %p51, %p52
    %p55 = scmp.ne.s32.totalorder %s38, %s54
    %p56 = scmp.eq.s32.totalorder %s16, 0
    %p57 = por %p55, %p56
    %s58 = ssub.s32 %s17, %s29
    %s59 = ssub.s32 %s18, %s25
    %s60 = sor.u32 %s58, %s59
    %p61 = scmp.eq.s32.totalorder %s60, 0
    %s63 = sadd.s32 %s62, 1
    %s64 = scalar_select %p61, %s62, %s63
    %p67 = pneg %p61
    %p68 = scmp.eq.s32.totalorder %s10, 15
    %p69 = por %p67, %p68
    %p70 = scmp.ne.s32.totalorder %s62, %s65
    %p71 = scmp.eq.s32.totalorder %s10, 0
    %p72 = por %p70, %p71
    %p73 = scmp.ne.s32.totalorder %s62, %s65
    %p74 = scmp.eq.s32.totalorder %s15, 15
    %p75 = por %p73, %p74
    %p76 = scmp.ne.s32.totalorder %s65, %s66
    %p77 = scmp.eq.s32.totalorder %s15, 0
    %p78 = por %p76, %p77
    %p79 = scmp.ne.s32.totalorder %s65, %s66
    %p80 = scmp.eq.s32.totalorder %s16, 15
    %p81 = por %p79, %p80
    %p83 = scmp.ne.s32.totalorder %s66, %s82
    %p84 = scmp.eq.s32.totalorder %s16, 0
    %p85 = por %p83, %p84
    %s87 = sadd.s32 %s86, 1
    %p90 = scmp.eq.s32.totalorder %s10, 15
    %p91 = scmp.ne.s32.totalorder %s86, %s88
    %p92 = scmp.eq.s32.totalorder %s10, 0
    %p93 = por %p91, %p92
    %p94 = scmp.ne.s32.totalorder %s86, %s88
    %p95 = scmp.eq.s32.totalorder %s15, 15
    %p96 = por %p94, %p95
    %p97 = scmp.ne.s32.totalorder %s88, %s89
    %p98 = scmp.eq.s32.totalorder %s15, 0
    %p99 = por %p97, %p98
    %p100 = scmp.ne.s32.totalorder %s88, %s89
    %p101 = scmp.eq.s32.totalorder %s16, 15
    %p102 = por %p100, %p101
    %p104 = scmp.ne.s32.totalorder %s89, %s103
    %p105 = scmp.eq.s32.totalorder %s16, 0
    %p106 = por %p104, %p105
    %s108 = sadd.s32 %s107, 1
    %p111 = scmp.eq.s32.totalorder %s10, 15
    %p112 = scmp.ne.s32.totalorder %s107, %s109
    %p113 = scmp.eq.s32.totalorder %s10, 0
    %p114 = por %p112, %p113
    %p115 = scmp.ne.s32.totalorder %s107, %s109
    %p116 = scmp.eq.s32.totalorder %s15, 15
    %p117 = por %p115, %p116
    %p118 = scmp.ne.s32.totalorder %s109, %s110
    %p119 = scmp.eq.s32.totalorder %s15, 0
    %p120 = por %p118, %p119
    %p121 = scmp.ne.s32.totalorder %s109, %s110
    %p122 = scmp.eq.s32.totalorder %s16, 15
    %p123 = por %p121, %p122
    %p125 = scmp.ne.s32.totalorder %s110, %s124
    %p126 = scmp.eq.s32.totalorder %s16, 0
    %p127 = por %p125, %p126
    %s128 = ssub.s32 %s17, %s29
    %s129 = ssub.s32 %s18, %s25
    %s130 = sor.u32 %s128, %s129
    %p131 = scmp.eq.s32.totalorder %s130, 0
    %s133 = sadd.s32 %s132, 1
    %s134 = scalar_select %p131, %s132, %s133
    %p137 = pneg %p131
    %p138 = scmp.eq.s32.totalorder %s10, 15
    %p139 = por %p137, %p138
    %p140 = scmp.ne.s32.totalorder %s132, %s135
    %p141 = scmp.eq.s32.totalorder %s10, 0
    %p142 = por %p140, %p141
    %p143 = scmp.ne.s32.totalorder %s132, %s135
    %p144 = scmp.eq.s32.totalorder %s15, 15
    %p145 = por %p143, %p144
    %p146 = scmp.ne.s32.totalorder %s135, %s136
    %p147 = scmp.eq.s32.totalorder %s15, 0
    %p148 = por %p146, %p147
    %p149 = scmp.ne.s32.totalorder %s135, %s136
    %p150 = scmp.eq.s32.totalorder %s16, 15
    %p151 = por %p149, %p150
    %p153 = scmp.ne.s32.totalorder %s136, %s152
    %p154 = scmp.eq.s32.totalorder %s16, 0
    %p155 = por %p153, %p154
    %p156 = scmp.le.s32.totalorder 1, %s10
    %p157 = scmp.lt.s32.totalorder %s10, 17
    %p158 = pnand %p156, %p157
    %p159 = pneg %p158
    // Predicated region
    $region9: #{basic_block_forward.7} parent=5 // pred_check
      _
    $region10: #{basic_block_forward.7} parent=5 // pred_check_branch
      %161 = sbr.rel (%p158) target = $region12
    $region11: #{basic_block_forward.7} parent=5 // pred_region
      %s162 = ssub.s32 %s10, 1
      // Predicated region
      $region13: #{basic_block_forward.7} parent=11 // pred_check
        %p163 = pneg %p99
      $region14: #{basic_block_forward.7} parent=11 // pred_check_branch
        %165 = sbr.rel (%p163) target = $region16
      $region15: #{basic_block_forward.7} parent=11 // pred_region
        _
      $region16: #{basic_block_forward.7} parent=11 // pred_fallthru
        _
      // Predicated region
      $region17: #{basic_block_forward.7} parent=11 // pred_check
        %p166 = pneg %p120
      $region18: #{basic_block_forward.7} parent=11 // pred_check_branch
        %168 = sbr.rel (%p166) target = $region20
      $region19: #{basic_block_forward.7} parent=11 // pred_region
        _
      $region20: #{basic_block_forward.7} parent=11 // pred_fallthru
        _
    $region12: #{basic_block_forward.7} parent=5 // pred_fallthru
      _
    %p169 = scmp.lt.s32.totalorder %s10, 16
    // Predicated region
    $region21: #{basic_block_forward.7} parent=5 // pred_check
      %p170 = pneg %p169
    $region22: #{basic_block_forward.7} parent=5 // pred_check_branch
      %172 = sbr.rel (%p170) target = $region24
    $region23: #{basic_block_forward.7} parent=5 // pred_region
      // Predicated region
      $region25: #{basic_block_forward.7} parent=23 // pred_check
        %p173 = pneg %p44
      $region26: #{basic_block_forward.7} parent=23 // pred_check_branch
        %175 = sbr.rel (%p173) target = $region28
      $region27: #{basic_block_forward.7} parent=23 // pred_region
        %p176 = scmp.lt.s32.totalorder %s17, 1
        %s177 = scalar_select %p176, %s17, 1
        %p178 = scmp.lt.s32.totalorder %s18, 7
        %s179 = scalar_select %p178, %s18, 7
        %s180 = smul.addr %s179, 10
        %s181 = smul.addr %s177, 80
        %s182 = sadd.s32 %s180, %s181
        %s183 = smul.addr %s182, 4
        %s184 = scalar_lea.vmem %s0, %s183
      $region28: #{basic_block_forward.7} parent=23 // pred_fallthru
        _
      // Predicated region
      $region29: #{basic_block_forward.7} parent=23 // pred_check
        %p185 = pneg %p72
      $region30: #{basic_block_forward.7} parent=23 // pred_check_branch
        %187 = sbr.rel (%p185) target = $region32
      $region31: #{basic_block_forward.7} parent=23 // pred_region
        %p188 = scmp.lt.s32.totalorder %s17, 1
        %s189 = scalar_select %p188, %s17, 1
        %p190 = scmp.lt.s32.totalorder %s18, 7
        %s191 = scalar_select %p190, %s18, 7
        %s192 = smul.addr %s191, 8
        %s193 = smul.addr %s189, 64
        %s194 = sadd.s32 %s192, %s193
        %s195 = smul.addr %s194, 4
        %s196 = scalar_lea.vmem %s1, %s195
      $region32: #{basic_block_forward.7} parent=23 // pred_fallthru
        _
    $region24: #{basic_block_forward.7} parent=5 // pred_fallthru
      _
    %p197 = scmp.le.s32.totalorder 1, %s10
    %p198 = scmp.lt.s32.totalorder %s10, 17
    %p199 = pnand %p197, %p198
    %p200 = pneg %p199
    // Predicated region
    $region33: #{basic_block_forward.7} parent=5 // pred_check
      _
    $region34: #{basic_block_forward.7} parent=5 // pred_check_branch
      %202 = sbr.rel (%p199) target = $region36
    $region35: #{basic_block_forward.7} parent=5 // pred_region
      %s203 = ssub.s32 %s10, 1
      %p204 = scmp.lt.s32.totalorder %s19, 1
      %s205 = scalar_select %p204, %s19, 1
      %p206 = scmp.lt.s32.totalorder %s20, 7
      %s207 = scalar_select %p206, %s20, 7
      %s208 = smul.addr %s207, 10
      %s209 = smul.addr %s205, 80
      %s210 = sadd.s32 %s208, %s209
      %s211 = smul.addr %s210, 4
      %s212 = scalar_lea.vmem %s0, %s211
      %p213 = pneg %p50
      %p214 = pneg %p47
      %p215 = scmp.lt.s32.totalorder %s19, 1
      %s216 = scalar_select %p215, %s19, 1
      %p217 = scmp.lt.s32.totalorder %s20, 7
      %s218 = scalar_select %p217, %s20, 7
      %s219 = smul.addr %s218, 8
      %s220 = smul.addr %s216, 64
      %s221 = sadd.s32 %s219, %s220
      %s222 = smul.addr %s221, 4
      %s223 = scalar_lea.vmem %s1, %s222
      %p224 = pneg %p78
      %p225 = pneg %p75
      %p226 = pneg %p99
      %p227 = pneg %p96
      %p228 = pneg %p120
      %p229 = pneg %p117
      %p230 = pneg %p148
      %p231 = pneg %p145
      %p232 = scmp.lt.s32.totalorder %s19, 1
      %s233 = scalar_select %p232, %s19, 1
      %p234 = scmp.lt.s32.totalorder %s20, 7
      %s235 = scalar_select %p234, %s20, 7
      %s236 = smul.addr %s235, 8
      %s237 = smul.addr %s233, 64
      %s238 = sadd.s32 %s236, %s237
      %s239 = smul.addr %s238, 8
      %s240 = scalar_lea.vmem %s4, %s239
      %p241 = scmp.lt.s32.totalorder %s19, 1
      %s242 = scalar_select %p241, %s19, 1
      %p243 = scmp.lt.s32.totalorder %s20, 7
      %s244 = scalar_select %p243, %s20, 7
      %s245 = smul.addr %s244, 10
      %s246 = smul.addr %s242, 80
      %s247 = sadd.s32 %s245, %s246
      %s248 = smul.addr %s247, 4
      %s249 = scalar_lea.vmem %s0, %s248
      %p250 = scmp.lt.s32.totalorder %s19, 1
      %s251 = scalar_select %p250, %s19, 1
      %p252 = scmp.lt.s32.totalorder %s20, 7
      %s253 = scalar_select %p252, %s20, 7
      %s254 = smul.addr %s253, 8
      %s255 = smul.addr %s251, 64
      %s256 = sadd.s32 %s254, %s255
      %s257 = smul.addr %s256, 4
      %s258 = scalar_lea.vmem %s1, %s257
      %p259 = scmp.lt.s32.totalorder %s19, 1
      %s260 = scalar_select %p259, %s19, 1
      %p261 = scmp.lt.s32.totalorder %s20, 7
      %s262 = scalar_select %p261, %s20, 7
      %s263 = smul.addr %s262, 8
      %s264 = smul.addr %s260, 64
      %s265 = sadd.s32 %s263, %s264
      %s266 = smul.addr %s265, 8
      %s267 = scalar_lea.vmem %s4, %s266
      %v268 = vld [vmem:[%s2] sm:$0x1]
      %v269 = vld [vmem:[%s3] sm:$0x1]
      %v270 = vld [vmem:[%s249] sm:$0xf]
      %v271 = vunpack.c.l.bf16 %v270
      %v273 = vlaneseq
      %v274 = vshrl.u32 %v273, 7
      %v275 = vsub.s32 0, %v274
      %v276 = vrot.slane %v268, %v275
      %v278 = vmul.f32 %v271, %v276
      %v280 = vlaneseq
      %v281 = vshrl.u32 %v280, 7
      %v282 = vsub.s32 0, %v281
      %v283 = vrot.slane %v269, %v282
      %v285 = vadd.f32 %v278, %v283
      %v286 = vld [vmem:[%s258] sm:$0xf]
      %v287 = vunpack.c.l.bf16 %v286
      %v288 = vadd.f32 %v285, %v287
      %v289 = vmax.f32 %v288, 0.0
      %290 = vst [vmem:[%s267] sm:$0xff] %v289
      %v291 = vld [vmem:[%s249 + $0x4] sm:$0xe]
      %v292 = vld [vmem:[%s249 + $0x8] sm:$0x1]
      %v293 = vunpack.c.l.bf16 %v291
      %v294 = vunpack.c.l.bf16 %v292
      %v295 = vmul.f32 %v293, %v276
      %v296 = vmul.f32 %v294, %v276
      %v297 = vadd.f32 %v295, %v283
      %v298 = vadd.f32 %v296, %v283
      %s299 = scalar_lea.vmem %s258, 4
      %v300 = vld [vmem:[%s299] sm:$0xf]
      %v301 = vunpack.c.l.bf16 %v300
      %v303 = vrot.slane %v301, 6
      %v305 = vadd.f32 %v297, %v303
      %v306 = vadd.f32 %v298, %v303
      %v307 = vmax.f32 %v305, 0.0
      %v308 = vmax.f32 %v306, 0.0
      %s309 = scalar_lea.vmem %s267, 8
      %310 = vst [vmem:[%s309 - $0x2] sm:$0xfc] %v307
      %311 = vst [vmem:[%s309 + $0x6] sm:$0x3] %v308
      %v312 = vld [vmem:[%s249 + $0x8] sm:$0xc]
      %v313 = vld [vmem:[%s249 + $0xc] sm:$0x3]
      %v314 = vunpack.c.l.bf16 %v312
      %v315 = vunpack.c.l.bf16 %v313
      %v316 = vmul.f32 %v314, %v276
      %v317 = vmul.f32 %v315, %v276
      %v318 = vadd.f32 %v316, %v283
      %v319 = vadd.f32 %v317, %v283
      %s320 = scalar_lea.vmem %s258, 8
      %v321 = vld [vmem:[%s320] sm:$0xf]
      %v322 = vunpack.c.l.bf16 %v321
      %v324 = vrot.slane %v322, 4
      %v326 = vadd.f32 %v318, %v324
      %v327 = vadd.f32 %v319, %v324
      %v328 = vmax.f32 %v326, 0.0
      %v329 = vmax.f32 %v327, 0.0
      %s330 = scalar_lea.vmem %s267, 16
      %331 = vst [vmem:[%s330 - $0x4] sm:$0xf0] %v328
      %332 = vst [vmem:[%s330 + $0x4] sm:$0xf] %v329
      %v333 = vld [vmem:[%s249 + $0xc] sm:$0x8]
      %v334 = vld [vmem:[%s249 + $0x10] sm:$0x7]
      %v335 = vunpack.c.l.bf16 %v333
      %v336 = vunpack.c.l.bf16 %v334
      %v337 = vmul.f32 %v335, %v276
      %v338 = vmul.f32 %v336, %v276
      %v339 = vadd.f32 %v337, %v283
      %v340 = vadd.f32 %v338, %v283
      %s341 = scalar_lea.vmem %s258, 12
      %v342 = vld [vmem:[%s341] sm:$0xf]
      %v343 = vunpack.c.l.bf16 %v342
      %v345 = vrot.slane %v343, 2
      %v347 = vadd.f32 %v339, %v345
      %v348 = vadd.f32 %v340, %v345
      %v349 = vmax.f32 %v347, 0.0
      %v350 = vmax.f32 %v348, 0.0
      %s351 = scalar_lea.vmem %s267, 24
      %352 = vst [vmem:[%s351 - $0x6] sm:$0xc0] %v349
      %353 = vst [vmem:[%s351 + $0x2] sm:$0x3f] %v350
      %v354 = vld [vmem:[%s249 + $0x14] sm:$0xf]
      %v355 = vunpack.c.l.bf16 %v354
      %v356 = vmul.f32 %v355, %v276
      %v357 = vadd.f32 %v356, %v283
      %s358 = scalar_lea.vmem %s258, 16
      %v359 = vld [vmem:[%s358] sm:$0xf]
      %v360 = vunpack.c.l.bf16 %v359
      %v361 = vadd.f32 %v357, %v360
      %v362 = vmax.f32 %v361, 0.0
      %s363 = scalar_lea.vmem %s267, 32
      %364 = vst [vmem:[%s363] sm:$0xff] %v362
      %v365 = vld [vmem:[%s249 + $0x18] sm:$0xe]
      %v366 = vld [vmem:[%s249 + $0x1c] sm:$0x1]
      %v367 = vunpack.c.l.bf16 %v365
      %v368 = vunpack.c.l.bf16 %v366
      %v369 = vmul.f32 %v367, %v276
      %v370 = vmul.f32 %v368, %v276
      %v371 = vadd.f32 %v369, %v283
      %v372 = vadd.f32 %v370, %v283
      %s373 = scalar_lea.vmem %s258, 20
      %v374 = vld [vmem:[%s373] sm:$0xf]
      %v375 = vunpack.c.l.bf16 %v374
      %v377 = vrot.slane %v375, 6
      %v379 = vadd.f32 %v371, %v377
      %v380 = vadd.f32 %v372, %v377
      %v381 = vmax.f32 %v379, 0.0
      %v382 = vmax.f32 %v380, 0.0
      %s383 = scalar_lea.vmem %s267, 40
      %384 = vst [vmem:[%s383 - $0x2] sm:$0xfc] %v381
      %385 = vst [vmem:[%s383 + $0x6] sm:$0x3] %v382
      %v386 = vld [vmem:[%s249 + $0x1c] sm:$0xc]
      %v387 = vld [vmem:[%s249 + $0x20] sm:$0x3]
      %v388 = vunpack.c.l.bf16 %v386
      %v389 = vunpack.c.l.bf16 %v387
      %v390 = vmul.f32 %v388, %v276
      %v391 = vmul.f32 %v389, %v276
      %v392 = vadd.f32 %v390, %v283
      %v393 = vadd.f32 %v391, %v283
      %s394 = scalar_lea.vmem %s258, 24
      %v395 = vld [vmem:[%s394] sm:$0xf]
      %v396 = vunpack.c.l.bf16 %v395
      %v398 = vrot.slane %v396, 4
      %v400 = vadd.f32 %v392, %v398
      %v401 = vadd.f32 %v393, %v398
      %v402 = vmax.f32 %v400, 0.0
      %v403 = vmax.f32 %v401, 0.0
      %s404 = scalar_lea.vmem %s267, 48
      %405 = vst [vmem:[%s404 - $0x4] sm:$0xf0] %v402
      %406 = vst [vmem:[%s404 + $0x4] sm:$0xf] %v403
      %v407 = vld [vmem:[%s249 + $0x20] sm:$0x8]
      %v408 = vld [vmem:[%s249 + $0x24] sm:$0x7]
      %v409 = vunpack.c.l.bf16 %v407
      %v410 = vunpack.c.l.bf16 %v408
      %v411 = vmul.f32 %v409, %v276
      %v412 = vmul.f32 %v410, %v276
      %v413 = vadd.f32 %v411, %v283
      %v414 = vadd.f32 %v412, %v283
      %s415 = scalar_lea.vmem %s258, 28
      %v416 = vld [vmem:[%s415] sm:$0xf]
      %v417 = vunpack.c.l.bf16 %v416
      %v419 = vrot.slane %v417, 2
      %v421 = vadd.f32 %v413, %v419
      %v422 = vadd.f32 %v414, %v419
      %v423 = vmax.f32 %v421, 0.0
      %v424 = vmax.f32 %v422, 0.0
      %s425 = scalar_lea.vmem %s267, 56
      %426 = vst [vmem:[%s425 - $0x6] sm:$0xc0] %v423
      %427 = vst [vmem:[%s425 + $0x2] sm:$0x3f] %v424
      %p428 = scmp.lt.s32.totalorder %s19, 1
      %s429 = scalar_select %p428, %s19, 1
      %p430 = scmp.lt.s32.totalorder %s20, 7
      %s431 = scalar_select %p430, %s20, 7
      %s432 = smul.addr %s431, 8
      %s433 = smul.addr %s429, 64
      %s434 = sadd.s32 %s432, %s433
      %s435 = smul.addr %s434, 8
      %s436 = scalar_lea.vmem %s4, %s435
      // Predicated region
      $region37: #{basic_block_forward.7} parent=35 // pred_check
        %p437 = pneg %p145
      $region38: #{basic_block_forward.7} parent=35 // pred_check_branch
        %439 = sbr.rel (%p437) target = $region40
      $region39: #{basic_block_forward.7} parent=35 // pred_region
        _
      $region40: #{basic_block_forward.7} parent=35 // pred_fallthru
        _
    $region36: #{basic_block_forward.7} parent=5 // pred_fallthru
      _
    %p440 = scmp.le.s32.totalorder 2, %s10
    // Predicated region
    $region41: #{basic_block_forward.7} parent=5 // pred_check
      %p441 = pneg %p440
    $region42: #{basic_block_forward.7} parent=5 // pred_check_branch
      %443 = sbr.rel (%p441) target = $region44
    $region43: #{basic_block_forward.7} parent=5 // pred_region
      %s444 = ssub.s32 %s10, 2
      // Predicated region
      $region45: #{basic_block_forward.7} parent=43 // pred_check
        %p445 = pneg %p151
      $region46: #{basic_block_forward.7} parent=43 // pred_check_branch
        %447 = sbr.rel (%p445) target = $region48
      $region47: #{basic_block_forward.7} parent=43 // pred_region
        %p448 = scmp.lt.s32.totalorder %s21, 1
        %s449 = scalar_select %p448, %s21, 1
        %p450 = scmp.lt.s32.totalorder %s22, 7
        %s451 = scalar_select %p450, %s22, 7
        %s452 = smul.addr %s451, 8
        %s453 = smul.addr %s449, 64
        %s454 = sadd.s32 %s452, %s453
        %s455 = smul.addr %s454, 8
        %s456 = scalar_lea.vmem %s4, %s455
      $region48: #{basic_block_forward.7} parent=43 // pred_fallthru
        _
    $region44: #{basic_block_forward.7} parent=5 // pred_fallthru
      _
  $region6: #{basic_block_forward.7} parent=0 // loop_footer
    %s14 = sadd.s32 1, %s10
  $region7: #{basic_block_forward.7} parent=0 // loop_footer_branch
    %9 = sbr.rel target = $region3
  $region8: #{basic_block_forward.7} parent=0 // loop_exit
    _

// kernel: basic_block_forward.5
$region0: #{basic_block_forward.5}
  #allocation0 [shape = 'u32[]', space=smem, size = 0x4, offset = 0x4, fixed_abs, tag = 'smem constant byte address 0x4 - core index']
  #allocation1 [shape = 'u32[144,128]{1,0:T(1,128)}', space=vmem, size = 0x12000, scoped, tag = 'internal scratch']
  %s0 = inlined_call_operand.vmem [shape: bf16[2,8,80,128], index: 0, kind: input, shape index: {}]
  %s1 = inlined_call_operand.vmem [shape: f32[1,128], index: 1, kind: input, shape index: {}]
  %s2 = inlined_call_operand.vmem [shape: f32[1,128], index: 2, kind: input, shape index: {}]
  %s3 = inlined_call_operand.vmem [shape: bf16[2,10,104,128], index: 3, kind: output, shape index: {}]
  %s4 = sld [smem:[#allocation0]]
  $region49: #{basic_block_forward.5} parent=0
    _
  %s6 = ssub.s32 1, %s4
  %s7 = scalar_select 0, %s6, %s4
  loop: start=0, step=1, limit=22
  $region2: #{basic_block_forward.5} parent=0 // loop_pre_header
    _
  $region3: #{basic_block_forward.5} parent=0 // loop_header
    %s9 = sphi 0, %s13
    %p10 = scmp.ge.s32.totalorder %s9, 22
    %s16 = sphi 0, %s28
    %s17 = sphi 0, %s24
    %s18 = sphi 0, %s16
    %s19 = sphi 0, %s17
    %s20 = sphi 0, %s18
    %s21 = sphi 0, %s19
    %s43 = sphi 0, %s45
    %s46 = sphi 0, %s43
    %s47 = sphi 0, %s46
    %s63 = sphi 0, %s47
    %s67 = sphi 0, %s67
    %s69 = sphi 0, %s67
    %s70 = sphi 0, %s69
    %s84 = sphi 0, %s70
    %s88 = sphi 0, %s88
    %s90 = sphi 0, %s88
    %s91 = sphi 0, %s90
    %s105 = sphi 0, %s91
    %s113 = sphi 0, %s115
    %s116 = sphi 0, %s113
    %s117 = sphi 0, %s116
    %s133 = sphi 0, %s117
  $region4: #{basic_block_forward.5} parent=0 // loop_header_branch
    %12 = sbr.rel (%p10) target = $region8
  $region5: #{basic_block_forward.5} parent=0 // loop_body
    %s14 = ssub.s32 %s9, 1
    %s15 = ssub.s32 %s9, 2
    %s22 = sadd.s32 1, %s17
    %p23 = scmp.ge.s32.totalorder %s22, 10
    %s24 = scalar_select %p23, 0, %s22
    %s25 = sadd.s32 1, %s16
    %s26 = scalar_select %p23, %s25, %s16
    %p27 = scmp.ge.s32.totalorder %s26, 2
    %s28 = scalar_select %p27, 0, %s26
    %s29 = ssub.s32 %s17, 1
    %p30 = scmp.gt.s32.totalorder %s29, 0
    %s31 = scalar_select %p30, %s29, 0
    %p32 = scmp.lt.s32.totalorder %s31, 7
    %s33 = scalar_select %p32, %s31, 7
    %s34 = ssub.s32 %s24, 1
    %p35 = scmp.gt.s32.totalorder %s34, 0
    %s36 = scalar_select %p35, %s34, 0
    %p37 = scmp.lt.s32.totalorder %s36, 7
    %s38 = scalar_select %p37, %s36, 7
    %s39 = ssub.s32 %s16, %s28
    %s40 = ssub.s32 %s33, %s38
    %s41 = sor.u32 %s39, %s40
    %p42 = scmp.eq.s32.totalorder %s41, 0
    %s44 = sadd.s32 %s43, 1
    %s45 = scalar_select %p42, %s43, %s44
    %p48 = pneg %p42
    %p49 = scmp.eq.s32.totalorder %s9, 19
    %p50 = por %p48, %p49
    %p51 = scmp.ne.s32.totalorder %s43, %s46
    %p52 = scmp.eq.s32.totalorder %s9, 0
    %p53 = por %p51, %p52
    %p54 = scmp.ne.s32.totalorder %s43, %s46
    %p55 = scmp.eq.s32.totalorder %s14, 19
    %p56 = por %p54, %p55
    %p57 = scmp.ne.s32.totalorder %s46, %s47
    %p58 = scmp.eq.s32.totalorder %s14, 0
    %p59 = por %p57, %p58
    %p60 = scmp.ne.s32.totalorder %s46, %s47
    %p61 = scmp.eq.s32.totalorder %s15, 19
    %p62 = por %p60, %p61
    %p64 = scmp.ne.s32.totalorder %s47, %s63
    %p65 = scmp.eq.s32.totalorder %s15, 0
    %p66 = por %p64, %p65
    %s68 = sadd.s32 %s67, 1
    %p71 = scmp.eq.s32.totalorder %s9, 19
    %p72 = scmp.ne.s32.totalorder %s67, %s69
    %p73 = scmp.eq.s32.totalorder %s9, 0
    %p74 = por %p72, %p73
    %p75 = scmp.ne.s32.totalorder %s67, %s69
    %p76 = scmp.eq.s32.totalorder %s14, 19
    %p77 = por %p75, %p76
    %p78 = scmp.ne.s32.totalorder %s69, %s70
    %p79 = scmp.eq.s32.totalorder %s14, 0
    %p80 = por %p78, %p79
    %p81 = scmp.ne.s32.totalorder %s69, %s70
    %p82 = scmp.eq.s32.totalorder %s15, 19
    %p83 = por %p81, %p82
    %p85 = scmp.ne.s32.totalorder %s70, %s84
    %p86 = scmp.eq.s32.totalorder %s15, 0
    %p87 = por %p85, %p86
    %s89 = sadd.s32 %s88, 1
    %p92 = scmp.eq.s32.totalorder %s9, 19
    %p93 = scmp.ne.s32.totalorder %s88, %s90
    %p94 = scmp.eq.s32.totalorder %s9, 0
    %p95 = por %p93, %p94
    %p96 = scmp.ne.s32.totalorder %s88, %s90
    %p97 = scmp.eq.s32.totalorder %s14, 19
    %p98 = por %p96, %p97
    %p99 = scmp.ne.s32.totalorder %s90, %s91
    %p100 = scmp.eq.s32.totalorder %s14, 0
    %p101 = por %p99, %p100
    %p102 = scmp.ne.s32.totalorder %s90, %s91
    %p103 = scmp.eq.s32.totalorder %s15, 19
    %p104 = por %p102, %p103
    %p106 = scmp.ne.s32.totalorder %s91, %s105
    %p107 = scmp.eq.s32.totalorder %s15, 0
    %p108 = por %p106, %p107
    %s109 = ssub.s32 %s16, %s28
    %s110 = ssub.s32 %s17, %s24
    %s111 = sor.u32 %s109, %s110
    %p112 = scmp.eq.s32.totalorder %s111, 0
    %s114 = sadd.s32 %s113, 1
    %s115 = scalar_select %p112, %s113, %s114
    %p118 = pneg %p112
    %p119 = scmp.eq.s32.totalorder %s9, 19
    %p120 = por %p118, %p119
    %p121 = scmp.ne.s32.totalorder %s113, %s116
    %p122 = scmp.eq.s32.totalorder %s9, 0
    %p123 = por %p121, %p122
    %p124 = scmp.ne.s32.totalorder %s113, %s116
    %p125 = scmp.eq.s32.totalorder %s14, 19
    %p126 = por %p124, %p125
    %p127 = scmp.ne.s32.totalorder %s116, %s117
    %p128 = scmp.eq.s32.totalorder %s14, 0
    %p129 = por %p127, %p128
    %p130 = scmp.ne.s32.totalorder %s116, %s117
    %p131 = scmp.eq.s32.totalorder %s15, 19
    %p132 = por %p130, %p131
    %p134 = scmp.ne.s32.totalorder %s117, %s133
    %p135 = scmp.eq.s32.totalorder %s15, 0
    %p136 = por %p134, %p135
    %p137 = scmp.le.s32.totalorder 1, %s9
    %p138 = scmp.lt.s32.totalorder %s9, 21
    %p139 = pnand %p137, %p138
    %p140 = pneg %p139
    // Predicated region
    $region9: #{basic_block_forward.5} parent=5 // pred_check
      _
    $region10: #{basic_block_forward.5} parent=5 // pred_check_branch
      %142 = sbr.rel (%p139) target = $region12
    $region11: #{basic_block_forward.5} parent=5 // pred_region
      %s143 = ssub.s32 %s9, 1
      // Predicated region
      $region13: #{basic_block_forward.5} parent=11 // pred_check
        %p144 = pneg %p80
      $region14: #{basic_block_forward.5} parent=11 // pred_check_branch
        %146 = sbr.rel (%p144) target = $region16
      $region15: #{basic_block_forward.5} parent=11 // pred_region
        _
      $region16: #{basic_block_forward.5} parent=11 // pred_fallthru
        _
      // Predicated region
      $region17: #{basic_block_forward.5} parent=11 // pred_check
        %p147 = pneg %p101
      $region18: #{basic_block_forward.5} parent=11 // pred_check_branch
        %149 = sbr.rel (%p147) target = $region20
      $region19: #{basic_block_forward.5} parent=11 // pred_region
        _
      $region20: #{basic_block_forward.5} parent=11 // pred_fallthru
        _
    $region12: #{basic_block_forward.5} parent=5 // pred_fallthru
      _
    %p150 = scmp.lt.s32.totalorder %s9, 20
    // Predicated region
    $region21: #{basic_block_forward.5} parent=5 // pred_check
      %p151 = pneg %p150
    $region22: #{basic_block_forward.5} parent=5 // pred_check_branch
      %153 = sbr.rel (%p151) target = $region24
    $region23: #{basic_block_forward.5} parent=5 // pred_region
      // Predicated region
      $region25: #{basic_block_forward.5} parent=23 // pred_check
        %p154 = pneg %p53
      $region26: #{basic_block_forward.5} parent=23 // pred_check_branch
        %156 = sbr.rel (%p154) target = $region28
      $region27: #{basic_block_forward.5} parent=23 // pred_region
        %s157 = ssub.s32 %s17, 1
        %p158 = scmp.gt.s32.totalorder %s157, 0
        %s159 = scalar_select %p158, %s157, 0
        %p160 = scmp.lt.s32.totalorder %s159, 7
        %s161 = scalar_select %p160, %s159, 7
        %p162 = scmp.lt.s32.totalorder %s16, 1
        %s163 = scalar_select %p162, %s16, 1
        %p164 = scmp.lt.s32.totalorder %s161, 7
        %s165 = scalar_select %p164, %s161, 7
        %s166 = smul.addr %s165, 10
        %s167 = smul.addr %s163, 80
        %s168 = sadd.s32 %s166, %s167
        %s169 = smul.addr %s168, 4
        %s170 = scalar_lea.vmem %s0, %s169
        %s171 = ssub.s32 %s17, 1
        %p172 = scmp.gt.s32.totalorder %s171, 0
        %s173 = scalar_select %p172, %s171, 0
        %p174 = scmp.lt.s32.totalorder %s173, 7
        %s175 = scalar_select %p174, %s173, 7
      $region28: #{basic_block_forward.5} parent=23 // pred_fallthru
        _
    $region24: #{basic_block_forward.5} parent=5 // pred_fallthru
      _
    %p176 = scmp.le.s32.totalorder 1, %s9
    %p177 = scmp.lt.s32.totalorder %s9, 21
    %p178 = pnand %p176, %p177
    %p179 = pneg %p178
    // Predicated region
    $region29: #{basic_block_forward.5} parent=5 // pred_check
      _
    $region30: #{basic_block_forward.5} parent=5 // pred_check_branch
      %181 = sbr.rel (%p178) target = $region32
    $region31: #{basic_block_forward.5} parent=5 // pred_region
      %s182 = ssub.s32 %s9, 1
      %s183 = ssub.s32 %s19, 1
      %p184 = scmp.gt.s32.totalorder %s183, 0
      %s185 = scalar_select %p184, %s183, 0
      %p186 = scmp.lt.s32.totalorder %s185, 7
      %s187 = scalar_select %p186, %s185, 7
      %p188 = scmp.lt.s32.totalorder %s18, 1
      %s189 = scalar_select %p188, %s18, 1
      %p190 = scmp.lt.s32.totalorder %s187, 7
      %s191 = scalar_select %p190, %s187, 7
      %s192 = smul.addr %s191, 10
      %s193 = smul.addr %s189, 80
      %s194 = sadd.s32 %s192, %s193
      %s195 = smul.addr %s194, 4
      %s196 = scalar_lea.vmem %s0, %s195
      %p197 = pneg %p59
      %p198 = pneg %p56
      %p199 = pneg %p80
      %p200 = pneg %p77
      %p201 = pneg %p101
      %p202 = pneg %p98
      %p203 = pneg %p129
      %p204 = pneg %p126
      %p205 = scmp.lt.s32.totalorder %s18, 1
      %s206 = scalar_select %p205, %s18, 1
      %p207 = scmp.lt.s32.totalorder %s19, 9
      %s208 = scalar_select %p207, %s19, 9
      %s209 = smul.addr %s208, 13
      %s210 = smul.addr %s206, 130
      %s211 = sadd.s32 %s209, %s210
      %s212 = smul.addr %s211, 4
      %s213 = scalar_lea.vmem %s3, %s212
      %s214 = ssub.s32 %s19, 1
      %p215 = scmp.gt.s32.totalorder %s214, 0
      %s216 = scalar_select %p215, %s214, 0
      %p217 = scmp.lt.s32.totalorder %s216, 7
      %s218 = scalar_select %p217, %s216, 7
      %p219 = scmp.lt.s32.totalorder %s18, 1
      %s220 = scalar_select %p219, %s18, 1
      %p221 = scmp.lt.s32.totalorder %s218, 7
      %s222 = scalar_select %p221, %s218, 7
      %s223 = smul.addr %s222, 10
      %s224 = smul.addr %s220, 80
      %s225 = sadd.s32 %s223, %s224
      %s226 = smul.addr %s225, 4
      %s227 = scalar_lea.vmem %s0, %s226
      %s228 = ssub.s32 %s19, 1
      %p229 = scmp.gt.s32.totalorder %s228, 0
      %s230 = scalar_select %p229, %s228, 0
      %p231 = scmp.lt.s32.totalorder %s230, 7
      %s232 = scalar_select %p231, %s230, 7
      %p233 = scmp.lt.s32.totalorder %s18, 1
      %s234 = scalar_select %p233, %s18, 1
      %p235 = scmp.lt.s32.totalorder %s19, 9
      %s236 = scalar_select %p235, %s19, 9
      %s237 = smul.addr %s236, 13
      %s238 = smul.addr %s234, 130
      %s239 = sadd.s32 %s237, %s238
      %s240 = smul.addr %s239, 4
      %s241 = scalar_lea.vmem %s3, %s240
      %243 = vst [vmem:[%s241] sm:$0xf] 0
      %244 = vst [vmem:[%s241 + $0x4] sm:$0xf] 0
      %245 = vst [vmem:[%s241 + $0x8] sm:$0xf] 0
      %246 = vst [vmem:[%s241 + $0xc] sm:$0xf] 0
      %247 = vst [vmem:[%s241 + $0x10] sm:$0xf] 0
      %248 = vst [vmem:[%s241 + $0x14] sm:$0xf] 0
      %249 = vst [vmem:[%s241 + $0x18] sm:$0xf] 0
      %250 = vst [vmem:[%s241 + $0x1c] sm:$0xf] 0
      %251 = vst [vmem:[%s241 + $0x20] sm:$0xf] 0
      %252 = vst [vmem:[%s241 + $0x24] sm:$0xf] 0
      %253 = vst [vmem:[%s241 + $0x28] sm:$0xf] 0
      %254 = vst [vmem:[%s241 + $0x2c] sm:$0xf] 0
      %255 = vst [vmem:[%s241 + $0x30] sm:$0xf] 0
      %p256 = scmp.ge.s32.totalorder %s19, 1
      %p257 = scmp.le.s32.totalorder %s19, 8
      %p258 = pnand %p256, %p257
      %p259 = pneg %p258
      // Predicated region
      $region33: #{basic_block_forward.5} parent=31 // pred_check
        _
      $region34: #{basic_block_forward.5} parent=31 // pred_check_branch
        %261 = sbr.rel (%p258) target = $region36
      $region35: #{basic_block_forward.5} parent=31 // pred_region
        %v262 = vld [vmem:[%s227] sm:$0xf]
        %v263 = vld [vmem:[%s227 + $0x4] sm:$0xf]
        %v264 = vld [vmem:[%s227 + $0x8] sm:$0xf]
        %v265 = vld [vmem:[%s227 + $0xc] sm:$0xf]
        %v266 = vld [vmem:[%s227 + $0x10] sm:$0xf]
        %v267 = vld [vmem:[%s227 + $0x14] sm:$0xf]
        %v268 = vld [vmem:[%s227 + $0x18] sm:$0xf]
        %v269 = vld [vmem:[%s227 + $0x1c] sm:$0xf]
        %v270 = vld [vmem:[%s227 + $0x20] sm:$0xf]
        %v271 = vld [vmem:[%s227 + $0x24] sm:$0xf]
        %v272 = vunpack.c.l.bf16 %v262
        %v273 = vunpack.c.l.bf16 %v263
        %v274 = vunpack.c.l.bf16 %v264
        %v275 = vunpack.c.l.bf16 %v265
        %v276 = vunpack.c.l.bf16 %v266
        %v277 = vunpack.c.l.bf16 %v267
        %v278 = vunpack.c.l.bf16 %v268
        %v279 = vunpack.c.l.bf16 %v269
        %v280 = vunpack.c.l.bf16 %v270
        %v281 = vunpack.c.l.bf16 %v271
        %v282 = vld [vmem:[%s1] sm:$0x1]
        %v284 = vlaneseq
        %v285 = vshrl.u32 %v284, 7
        %v286 = vsub.s32 0, %v285
        %v287 = vrot.slane %v282, %v286
        %v289 = vmul.f32 %v272, %v287
        %v290 = vmul.f32 %v273, %v287
        %v291 = vmul.f32 %v274, %v287
        %v292 = vmul.f32 %v275, %v287
        %v293 = vmul.f32 %v276, %v287
        %v294 = vmul.f32 %v277, %v287
        %v295 = vmul.f32 %v278, %v287
        %v296 = vmul.f32 %v279, %v287
        %v297 = vmul.f32 %v280, %v287
        %v298 = vmul.f32 %v281, %v287
        %v299 = vld [vmem:[%s2] sm:$0x1]
        %v301 = vlaneseq
        %v302 = vshrl.u32 %v301, 7
        %v303 = vsub.s32 0, %v302
        %v304 = vrot.slane %v299, %v303
        %v306 = vadd.f32 %v289, %v304
        %v307 = vadd.f32 %v290, %v304
        %v308 = vadd.f32 %v291, %v304
        %v309 = vadd.f32 %v292, %v304
        %v310 = vadd.f32 %v293, %v304
        %v311 = vadd.f32 %v294, %v304
        %v312 = vadd.f32 %v295, %v304
        %v313 = vadd.f32 %v296, %v304
        %v314 = vadd.f32 %v297, %v304
        %v315 = vadd.f32 %v298, %v304
        %v316 = vmax.f32 %v306, 0.0
        %v317 = vmax.f32 %v307, 0.0
        %v318 = vmax.f32 %v308, 0.0
        %v319 = vmax.f32 %v309, 0.0
        %v320 = vmax.f32 %v310, 0.0
        %v321 = vmax.f32 %v311, 0.0
        %v322 = vmax.f32 %v312, 0.0
        %v323 = vmax.f32 %v313, 0.0
        %v324 = vmax.f32 %v314, 0.0
        %v325 = vmax.f32 %v315, 0.0
        %v326 = vlaneseq
        %v327 = vshrl.u32 %v326, 7
        %v328 = vadd.s32 %v327, 8
        %v329 = vadd.s32 %v327, 16
        %v330 = vadd.s32 %v327, 24
        %v331 = vadd.s32 %v327, 32
        %v332 = vadd.s32 %v327, 40
        %v333 = vadd.s32 %v327, 48
        %v334 = vadd.s32 %v327, 56
        %v335 = vadd.s32 %v327, 64
        %v336 = vadd.s32 %v327, 72
        %vm337 = vcmp.lt.s32.totalorder %v327, 0
        %v338 = vsub.s32 0, %v327
        %v339 = vsel %vm337, %v338, %v327
        %v340 = vmul.u32.u64.compose %v339, 3435973837
        %v341 = vextract.low.u32 %v340
        %v342 = vextract.high.u32 %v340
        %v343 = vshrl.u32 %v342, 3
        %v344 = vmul.u32 %v343, 10
        %v345 = vsub.s32 %v339, %v344
        %v346 = vsub.s32 0, %v345
        %v347 = vsel %vm337, %v346, %v345
        %vm348 = vcmp.lt.s32.totalorder %v328, 0
        %v349 = vsub.s32 0, %v328
        %v350 = vsel %vm348, %v349, %v328
        %v351 = vmul.u32.u64.compose %v350, 3435973837
        %v352 = vextract.low.u32 %v351
        %v353 = vextract.high.u32 %v351
        %v354 = vshrl.u32 %v353, 3
        %v355 = vmul.u32 %v354, 10
        %v356 = vsub.s32 %v350, %v355
        %v357 = vsub.s32 0, %v356
        %v358 = vsel %vm348, %v357, %v356
        %vm359 = vcmp.lt.s32.totalorder %v329, 0
        %v360 = vsub.s32 0, %v329
        %v361 = vsel %vm359, %v360, %v329
        %v362 = vmul.u32.u64.compose %v361, 3435973837
        %v363 = vextract.low.u32 %v362
        %v364 = vextract.high.u32 %v362
        %v365 = vshrl.u32 %v364, 3
        %v366 = vmul.u32 %v365, 10
        %v367 = vsub.s32 %v361, %v366
        %v368 = vsub.s32 0, %v367
        %v369 = vsel %vm359, %v368, %v367
        %vm370 = vcmp.lt.s32.totalorder %v330, 0
        %v371 = vsub.s32 0, %v330
        %v372 = vsel %vm370, %v371, %v330
        %v373 = vmul.u32.u64.compose %v372, 3435973837
        %v374 = vextract.low.u32 %v373
        %v375 = vextract.high.u32 %v373
        %v376 = vshrl.u32 %v375, 3
        %v377 = vmul.u32 %v376, 10
        %v378 = vsub.s32 %v372, %v377
        %v379 = vsub.s32 0, %v378
        %v380 = vsel %vm370, %v379, %v378
        %vm381 = vcmp.lt.s32.totalorder %v331, 0
        %v382 = vsub.s32 0, %v331
        %v383 = vsel %vm381, %v382, %v331
        %v384 = vmul.u32.u64.compose %v383, 3435973837
        %v385 = vextract.low.u32 %v384
        %v386 = vextract.high.u32 %v384
        %v387 = vshrl.u32 %v386, 3
        %v388 = vmul.u32 %v387, 10
        %v389 = vsub.s32 %v383, %v388
        %v390 = vsub.s32 0, %v389
        %v391 = vsel %vm381, %v390, %v389
        %vm392 = vcmp.lt.s32.totalorder %v332, 0
        %v393 = vsub.s32 0, %v332
        %v394 = vsel %vm392, %v393, %v332
        %v395 = vmul.u32.u64.compose %v394, 3435973837
        %v396 = vextract.low.u32 %v395
        %v397 = vextract.high.u32 %v395
        %v398 = vshrl.u32 %v397, 3
        %v399 = vmul.u32 %v398, 10
        %v400 = vsub.s32 %v394, %v399
        %v401 = vsub.s32 0, %v400
        %v402 = vsel %vm392, %v401, %v400
        %vm403 = vcmp.lt.s32.totalorder %v333, 0
        %v404 = vsub.s32 0, %v333
        %v405 = vsel %vm403, %v404, %v333
        %v406 = vmul.u32.u64.compose %v405, 3435973837
        %v407 = vextract.low.u32 %v406
        %v408 = vextract.high.u32 %v406
        %v409 = vshrl.u32 %v408, 3
        %v410 = vmul.u32 %v409, 10
        %v411 = vsub.s32 %v405, %v410
        %v412 = vsub.s32 0, %v411
        %v413 = vsel %vm403, %v412, %v411
        %vm414 = vcmp.lt.s32.totalorder %v334, 0
        %v415 = vsub.s32 0, %v334
        %v416 = vsel %vm414, %v415, %v334
        %v417 = vmul.u32.u64.compose %v416, 3435973837
        %v418 = vextract.low.u32 %v417
        %v419 = vextract.high.u32 %v417
        %v420 = vshrl.u32 %v419, 3
        %v421 = vmul.u32 %v420, 10
        %v422 = vsub.s32 %v416, %v421
        %v423 = vsub.s32 0, %v422
        %v424 = vsel %vm414, %v423, %v422
        %vm425 = vcmp.lt.s32.totalorder %v335, 0
        %v426 = vsub.s32 0, %v335
        %v427 = vsel %vm425, %v426, %v335
        %v428 = vmul.u32.u64.compose %v427, 3435973837
        %v429 = vextract.low.u32 %v428
        %v430 = vextract.high.u32 %v428
        %v431 = vshrl.u32 %v430, 3
        %v432 = vmul.u32 %v431, 10
        %v433 = vsub.s32 %v427, %v432
        %v434 = vsub.s32 0, %v433
        %v435 = vsel %vm425, %v434, %v433
        %vm436 = vcmp.lt.s32.totalorder %v336, 0
        %v437 = vsub.s32 0, %v336
        %v438 = vsel %vm436, %v437, %v336
        %v439 = vmul.u32.u64.compose %v438, 3435973837
        %v440 = vextract.low.u32 %v439
        %v441 = vextract.high.u32 %v439
        %v442 = vshrl.u32 %v441, 3
        %v443 = vmul.u32 %v442, 10
        %v444 = vsub.s32 %v438, %v443
        %v445 = vsub.s32 0, %v444
        %v446 = vsel %vm436, %v445, %v444
        %vm447 = vcmp.ne.s32.totalorder %v347, 0
        %vm448 = vcmp.ne.s32.totalorder %v358, 0
        %vm449 = vcmp.ne.s32.totalorder %v369, 0
        %vm450 = vcmp.ne.s32.totalorder %v380, 0
        %vm451 = vcmp.ne.s32.totalorder %v391, 0
        %vm452 = vcmp.ne.s32.totalorder %v402, 0
        %vm453 = vcmp.ne.s32.totalorder %v413, 0
        %vm454 = vcmp.ne.s32.totalorder %v424, 0
        %vm455 = vcmp.ne.s32.totalorder %v435, 0
        %vm456 = vcmp.ne.s32.totalorder %v446, 0
        %vm457 = vcmp.lt.s32.totalorder %v347, 0
        %vm458 = vcmp.lt.s32.totalorder %v358, 0
        %vm459 = vcmp.lt.s32.totalorder %v369, 0
        %vm460 = vcmp.lt.s32.totalorder %v380, 0
        %vm461 = vcmp.lt.s32.totalorder %v391, 0
        %vm462 = vcmp.lt.s32.totalorder %v402, 0
        %vm463 = vcmp.lt.s32.totalorder %v413, 0
        %vm464 = vcmp.lt.s32.totalorder %v424, 0
        %vm465 = vcmp.lt.s32.totalorder %v435, 0
        %vm466 = vcmp.lt.s32.totalorder %v446, 0
        %vm467 = vmand %vm457, %vm447
        %vm468 = vmand %vm458, %vm448
        %vm469 = vmand %vm459, %vm449
        %vm470 = vmand %vm460, %vm450
        %vm471 = vmand %vm461, %vm451
        %vm472 = vmand %vm462, %vm452
        %vm473 = vmand %vm463, %vm453
        %vm474 = vmand %vm464, %vm454
        %vm475 = vmand %vm465, %vm455
        %vm476 = vmand %vm466, %vm456
        %v477 = vadd.s32 %v347, 10
        %v478 = vadd.s32 %v358, 10
        %v479 = vadd.s32 %v369, 10
        %v480 = vadd.s32 %v380, 10
        %v481 = vadd.s32 %v391, 10
        %v482 = vadd.s32 %v402, 10
        %v483 = vadd.s32 %v413, 10
        %v484 = vadd.s32 %v424, 10
        %v485 = vadd.s32 %v435, 10
        %v486 = vadd.s32 %v446, 10
        %v487 = vsel %vm467, %v477, %v347
        %v488 = vsel %vm468, %v478, %v358
        %v489 = vsel %vm469, %v479, %v369
        %v490 = vsel %vm470, %v480, %v380
        %v491 = vsel %vm471, %v481, %v391
        %v492 = vsel %vm472, %v482, %v402
        %v493 = vsel %vm473, %v483, %v413
        %v494 = vsel %vm474, %v484, %v424
        %v495 = vsel %vm475, %v485, %v435
        %v496 = vsel %vm476, %v486, %v446
        %vm497 = vcmp.lt.s32.totalorder %v487, 8
        %vm498 = vcmp.lt.s32.totalorder %v488, 8
        %vm499 = vcmp.lt.s32.totalorder %v489, 8
        %vm500 = vcmp.lt.s32.totalorder %v490, 8
        %vm501 = vcmp.lt.s32.totalorder %v491, 8
        %vm502 = vcmp.lt.s32.totalorder %v492, 8
        %vm503 = vcmp.lt.s32.totalorder %v493, 8
        %vm504 = vcmp.lt.s32.totalorder %v494, 8
        %vm505 = vcmp.lt.s32.totalorder %v495, 8
        %vm506 = vcmp.lt.s32.totalorder %v496, 8
        %v507 = vsel %vm497, 1, 0
        %v508 = vsel %vm498, 1, 0
        %v509 = vsel %vm499, 1, 0
        %v510 = vsel %vm500, 1, 0
        %v511 = vsel %vm501, 1, 0
        %v512 = vsel %vm502, 1, 0
        %v513 = vsel %vm503, 1, 0
        %v514 = vsel %vm504, 1, 0
        %v515 = vsel %vm505, 1, 0
        %v516 = vsel %vm506, 1, 0
        %vm517 = vcmp.eq.s32.totalorder %v507, 1
        %vm518 = vcmp.eq.s32.totalorder %v508, 1
        %vm519 = vcmp.eq.s32.totalorder %v509, 1
        %vm520 = vcmp.eq.s32.totalorder %v510, 1
        %vm521 = vcmp.eq.s32.totalorder %v511, 1
        %vm522 = vcmp.eq.s32.totalorder %v512, 1
        %vm523 = vcmp.eq.s32.totalorder %v513, 1
        %vm524 = vcmp.eq.s32.totalorder %v514, 1
        %vm525 = vcmp.eq.s32.totalorder %v515, 1
        %vm526 = vcmp.eq.s32.totalorder %v516, 1
        %v527 = vsel %vm517, %v316, 0.0
        %v528 = vsel %vm518, %v317, 0.0
        %v529 = vsel %vm519, %v318, 0.0
        %v530 = vsel %vm520, %v319, 0.0
        %v531 = vsel %vm521, %v320, 0.0
        %v532 = vsel %vm522, %v321, 0.0
        %v533 = vsel %vm523, %v322, 0.0
        %v534 = vsel %vm524, %v323, 0.0
        %v535 = vsel %vm525, %v324, 0.0
        %v536 = vsel %vm526, %v325, 0.0
        %v537 = vpack.c.bf16 %v528, %v527
        %v538 = vpack.c.bf16 %v530, %v529
        %v539 = vpack.c.bf16 %v532, %v531
        %v540 = vpack.c.bf16 %v534, %v533
        %v541 = vpack.c.bf16 %v536, %v535
        %v547 = vunpack.c.l.b16 %v537
        %v548 = vunpack.c.h.b16 %v537
        %v549 = vunpack.c.l.b16 %v538
        %v550 = vunpack.c.h.b16 %v538
        %v551 = vunpack.c.l.b16 %v539
        %v552 = vunpack.c.h.b16 %v539
        %v553 = vunpack.c.l.b16 %v540
        %v554 = vunpack.c.h.b16 %v540
        %v555 = vunpack.c.l.b16 %v541
        %v556 = vunpack.c.h.b16 %v541
        %v557 = vpack.c.b16 %v547, %v547
        %v558 = vpack.c.b16 %v548, %v548
        %v559 = vpack.c.b16 %v549, %v549
        %v560 = vpack.c.b16 %v550, %v550
        %v561 = vpack.c.b16 %v551, %v551
        %v562 = vpack.c.b16 %v552, %v552
        %v563 = vpack.c.b16 %v553, %v553
        %v564 = vpack.c.b16 %v554, %v554
        %v565 = vpack.c.b16 %v555, %v555
        %v566 = vpack.c.b16 %v556, %v556
        %vm567 = vsmask.f32 1280
        %vm568 = vsmask.f32 5392
        %vm569 = vmor %vm567, %vm568
        %v571 = vshrl.u32 %v557, 16
        %v573 = vrot.slane %v571, 6
        %v574 = vshll.u32 %v557, 16
        %v576 = vrot.slane %v574, 7
        %v577 = vor.u32 %v573, %v576
        %v578 = vrot.slane %v577, 4
        %v580 = vshrl.u32 %v558, 16
        %v582 = vrot.slane %v580, 6
        %v583 = vshll.u32 %v558, 16
        %v585 = vrot.slane %v583, 7
        %v586 = vor.u32 %v582, %v585
        %v587 = vsel %vm569, %v578, %v586
        %v588 = vrot.slane %v586, 4
        %v590 = vshrl.u32 %v559, 16
        %v592 = vrot.slane %v590, 6
        %v593 = vshll.u32 %v559, 16
        %v595 = vrot.slane %v593, 7
        %v596 = vor.u32 %v592, %v595
        %v597 = vsel %vm569, %v588, %v596
        %v598 = vrot.slane %v596, 4
        %v600 = vshrl.u32 %v560, 16
        %v602 = vrot.slane %v600, 6
        %v603 = vshll.u32 %v560, 16
        %v605 = vrot.slane %v603, 7
        %v606 = vor.u32 %v602, %v605
        %v607 = vsel %vm569, %v598, %v606
        %v608 = vrot.slane %v606, 4
        %v610 = vshrl.u32 %v561, 16
        %v612 = vrot.slane %v610, 6
        %v613 = vshll.u32 %v561, 16
        %v615 = vrot.slane %v613, 7
        %v616 = vor.u32 %v612, %v615
        %v617 = vsel %vm569, %v608, %v616
        %v618 = vrot.slane %v616, 4
        %v620 = vshrl.u32 %v562, 16
        %v622 = vrot.slane %v620, 6
        %v623 = vshll.u32 %v562, 16
        %v625 = vrot.slane %v623, 7
        %v626 = vor.u32 %v622, %v625
        %v627 = vsel %vm569, %v618, %v626
        %v628 = vrot.slane %v626, 4
        %v630 = vshrl.u32 %v563, 16
        %v632 = vrot.slane %v630, 6
        %v633 = vshll.u32 %v563, 16
        %v635 = vrot.slane %v633, 7
        %v636 = vor.u32 %v632, %v635
        %v637 = vsel %vm569, %v628, %v636
        %v638 = vrot.slane %v636, 4
        %v640 = vshrl.u32 %v564, 16
        %v642 = vrot.slane %v640, 6
        %v643 = vshll.u32 %v564, 16
        %v645 = vrot.slane %v643, 7
        %v646 = vor.u32 %v642, %v645
        %v647 = vsel %vm569, %v638, %v646
        %v648 = vrot.slane %v646, 4
        %v650 = vshrl.u32 %v565, 16
        %v652 = vrot.slane %v650, 6
        %v653 = vshll.u32 %v565, 16
        %v655 = vrot.slane %v653, 7
        %v656 = vor.u32 %v652, %v655
        %v657 = vsel %vm569, %v648, %v656
        %v658 = vrot.slane %v656, 4
        %v660 = vshrl.u32 %v566, 16
        %v662 = vrot.slane %v660, 6
        %v663 = vshll.u32 %v566, 16
        %v665 = vrot.slane %v663, 7
        %v666 = vor.u32 %v662, %v665
        %v667 = vsel %vm569, %v658, %v666
        %v668 = vrot.slane %v666, 4
        %vm680 = vcmask 1043457
        %vm681 = vsmask.f32 7942
        %vm682 = vmand %vm680, %vm681
        %v683 = vld [vmem:[%s241 + $0x4] sm:$0xe]
        %v684 = vsel %vm682, %v577, %v683
        %685 = vst [vmem:[%s241 + $0x4] sm:$0xe] %v684
        %686 = vst [vmem:[%s241 + $0x8] sm:$0xf] %v587
        %687 = vst [vmem:[%s241 + $0xc] sm:$0xf] %v597
        %688 = vst [vmem:[%s241 + $0x10] sm:$0xf] %v607
        %689 = vst [vmem:[%s241 + $0x14] sm:$0xf] %v617
        %690 = vst [vmem:[%s241 + $0x18] sm:$0xf] %v627
        %691 = vst [vmem:[%s241 + $0x1c] sm:$0xf] %v637
        %692 = vst [vmem:[%s241 + $0x20] sm:$0xf] %v647
        %693 = vst [vmem:[%s241 + $0x24] sm:$0xf] %v657
        %694 = vst [vmem:[%s241 + $0x28] sm:$0xf] %v667
        %vm695 = vcmask 1041408
        %vm696 = vmand %vm695, %vm567
        %v697 = vld [vmem:[%s241 + $0x2c] sm:$0x3]
        %v698 = vsel %vm696, %v668, %v697
        %699 = vst [vmem:[%s241 + $0x2c] sm:$0x3] %v698
      $region36: #{basic_block_forward.5} parent=31 // pred_fallthru
        _
      %p700 = scmp.lt.s32.totalorder %s18, 1
      %s701 = scalar_select %p700, %s18, 1
      %p702 = scmp.lt.s32.totalorder %s19, 9
      %s703 = scalar_select %p702, %s19, 9
      %s704 = smul.addr %s703, 13
      %s705 = smul.addr %s701, 130
      %s706 = sadd.s32 %s704, %s705
      %s707 = smul.addr %s706, 4
      %s708 = scalar_lea.vmem %s3, %s707
      // Predicated region
      $region37: #{basic_block_forward.5} parent=31 // pred_check
        %p709 = pneg %p126
      $region38: #{basic_block_forward.5} parent=31 // pred_check_branch
        %711 = sbr.rel (%p709) target = $region40
      $region39: #{basic_block_forward.5} parent=31 // pred_region
        _
      $region40: #{basic_block_forward.5} parent=31 // pred_fallthru
        _
    $region32: #{basic_block_forward.5} parent=5 // pred_fallthru
      _
    %p712 = scmp.le.s32.totalorder 2, %s9
    // Predicated region
    $region41: #{basic_block_forward.5} parent=5 // pred_check
      %p713 = pneg %p712
    $region42: #{basic_block_forward.5} parent=5 // pred_check_branch
      %715 = sbr.rel (%p713) target = $region44
    $region43: #{basic_block_forward.5} parent=5 // pred_region
      %s716 = ssub.s32 %s9, 2
      // Predicated region
      $region45: #{basic_block_forward.5} parent=43 // pred_check
        %p717 = pneg %p132
      $region46: #{basic_block_forward.5} parent=43 // pred_check_branch
        %719 = sbr.rel (%p717) target = $region48
      $region47: #{basic_block_forward.5} parent=43 // pred_region
        %p720 = scmp.lt.s32.totalorder %s20, 1
        %s721 = scalar_select %p720, %s20, 1
        %p722 = scmp.lt.s32.totalorder %s21, 9
        %s723 = scalar_select %p722, %s21, 9
        %s724 = smul.addr %s723, 13
        %s725 = smul.addr %s721, 130
        %s726 = sadd.s32 %s724, %s725
        %s727 = smul.addr %s726, 4
        %s728 = scalar_lea.vmem %s3, %s727
      $region48: #{basic_block_forward.5} parent=43 // pred_fallthru
        _
    $region44: #{basic_block_forward.5} parent=5 // pred_fallthru
      _
  $region6: #{basic_block_forward.5} parent=0 // loop_footer
    %s13 = sadd.s32 1, %s9
  $region7: #{basic_block_forward.5} parent=0 // loop_footer_branch
    %8 = sbr.rel target = $region3
  $region8: #{basic_block_forward.5} parent=0 // loop_exit
    _

// kernel: basic_block_forward.4
$region0: #{basic_block_forward.4}
  #allocation0 [shape = 'u32[]', space=smem, size = 0x4, offset = 0x4, fixed_abs, tag = 'smem constant byte address 0x4 - core index']
  #allocation1 [shape = 'u32[144,128]{1,0:T(1,128)}', space=vmem, size = 0x12000, scoped, tag = 'internal scratch']
  %s0 = inlined_call_operand.vmem [shape: bf16[2,10,104,128], index: 0, kind: input, shape index: {}, may-alias: {0,1,2}]
  %s1 = inlined_call_operand.vmem [shape: bf16[2,10,104,128], index: 1, kind: input, shape index: {}, may-alias: {0,1,2}]
  %s2 = inlined_call_operand.vmem [shape: bf16[2,10,104,128], index: 2, kind: input, shape index: {}, may-alias: {0,1,2}]
  %s3 = inlined_call_operand.vmem [shape: bf16[9,384,128], index: 3, kind: input, shape index: {}]
  %s4 = inlined_call_operand.vmem [shape: bf16[2,8,80,128], index: 4, kind: output, shape index: {0}]
  %s5 = inlined_call_operand.vmem [shape: f32[2,8,2,128], index: 5, kind: output, shape index: {1}]
  %6 = xla_tuple %s4, %s5
  %s7 = sld [smem:[#allocation0]]
  $region57: #{basic_block_forward.4} parent=0
    _
  %s9 = ssub.s32 1, %s7
  %s10 = scalar_select 0, %s9, %s7
  loop: start=0, step=1, limit=18
  $region2: #{basic_block_forward.4} parent=0 // loop_pre_header
    _
  $region3: #{basic_block_forward.4} parent=0 // loop_header
    %s12 = sphi 0, %s16
    %p13 = scmp.ge.s32.totalorder %s12, 18
    %s19 = sphi 0, %s31
    %s20 = sphi 0, %s27
    %s21 = sphi 0, %s19
    %s22 = sphi 0, %s20
    %s23 = sphi 0, %s21
    %s24 = sphi 0, %s22
    %s36 = sphi 0, %s38
    %s39 = sphi 0, %s36
    %s40 = sphi 0, %s39
    %s56 = sphi 0, %s40
    %s66 = sphi 0, %s68
    %s69 = sphi 0, %s66
    %s70 = sphi 0, %s69
    %s86 = sphi 0, %s70
    %s96 = sphi 0, %s98
    %s99 = sphi 0, %s96
    %s100 = sphi 0, %s99
    %s116 = sphi 0, %s100
    %s120 = sphi 0, %s120
    %s122 = sphi 0, %s120
    %s123 = sphi 0, %s122
    %s137 = sphi 0, %s123
    %s145 = sphi 0, %s147
    %s148 = sphi 0, %s145
    %s149 = sphi 0, %s148
    %s165 = sphi 0, %s149
    %s173 = sphi 0, %s175
    %s176 = sphi 0, %s173
    %s177 = sphi 0, %s176
    %s193 = sphi 0, %s177
  $region4: #{basic_block_forward.4} parent=0 // loop_header_branch
    %15 = sbr.rel (%p13) target = $region8
  $region5: #{basic_block_forward.4} parent=0 // loop_body
    %s17 = ssub.s32 %s12, 1
    %s18 = ssub.s32 %s12, 2
    %s25 = sadd.s32 1, %s20
    %p26 = scmp.ge.s32.totalorder %s25, 8
    %s27 = scalar_select %p26, 0, %s25
    %s28 = sadd.s32 1, %s19
    %s29 = scalar_select %p26, %s28, %s19
    %p30 = scmp.ge.s32.totalorder %s29, 2
    %s31 = scalar_select %p30, 0, %s29
    %s32 = ssub.s32 %s19, %s31
    %s33 = ssub.s32 %s20, %s27
    %s34 = sor.u32 %s32, %s33
    %p35 = scmp.eq.s32.totalorder %s34, 0
    %s37 = sadd.s32 %s36, 1
    %s38 = scalar_select %p35, %s36, %s37
    %p41 = pneg %p35
    %p42 = scmp.eq.s32.totalorder %s12, 15
    %p43 = por %p41, %p42
    %p44 = scmp.ne.s32.totalorder %s36, %s39
    %p45 = scmp.eq.s32.totalorder %s12, 0
    %p46 = por %p44, %p45
    %p47 = scmp.ne.s32.totalorder %s36, %s39
    %p48 = scmp.eq.s32.totalorder %s17, 15
    %p49 = por %p47, %p48
    %p50 = scmp.ne.s32.totalorder %s39, %s40
    %p51 = scmp.eq.s32.totalorder %s17, 0
    %p52 = por %p50, %p51
    %p53 = scmp.ne.s32.totalorder %s39, %s40
    %p54 = scmp.eq.s32.totalorder %s18, 15
    %p55 = por %p53, %p54
    %p57 = scmp.ne.s32.totalorder %s40, %s56
    %p58 = scmp.eq.s32.totalorder %s18, 0
    %p59 = por %p57, %p58
    %s60 = sadd.s32 %s20, 1
    %s61 = sadd.s32 %s27, 1
    %s62 = ssub.s32 %s19, %s31
    %s63 = ssub.s32 %s60, %s61
    %s64 = sor.u32 %s62, %s63
    %p65 = scmp.eq.s32.totalorder %s64, 0
    %s67 = sadd.s32 %s66, 1
    %s68 = scalar_select %p65, %s66, %s67
    %p71 = pneg %p65
    %p72 = scmp.eq.s32.totalorder %s12, 15
    %p73 = por %p71, %p72
    %p74 = scmp.ne.s32.totalorder %s66, %s69
    %p75 = scmp.eq.s32.totalorder %s12, 0
    %p76 = por %p74, %p75
    %p77 = scmp.ne.s32.totalorder %s66, %s69
    %p78 = scmp.eq.s32.totalorder %s17, 15
    %p79 = por %p77, %p78
    %p80 = scmp.ne.s32.totalorder %s69, %s70
    %p81 = scmp.eq.s32.totalorder %s17, 0
    %p82 = por %p80, %p81
    %p83 = scmp.ne.s32.totalorder %s69, %s70
    %p84 = scmp.eq.s32.totalorder %s18, 15
    %p85 = por %p83, %p84
    %p87 = scmp.ne.s32.totalorder %s70, %s86
    %p88 = scmp.eq.s32.totalorder %s18, 0
    %p89 = por %p87, %p88
    %s90 = sadd.s32 %s20, 2
    %s91 = sadd.s32 %s27, 2
    %s92 = ssub.s32 %s19, %s31
    %s93 = ssub.s32 %s90, %s91
    %s94 = sor.u32 %s92, %s93
    %p95 = scmp.eq.s32.totalorder %s94, 0
    %s97 = sadd.s32 %s96, 1
    %s98 = scalar_select %p95, %s96, %s97
    %p101 = pneg %p95
    %p102 = scmp.eq.s32.totalorder %s12, 15
    %p103 = por %p101, %p102
    %p104 = scmp.ne.s32.totalorder %s96, %s99
    %p105 = scmp.eq.s32.totalorder %s12, 0
    %p106 = por %p104, %p105
    %p107 = scmp.ne.s32.totalorder %s96, %s99
    %p108 = scmp.eq.s32.totalorder %s17, 15
    %p109 = por %p107, %p108
    %p110 = scmp.ne.s32.totalorder %s99, %s100
    %p111 = scmp.eq.s32.totalorder %s17, 0
    %p112 = por %p110, %p111
    %p113 = scmp.ne.s32.totalorder %s99, %s100
    %p114 = scmp.eq.s32.totalorder %s18, 15
    %p115 = por %p113, %p114
    %p117 = scmp.ne.s32.totalorder %s100, %s116
    %p118 = scmp.eq.s32.totalorder %s18, 0
    %p119 = por %p117, %p118
    %s121 = sadd.s32 %s120, 1
    %p124 = scmp.eq.s32.totalorder %s12, 15
    %p125 = scmp.ne.s32.totalorder %s120, %s122
    %p126 = scmp.eq.s32.totalorder %s12, 0
    %p127 = por %p125, %p126
    %p128 = scmp.ne.s32.totalorder %s120, %s122
    %p129 = scmp.eq.s32.totalorder %s17, 15
    %p130 = por %p128, %p129
    %p131 = scmp.ne.s32.totalorder %s122, %s123
    %p132 = scmp.eq.s32.totalorder %s17, 0
    %p133 = por %p131, %p132
    %p134 = scmp.ne.s32.totalorder %s122, %s123
    %p135 = scmp.eq.s32.totalorder %s18, 15
    %p136 = por %p134, %p135
    %p138 = scmp.ne.s32.totalorder %s123, %s137
    %p139 = scmp.eq.s32.totalorder %s18, 0
    %p140 = por %p138, %p139
    %s141 = ssub.s32 %s19, %s31
    %s142 = ssub.s32 %s20, %s27
    %s143 = sor.u32 %s141, %s142
    %p144 = scmp.eq.s32.totalorder %s143, 0
    %s146 = sadd.s32 %s145, 1
    %s147 = scalar_select %p144, %s145, %s146
    %p150 = pneg %p144
    %p151 = scmp.eq.s32.totalorder %s12, 15
    %p152 = por %p150, %p151
    %p153 = scmp.ne.s32.totalorder %s145, %s148
    %p154 = scmp.eq.s32.totalorder %s12, 0
    %p155 = por %p153, %p154
    %p156 = scmp.ne.s32.totalorder %s145, %s148
    %p157 = scmp.eq.s32.totalorder %s17, 15
    %p158 = por %p156, %p157
    %p159 = scmp.ne.s32.totalorder %s148, %s149
    %p160 = scmp.eq.s32.totalorder %s17, 0
    %p161 = por %p159, %p160
    %p162 = scmp.ne.s32.totalorder %s148, %s149
    %p163 = scmp.eq.s32.totalorder %s18, 15
    %p164 = por %p162, %p163
    %p166 = scmp.ne.s32.totalorder %s149, %s165
    %p167 = scmp.eq.s32.totalorder %s18, 0
    %p168 = por %p166, %p167
    %s169 = ssub.s32 %s19, %s31
    %s170 = ssub.s32 %s20, %s27
    %s171 = sor.u32 %s169, %s170
    %p172 = scmp.eq.s32.totalorder %s171, 0
    %s174 = sadd.s32 %s173, 1
    %s175 = scalar_select %p172, %s173, %s174
    %p178 = pneg %p172
    %p179 = scmp.eq.s32.totalorder %s12, 15
    %p180 = por %p178, %p179
    %p181 = scmp.ne.s32.totalorder %s173, %s176
    %p182 = scmp.eq.s32.totalorder %s12, 0
    %p183 = por %p181, %p182
    %p184 = scmp.ne.s32.totalorder %s173, %s176
    %p185 = scmp.eq.s32.totalorder %s17, 15
    %p186 = por %p184, %p185
    %p187 = scmp.ne.s32.totalorder %s176, %s177
    %p188 = scmp.eq.s32.totalorder %s17, 0
    %p189 = por %p187, %p188
    %p190 = scmp.ne.s32.totalorder %s176, %s177
    %p191 = scmp.eq.s32.totalorder %s18, 15
    %p192 = por %p190, %p191
    %p194 = scmp.ne.s32.totalorder %s177, %s193
    %p195 = scmp.eq.s32.totalorder %s18, 0
    %p196 = por %p194, %p195
    %p197 = scmp.le.s32.totalorder 1, %s12
    %p198 = scmp.lt.s32.totalorder %s12, 17
    %p199 = pnand %p197, %p198
    %p200 = pneg %p199
    // Predicated region
    $region9: #{basic_block_forward.4} parent=5 // pred_check
      _
    $region10: #{basic_block_forward.4} parent=5 // pred_check_branch
      %202 = sbr.rel (%p199) target = $region12
    $region11: #{basic_block_forward.4} parent=5 // pred_region
      %s203 = ssub.s32 %s12, 1
      // Predicated region
      $region13: #{basic_block_forward.4} parent=11 // pred_check
        %p204 = pneg %p133
      $region14: #{basic_block_forward.4} parent=11 // pred_check_branch
        %206 = sbr.rel (%p204) target = $region16
      $region15: #{basic_block_forward.4} parent=11 // pred_region
        _
      $region16: #{basic_block_forward.4} parent=11 // pred_fallthru
        _
    $region12: #{basic_block_forward.4} parent=5 // pred_fallthru
      _
    %p207 = scmp.lt.s32.totalorder %s12, 16
    // Predicated region
    $region17: #{basic_block_forward.4} parent=5 // pred_check
      %p208 = pneg %p207
    $region18: #{basic_block_forward.4} parent=5 // pred_check_branch
      %210 = sbr.rel (%p208) target = $region20
    $region19: #{basic_block_forward.4} parent=5 // pred_region
      // Predicated region
      $region21: #{basic_block_forward.4} parent=19 // pred_check
        %p211 = pneg %p46
      $region22: #{basic_block_forward.4} parent=19 // pred_check_branch
        %213 = sbr.rel (%p211) target = $region24
      $region23: #{basic_block_forward.4} parent=19 // pred_region
        %p214 = scmp.lt.s32.totalorder %s19, 1
        %s215 = scalar_select %p214, %s19, 1
        %p216 = scmp.lt.s32.totalorder %s20, 9
        %s217 = scalar_select %p216, %s20, 9
        %s218 = smul.addr %s217, 13
        %s219 = smul.addr %s215, 130
        %s220 = sadd.s32 %s218, %s219
        %s221 = smul.addr %s220, 4
        %s222 = scalar_lea.vmem %s0, %s221
      $region24: #{basic_block_forward.4} parent=19 // pred_fallthru
        _
      // Predicated region
      $region25: #{basic_block_forward.4} parent=19 // pred_check
        %p223 = pneg %p76
      $region26: #{basic_block_forward.4} parent=19 // pred_check_branch
        %225 = sbr.rel (%p223) target = $region28
      $region27: #{basic_block_forward.4} parent=19 // pred_region
        %s226 = sadd.s32 %s20, 1
        %p227 = scmp.lt.s32.totalorder %s19, 1
        %s228 = scalar_select %p227, %s19, 1
        %p229 = scmp.lt.s32.totalorder %s226, 9
        %s230 = scalar_select %p229, %s226, 9
        %s231 = smul.addr %s230, 13
        %s232 = smul.addr %s228, 130
        %s233 = sadd.s32 %s231, %s232
        %s234 = smul.addr %s233, 4
        %s235 = scalar_lea.vmem %s1, %s234
        %s236 = sadd.s32 %s20, 1
      $region28: #{basic_block_forward.4} parent=19 // pred_fallthru
        _
      // Predicated region
      $region29: #{basic_block_forward.4} parent=19 // pred_check
        %p237 = pneg %p106
      $region30: #{basic_block_forward.4} parent=19 // pred_check_branch
        %239 = sbr.rel (%p237) target = $region32
      $region31: #{basic_block_forward.4} parent=19 // pred_region
        %s240 = sadd.s32 %s20, 2
        %p241 = scmp.lt.s32.totalorder %s19, 1
        %s242 = scalar_select %p241, %s19, 1
        %p243 = scmp.lt.s32.totalorder %s240, 9
        %s244 = scalar_select %p243, %s240, 9
        %s245 = smul.addr %s244, 13
        %s246 = smul.addr %s242, 130
        %s247 = sadd.s32 %s245, %s246
        %s248 = smul.addr %s247, 4
        %s249 = scalar_lea.vmem %s2, %s248
        %s250 = sadd.s32 %s20, 2
      $region32: #{basic_block_forward.4} parent=19 // pred_fallthru
        _
    $region20: #{basic_block_forward.4} parent=5 // pred_fallthru
      _
    %p251 = scmp.le.s32.totalorder 1, %s12
    %p252 = scmp.lt.s32.totalorder %s12, 17
    %p253 = pnand %p251, %p252
    %p254 = pneg %p253
    // Predicated region
    $region33: #{basic_block_forward.4} parent=5 // pred_check
      _
    $region34: #{basic_block_forward.4} parent=5 // pred_check_branch
      %256 = sbr.rel (%p253) target = $region36
    $region35: #{basic_block_forward.4} parent=5 // pred_region
      %s257 = ssub.s32 %s12, 1
      %p258 = scmp.lt.s32.totalorder %s21, 1
      %s259 = scalar_select %p258, %s21, 1
      %p260 = scmp.lt.s32.totalorder %s22, 9
      %s261 = scalar_select %p260, %s22, 9
      %s262 = smul.addr %s261, 13
      %s263 = smul.addr %s259, 130
      %s264 = sadd.s32 %s262, %s263
      %s265 = smul.addr %s264, 4
      %s266 = scalar_lea.vmem %s0, %s265
      %p267 = pneg %p52
      %p268 = pneg %p49
      %s269 = sadd.s32 %s22, 1
      %p270 = scmp.lt.s32.totalorder %s21, 1
      %s271 = scalar_select %p270, %s21, 1
      %p272 = scmp.lt.s32.totalorder %s269, 9
      %s273 = scalar_select %p272, %s269, 9
      %s274 = smul.addr %s273, 13
      %s275 = smul.addr %s271, 130
      %s276 = sadd.s32 %s274, %s275
      %s277 = smul.addr %s276, 4
      %s278 = scalar_lea.vmem %s1, %s277
      %p279 = pneg %p82
      %p280 = pneg %p79
      %s281 = sadd.s32 %s22, 2
      %p282 = scmp.lt.s32.totalorder %s21, 1
      %s283 = scalar_select %p282, %s21, 1
      %p284 = scmp.lt.s32.totalorder %s281, 9
      %s285 = scalar_select %p284, %s281, 9
      %s286 = smul.addr %s285, 13
      %s287 = smul.addr %s283, 130
      %s288 = sadd.s32 %s286, %s287
      %s289 = smul.addr %s288, 4
      %s290 = scalar_lea.vmem %s2, %s289
      %p291 = pneg %p112
      %p292 = pneg %p109
      %p293 = pneg %p133
      %p294 = pneg %p130
      %p295 = pneg %p161
      %p296 = pneg %p158
      %p297 = scmp.lt.s32.totalorder %s21, 1
      %s298 = scalar_select %p297, %s21, 1
      %p299 = scmp.lt.s32.totalorder %s22, 7
      %s300 = scalar_select %p299, %s22, 7
      %s301 = smul.addr %s300, 10
      %s302 = smul.addr %s298, 80
      %s303 = sadd.s32 %s301, %s302
      %s304 = smul.addr %s303, 4
      %s305 = scalar_lea.vmem %s4, %s304
      %p306 = pneg %p189
      %p307 = pneg %p186
      %p308 = scmp.lt.s32.totalorder %s21, 1
      %s309 = scalar_select %p308, %s21, 1
      %p310 = scmp.lt.s32.totalorder %s22, 7
      %s311 = scalar_select %p310, %s22, 7
      %s312 = smul.addr %s309, 8
      %s313 = sadd.s32 %s311, %s312
      %s314 = smul.addr %s313, 2
      %s315 = scalar_lea.vmem %s5, %s314
      %p316 = scmp.lt.s32.totalorder %s21, 1
      %s317 = scalar_select %p316, %s21, 1
      %p318 = scmp.lt.s32.totalorder %s22, 9
      %s319 = scalar_select %p318, %s22, 9
      %s320 = smul.addr %s319, 13
      %s321 = smul.addr %s317, 130
      %s322 = sadd.s32 %s320, %s321
      %s323 = smul.addr %s322, 4
      %s324 = scalar_lea.vmem %s0, %s323
      %s325 = sadd.s32 %s22, 1
      %p326 = scmp.lt.s32.totalorder %s21, 1
      %s327 = scalar_select %p326, %s21, 1
      %p328 = scmp.lt.s32.totalorder %s325, 9
      %s329 = scalar_select %p328, %s325, 9
      %s330 = smul.addr %s329, 13
      %s331 = smul.addr %s327, 130
      %s332 = sadd.s32 %s330, %s331
      %s333 = smul.addr %s332, 4
      %s334 = scalar_lea.vmem %s1, %s333
      %s335 = sadd.s32 %s22, 1
      %s336 = sadd.s32 %s22, 2
      %p337 = scmp.lt.s32.totalorder %s21, 1
      %s338 = scalar_select %p337, %s21, 1
      %p339 = scmp.lt.s32.totalorder %s336, 9
      %s340 = scalar_select %p339, %s336, 9
      %s341 = smul.addr %s340, 13
      %s342 = smul.addr %s338, 130
      %s343 = sadd.s32 %s341, %s342
      %s344 = smul.addr %s343, 4
      %s345 = scalar_lea.vmem %s2, %s344
      %s346 = sadd.s32 %s22, 2
      %p347 = scmp.lt.s32.totalorder %s21, 1
      %s348 = scalar_select %p347, %s21, 1
      %p349 = scmp.lt.s32.totalorder %s22, 7
      %s350 = scalar_select %p349, %s22, 7
      %s351 = smul.addr %s350, 10
      %s352 = smul.addr %s348, 80
      %s353 = sadd.s32 %s351, %s352
      %s354 = smul.addr %s353, 4
      %s355 = scalar_lea.vmem %s4, %s354
      %p356 = scmp.lt.s32.totalorder %s21, 1
      %s357 = scalar_select %p356, %s21, 1
      %p358 = scmp.lt.s32.totalorder %s22, 7
      %s359 = scalar_select %p358, %s22, 7
      %s360 = smul.addr %s357, 8
      %s361 = sadd.s32 %s359, %s360
      %s362 = smul.addr %s361, 2
      %s363 = scalar_lea.vmem %s5, %s362
      %v365 = vld [vmem:[%s324] sm:$0xf]
      %v366 = vld [vmem:[%s324 + $0x4] sm:$0xf]
      %v367 = vld [vmem:[%s324 + $0x8] sm:$0xf]
      %v368 = vld [vmem:[%s324 + $0xc] sm:$0xf]
      %v369 = vld [vmem:[%s324 + $0x10] sm:$0xf]
      %v370 = vld [vmem:[%s324 + $0x14] sm:$0xf]
      %v371 = vld [vmem:[%s324 + $0x18] sm:$0xf]
      %v372 = vld [vmem:[%s324 + $0x1c] sm:$0xf]
      %v373 = vld [vmem:[%s324 + $0x20] sm:$0xf]
      %v374 = vld [vmem:[%s324 + $0x24] sm:$0xf]
      %v375 = vld [vmem:[%s334] sm:$0xf]
      %v376 = vld [vmem:[%s334 + $0x4] sm:$0xf]
      %v377 = vld [vmem:[%s334 + $0x8] sm:$0xf]
      %v378 = vld [vmem:[%s334 + $0xc] sm:$0xf]
      %v379 = vld [vmem:[%s334 + $0x10] sm:$0xf]
      %v380 = vld [vmem:[%s334 + $0x14] sm:$0xf]
      %v381 = vld [vmem:[%s334 + $0x18] sm:$0xf]
      %v382 = vld [vmem:[%s334 + $0x1c] sm:$0xf]
      %v383 = vld [vmem:[%s334 + $0x20] sm:$0xf]
      %v384 = vld [vmem:[%s334 + $0x24] sm:$0xf]
      %v385 = vld [vmem:[%s345] sm:$0xf]
      %v386 = vld [vmem:[%s345 + $0x4] sm:$0xf]
      %v387 = vld [vmem:[%s345 + $0x8] sm:$0xf]
      %v388 = vld [vmem:[%s345 + $0xc] sm:$0xf]
      %v389 = vld [vmem:[%s345 + $0x10] sm:$0xf]
      %v390 = vld [vmem:[%s345 + $0x14] sm:$0xf]
      %v391 = vld [vmem:[%s345 + $0x18] sm:$0xf]
      %v392 = vld [vmem:[%s345 + $0x1c] sm:$0xf]
      %v393 = vld [vmem:[%s345 + $0x20] sm:$0xf]
      %v394 = vld [vmem:[%s345 + $0x24] sm:$0xf]
      %v405 = vunpack.c.l.b16 %v365
      %v406 = vunpack.c.l.b16 %v366
      %v407 = vunpack.c.l.b16 %v367
      %v408 = vunpack.c.l.b16 %v368
      %v409 = vunpack.c.l.b16 %v369
      %v410 = vunpack.c.l.b16 %v370
      %v411 = vunpack.c.l.b16 %v371
      %v412 = vunpack.c.l.b16 %v372
      %v413 = vunpack.c.l.b16 %v373
      %v414 = vunpack.c.l.b16 %v374
      %v415 = vpack.c.b16 %v406, %v405
      %v416 = vpack.c.b16 %v408, %v407
      %v417 = vpack.c.b16 %v410, %v409
      %v418 = vpack.c.b16 %v412, %v411
      %v419 = vpack.c.b16 %v414, %v413
      %v435 = vunpack.c.l.b16 %v375
      %v436 = vunpack.c.l.b16 %v376
      %v437 = vunpack.c.l.b16 %v377
      %v438 = vunpack.c.l.b16 %v378
      %v439 = vunpack.c.l.b16 %v379
      %v440 = vunpack.c.l.b16 %v380
      %v441 = vunpack.c.l.b16 %v381
      %v442 = vunpack.c.l.b16 %v382
      %v443 = vunpack.c.l.b16 %v383
      %v444 = vunpack.c.l.b16 %v384
      %v445 = vpack.c.b16 %v436, %v435
      %v446 = vpack.c.b16 %v438, %v437
      %v447 = vpack.c.b16 %v440, %v439
      %v448 = vpack.c.b16 %v442, %v441
      %v449 = vpack.c.b16 %v444, %v443
      %v465 = vunpack.c.l.b16 %v385
      %v466 = vunpack.c.l.b16 %v386
      %v467 = vunpack.c.l.b16 %v387
      %v468 = vunpack.c.l.b16 %v388
      %v469 = vunpack.c.l.b16 %v389
      %v470 = vunpack.c.l.b16 %v390
      %v471 = vunpack.c.l.b16 %v391
      %v472 = vunpack.c.l.b16 %v392
      %v473 = vunpack.c.l.b16 %v393
      %v474 = vunpack.c.l.b16 %v394
      %v475 = vpack.c.b16 %v466, %v465
      %v476 = vpack.c.b16 %v468, %v467
      %v477 = vpack.c.b16 %v470, %v469
      %v478 = vpack.c.b16 %v472, %v471
      %v479 = vpack.c.b16 %v474, %v473
      %v485 = vld [vmem:[%s3] sm:$0xf]
      %v486 = vld [vmem:[%s3 + $0x4] sm:$0xf]
      %v487 = vld [vmem:[%s3 + $0x8] sm:$0xf]
      %v488 = vld [vmem:[%s3 + $0xc] sm:$0xf]
      %v489 = vld [vmem:[%s3 + $0x10] sm:$0xf]
      %v490 = vld [vmem:[%s3 + $0x14] sm:$0xf]
      %v491 = vld [vmem:[%s3 + $0x18] sm:$0xf]
      %v492 = vld [vmem:[%s3 + $0x1c] sm:$0xf]
      %v493 = vld [vmem:[%s3 + $0x20] sm:$0xf]
      %v494 = vld [vmem:[%s3 + $0x24] sm:$0xf]
      %v495 = vld [vmem:[%s3 + $0x28] sm:$0xf]
      %v496 = vld [vmem:[%s3 + $0x2c] sm:$0xf]
      %v497 = vld [vmem:[%s3 + $0x30] sm:$0xf]
      %v498 = vld [vmem:[%s3 + $0x34] sm:$0xf]
      %v499 = vld [vmem:[%s3 + $0x38] sm:$0xf]
      %v500 = vld [vmem:[%s3 + $0x3c] sm:$0xf]
      %v501 = vld [vmem:[%s3 + $0x40] sm:$0xf]
      %v502 = vld [vmem:[%s3 + $0x44] sm:$0xf]
      %v503 = vld [vmem:[%s3 + $0x48] sm:$0xf]
      %v504 = vld [vmem:[%s3 + $0x4c] sm:$0xf]
      %v505 = vld [vmem:[%s3 + $0x50] sm:$0xf]
      %v506 = vld [vmem:[%s3 + $0x54] sm:$0xf]
      %v507 = vld [vmem:[%s3 + $0x58] sm:$0xf]
      %v508 = vld [vmem:[%s3 + $0x5c] sm:$0xf]
      %v509 = vld [vmem:[%s3 + $0x60] sm:$0xf]
      %v510 = vld [vmem:[%s3 + $0x64] sm:$0xf]
      %v511 = vld [vmem:[%s3 + $0x68] sm:$0xf]
      %v512 = vld [vmem:[%s3 + $0x6c] sm:$0xf]
      %v513 = vld [vmem:[%s3 + $0x70] sm:$0xf]
      %v514 = vld [vmem:[%s3 + $0x74] sm:$0xf]
      %v515 = vld [vmem:[%s3 + $0x78] sm:$0xf]
      %v516 = vld [vmem:[%s3 + $0x7c] sm:$0xf]
      %v517 = vld [vmem:[%s3 + $0x80] sm:$0xf]
      %v518 = vld [vmem:[%s3 + $0x84] sm:$0xf]
      %v519 = vld [vmem:[%s3 + $0x88] sm:$0xf]
      %v520 = vld [vmem:[%s3 + $0x8c] sm:$0xf]
      %v521 = vld [vmem:[%s3 + $0x90] sm:$0xf]
      %v522 = vld [vmem:[%s3 + $0x94] sm:$0xf]
      %v523 = vld [vmem:[%s3 + $0x98] sm:$0xf]
      %v524 = vld [vmem:[%s3 + $0x9c] sm:$0xf]
      %v525 = vld [vmem:[%s3 + $0xa0] sm:$0xf]
      %v526 = vld [vmem:[%s3 + $0xa4] sm:$0xf]
      %v527 = vld [vmem:[%s3 + $0xa8] sm:$0xf]
      %v528 = vld [vmem:[%s3 + $0xac] sm:$0xf]
      %v529 = vld [vmem:[%s3 + $0xb0] sm:$0xf]
      %v530 = vld [vmem:[%s3 + $0xb4] sm:$0xf]
      %v531 = vld [vmem:[%s3 + $0xb8] sm:$0xf]
      %v532 = vld [vmem:[%s3 + $0xbc] sm:$0xf]
      %v533 = vld [vmem:[%s324 + $0x28] sm:$0x1]
      %v534 = vld [vmem:[%s334 + $0x28] sm:$0x1]
      %v535 = vld [vmem:[%s345 + $0x28] sm:$0x1]
      %v537 = vunpack.c.l.b16 %v533
      %v538 = vpack.c.b16 %v537, %v537
      %v540 = vunpack.c.l.b16 %v534
      %v541 = vpack.c.b16 %v540, %v540
      %v543 = vunpack.c.l.b16 %v535
      %v544 = vpack.c.b16 %v543, %v543
      %s545 = scalar_lea.vmem %s3, 192
      %v546 = vld [vmem:[%s545] sm:$0xf]
      %v547 = vld [vmem:[%s545 + $0x4] sm:$0xf]
      %v548 = vld [vmem:[%s545 + $0x8] sm:$0xf]
      %v549 = vld [vmem:[%s545 + $0xc] sm:$0xf]
      %v550 = vld [vmem:[%s545 + $0x10] sm:$0xf]
      %v551 = vld [vmem:[%s545 + $0x14] sm:$0xf]
      %v552 = vld [vmem:[%s545 + $0x18] sm:$0xf]
      %v553 = vld [vmem:[%s545 + $0x1c] sm:$0xf]
      %v554 = vld [vmem:[%s545 + $0x20] sm:$0xf]
      %v555 = vld [vmem:[%s545 + $0x24] sm:$0xf]
      %v556 = vld [vmem:[%s545 + $0x28] sm:$0xf]
      %v557 = vld [vmem:[%s545 + $0x2c] sm:$0xf]
      %v558 = vld [vmem:[%s545 + $0x30] sm:$0xf]
      %v559 = vld [vmem:[%s545 + $0x34] sm:$0xf]
      %v560 = vld [vmem:[%s545 + $0x38] sm:$0xf]
      %v561 = vld [vmem:[%s545 + $0x3c] sm:$0xf]
      %v562 = vld [vmem:[%s545 + $0x40] sm:$0xf]
      %v563 = vld [vmem:[%s545 + $0x44] sm:$0xf]
      %v564 = vld [vmem:[%s545 + $0x48] sm:$0xf]
      %v565 = vld [vmem:[%s545 + $0x4c] sm:$0xf]
      %v566 = vld [vmem:[%s545 + $0x50] sm:$0xf]
      %v567 = vld [vmem:[%s545 + $0x54] sm:$0xf]
      %v568 = vld [vmem:[%s545 + $0x58] sm:$0xf]
      %v569 = vld [vmem:[%s545 + $0x5c] sm:$0xf]
      %v570 = vld [vmem:[%s545 + $0x60] sm:$0xf]
      %v571 = vld [vmem:[%s545 + $0x64] sm:$0xf]
      %v572 = vld [vmem:[%s545 + $0x68] sm:$0xf]
      %v573 = vld [vmem:[%s545 + $0x6c] sm:$0xf]
      %v574 = vld [vmem:[%s545 + $0x70] sm:$0xf]
      %v575 = vld [vmem:[%s545 + $0x74] sm:$0xf]
      %v576 = vld [vmem:[%s545 + $0x78] sm:$0xf]
      %v577 = vld [vmem:[%s545 + $0x7c] sm:$0xf]
      %v578 = vld [vmem:[%s545 + $0x80] sm:$0xf]
      %v579 = vld [vmem:[%s545 + $0x84] sm:$0xf]
      %v580 = vld [vmem:[%s545 + $0x88] sm:$0xf]
      %v581 = vld [vmem:[%s545 + $0x8c] sm:$0xf]
      %v582 = vld [vmem:[%s545 + $0x90] sm:$0xf]
      %v583 = vld [vmem:[%s545 + $0x94] sm:$0xf]
      %v584 = vld [vmem:[%s545 + $0x98] sm:$0xf]
      %v585 = vld [vmem:[%s545 + $0x9c] sm:$0xf]
      %v586 = vld [vmem:[%s545 + $0xa0] sm:$0xf]
      %v587 = vld [vmem:[%s545 + $0xa4] sm:$0xf]
      %v588 = vld [vmem:[%s545 + $0xa8] sm:$0xf]
      %v589 = vld [vmem:[%s545 + $0xac] sm:$0xf]
      %v590 = vld [vmem:[%s545 + $0xb0] sm:$0xf]
      %v591 = vld [vmem:[%s545 + $0xb4] sm:$0xf]
      %v592 = vld [vmem:[%s545 + $0xb8] sm:$0xf]
      %v593 = vld [vmem:[%s545 + $0xbc] sm:$0xf]
      %vm594 = vsmask.f32 7424
      %v596 = vshrl.u32 %v415, 16
      %v598 = vshll.u32 %v415, 16
      %v600 = vrot.slane %v598, 1
      %v601 = vor.u32 %v596, %v600
      %v603 = vshll.u32 %v416, 16
      %v605 = vrot.slane %v603, 1
      %v606 = vsel %vm594, %v601, %v605
      %v608 = vshrl.u32 %v445, 16
      %v610 = vshll.u32 %v445, 16
      %v612 = vrot.slane %v610, 1
      %v613 = vor.u32 %v608, %v612
      %v615 = vshll.u32 %v446, 16
      %v617 = vrot.slane %v615, 1
      %v618 = vsel %vm594, %v613, %v617
      %v620 = vshrl.u32 %v475, 16
      %v622 = vshll.u32 %v475, 16
      %v624 = vrot.slane %v622, 1
      %v625 = vor.u32 %v620, %v624
      %v627 = vshll.u32 %v476, 16
      %v629 = vrot.slane %v627, 1
      %v630 = vsel %vm594, %v625, %v629
      %v631 = vshrl.u32 %v416, 16
      %v633 = vor.u32 %v631, %v605
      %v635 = vshll.u32 %v417, 16
      %v637 = vrot.slane %v635, 1
      %v638 = vsel %vm594, %v633, %v637
      %v639 = vshrl.u32 %v446, 16
      %v641 = vor.u32 %v639, %v617
      %v643 = vshll.u32 %v447, 16
      %v645 = vrot.slane %v643, 1
      %v646 = vsel %vm594, %v641, %v645
      %v647 = vshrl.u32 %v476, 16
      %v649 = vor.u32 %v647, %v629
      %v651 = vshll.u32 %v477, 16
      %v653 = vrot.slane %v651, 1
      %v654 = vsel %vm594, %v649, %v653
      %v655 = vshrl.u32 %v417, 16
      %v657 = vor.u32 %v655, %v637
      %v659 = vshll.u32 %v418, 16
      %v661 = vrot.slane %v659, 1
      %v662 = vsel %vm594, %v657, %v661
      %v663 = vshrl.u32 %v447, 16
      %v665 = vor.u32 %v663, %v645
      %v667 = vshll.u32 %v448, 16
      %v669 = vrot.slane %v667, 1
      %v670 = vsel %vm594, %v665, %v669
      %v671 = vshrl.u32 %v477, 16
      %v673 = vor.u32 %v671, %v653
      %v675 = vshll.u32 %v478, 16
      %v677 = vrot.slane %v675, 1
      %v678 = vsel %vm594, %v673, %v677
      %v679 = vshrl.u32 %v418, 16
      %v681 = vor.u32 %v679, %v661
      %v683 = vshll.u32 %v419, 16
      %v685 = vrot.slane %v683, 1
      %v686 = vsel %vm594, %v681, %v685
      %v687 = vshrl.u32 %v448, 16
      %v689 = vor.u32 %v687, %v669
      %v691 = vshll.u32 %v449, 16
      %v693 = vrot.slane %v691, 1
      %v694 = vsel %vm594, %v689, %v693
      %v695 = vshrl.u32 %v478, 16
      %v697 = vor.u32 %v695, %v677
      %v699 = vshll.u32 %v479, 16
      %v701 = vrot.slane %v699, 1
      %v702 = vsel %vm594, %v697, %v701
      %v703 = vshrl.u32 %v419, 16
      %v705 = vor.u32 %v703, %v685
      %v707 = vshll.u32 %v538, 16
      %v709 = vrot.slane %v707, 1
      %v710 = vsel %vm594, %v705, %v709
      %v711 = vshrl.u32 %v449, 16
      %v713 = vor.u32 %v711, %v693
      %v715 = vshll.u32 %v541, 16
      %v717 = vrot.slane %v715, 1
      %v718 = vsel %vm594, %v713, %v717
      %v719 = vshrl.u32 %v479, 16
      %v721 = vor.u32 %v719, %v701
      %v723 = vshll.u32 %v544, 16
      %v725 = vrot.slane %v723, 1
      %v726 = vsel %vm594, %v721, %v725
      %v790 = vunpack.c.l.b16 %v546
      %v791 = vunpack.c.l.b16 %v547
      %v792 = vunpack.c.l.b16 %v548
      %v793 = vunpack.c.l.b16 %v549
      %v794 = vunpack.c.l.b16 %v550
      %v795 = vunpack.c.l.b16 %v551
      %v796 = vunpack.c.l.b16 %v552
      %v797 = vunpack.c.l.b16 %v553
      %v798 = vunpack.c.l.b16 %v554
      %v799 = vunpack.c.l.b16 %v555
      %v800 = vunpack.c.l.b16 %v556
      %v801 = vunpack.c.l.b16 %v557
      %v802 = vunpack.c.l.b16 %v558
      %v803 = vunpack.c.l.b16 %v559
      %v804 = vunpack.c.l.b16 %v560
      %v805 = vunpack.c.l.b16 %v561
      %v806 = vunpack.c.l.b16 %v562
      %v807 = vunpack.c.l.b16 %v563
      %v808 = vunpack.c.l.b16 %v564
      %v809 = vunpack.c.l.b16 %v565
      %v810 = vunpack.c.l.b16 %v566
      %v811 = vunpack.c.l.b16 %v567
      %v812 = vunpack.c.l.b16 %v568
      %v813 = vunpack.c.l.b16 %v569
      %v814 = vunpack.c.l.b16 %v570
      %v815 = vunpack.c.l.b16 %v571
      %v816 = vunpack.c.l.b16 %v572
      %v817 = vunpack.c.l.b16 %v573
      %v818 = vunpack.c.l.b16 %v574
      %v819 = vunpack.c.l.b16 %v575
      %v820 = vunpack.c.l.b16 %v576
      %v821 = vunpack.c.l.b16 %v577
      %v822 = vunpack.c.l.b16 %v578
      %v823 = vunpack.c.l.b16 %v579
      %v824 = vunpack.c.l.b16 %v580
      %v825 = vunpack.c.l.b16 %v581
      %v826 = vunpack.c.l.b16 %v582
      %v827 = vunpack.c.l.b16 %v583
      %v828 = vunpack.c.l.b16 %v584
      %v829 = vunpack.c.l.b16 %v585
      %v830 = vunpack.c.l.b16 %v586
      %v831 = vunpack.c.l.b16 %v587
      %v832 = vunpack.c.l.b16 %v588
      %v833 = vunpack.c.l.b16 %v589
      %v834 = vunpack.c.l.b16 %v590
      %v835 = vunpack.c.l.b16 %v591
      %v836 = vunpack.c.l.b16 %v592
      %v837 = vunpack.c.l.b16 %v593
      %v838 = vpack.c.b16 %v791, %v790
      %v839 = vpack.c.b16 %v793, %v792
      %v840 = vpack.c.b16 %v795, %v794
      %v841 = vpack.c.b16 %v797, %v796
      %v842 = vpack.c.b16 %v799, %v798
      %v843 = vpack.c.b16 %v801, %v800
      %v844 = vpack.c.b16 %v803, %v802
      %v845 = vpack.c.b16 %v805, %v804
      %v846 = vpack.c.b16 %v807, %v806
      %v847 = vpack.c.b16 %v809, %v808
      %v848 = vpack.c.b16 %v811, %v810
      %v849 = vpack.c.b16 %v813, %v812
      %v850 = vpack.c.b16 %v815, %v814
      %v851 = vpack.c.b16 %v817, %v816
      %v852 = vpack.c.b16 %v819, %v818
      %v853 = vpack.c.b16 %v821, %v820
      %v854 = vpack.c.b16 %v823, %v822
      %v855 = vpack.c.b16 %v825, %v824
      %v856 = vpack.c.b16 %v827, %v826
      %v857 = vpack.c.b16 %v829, %v828
      %v858 = vpack.c.b16 %v831, %v830
      %v859 = vpack.c.b16 %v833, %v832
      %v860 = vpack.c.b16 %v835, %v834
      %v861 = vpack.c.b16 %v837, %v836
      %886 = vmatprep.subr.bf16.mxu0 0
      %887 = vmatpush1.bf16.msra.mxu0 %v845
      %888 = vmatprep.subr.bf16.mxu0 0
      %889 = vmatpush1.bf16.msra.mxu0 %v844
      %890 = vmatprep.subr.bf16.mxu0 0
      %891 = vmatpush1.bf16.msra.mxu0 %v843
      %892 = vmatprep.subr.bf16.mxu0 0
      %893 = vmatpush1.bf16.msra.mxu0 %v842
      %894 = vmatprep.subr.bf16.mxu0 0
      %895 = vmatpush1.bf16.msra.mxu0 %v841
      %896 = vmatprep.subr.bf16.mxu0 0
      %897 = vmatpush1.bf16.msra.mxu0 %v840
      %898 = vmatprep.subr.bf16.mxu0 0
      %899 = vmatpush1.bf16.msra.mxu0 %v839
      %900 = vmatprep.subr.bf16.mxu0 0
      %901 = vmatpush1.bf16.msra.mxu0 %v838
      %902 = vmatprep.subr.bf16.mxu0 0
      %903 = vmatpush2.bf16.msra.mxu0 %v853
      %904 = vmatprep.subr.bf16.mxu0 0
      %905 = vmatpush2.bf16.msra.mxu0 %v852
      %906 = vmatprep.subr.bf16.mxu0 0
      %907 = vmatpush2.bf16.msra.mxu0 %v851
      %908 = vmatprep.subr.bf16.mxu0 0
      %909 = vmatpush2.bf16.msra.mxu0 %v850
      %910 = vmatprep.subr.bf16.mxu0 0
      %911 = vmatpush2.bf16.msra.mxu0 %v849
      %912 = vmatprep.subr.bf16.mxu0 0
      %913 = vmatpush2.bf16.msra.mxu0 %v848
      %914 = vmatprep.subr.bf16.mxu0 0
      %915 = vmatpush2.bf16.msra.mxu0 %v847
      %916 = vmatprep.subr.bf16.mxu0 0
      %917 = vmatpush2.bf16.msra.mxu0 %v846
      %918 = vmatprep.mubr.bf16.mxu0 %v618
      %919 = vmatmul.mubr.bf16.gmra.mxu0 %v606
      %v920 = vpop.f32.mrf.mxu0
      %v921 = vadd.f32 0.0, %v920
      %v922 = vpop.f32.mrf.mxu0
      %v923 = vpop.f32.mrf.mxu0
      %v924 = vadd.f32 0.0, %v923
      %v925 = vpop.f32.mrf.mxu0
      %926 = vmatprep.mubr.bf16.mxu0 %v646
      %927 = vmatmul.mubr.bf16.gmra.mxu0 %v638
      %v928 = vpop.f32.mrf.mxu0
      %v929 = vadd.f32 0.0, %v928
      %v930 = vpop.f32.mrf.mxu0
      %v931 = vpop.f32.mrf.mxu0
      %v932 = vadd.f32 0.0, %v931
      %v933 = vpop.f32.mrf.mxu0
      %934 = vmatprep.mubr.bf16.mxu0 %v670
      %935 = vmatmul.mubr.bf16.gmra.mxu0 %v662
      %v936 = vpop.f32.mrf.mxu0
      %v937 = vadd.f32 0.0, %v936
      %v938 = vpop.f32.mrf.mxu0
      %v939 = vpop.f32.mrf.mxu0
      %v940 = vadd.f32 0.0, %v939
      %v941 = vpop.f32.mrf.mxu0
      %942 = vmatprep.mubr.bf16.mxu0 %v694
      %943 = vmatmul.mubr.bf16.gmra.mxu0 %v686
      %v944 = vpop.f32.mrf.mxu0
      %v945 = vadd.f32 0.0, %v944
      %v946 = vpop.f32.mrf.mxu0
      %v947 = vpop.f32.mrf.mxu0
      %v948 = vadd.f32 0.0, %v947
      %v949 = vpop.f32.mrf.mxu0
      %950 = vmatprep.mubr.bf16.mxu0 %v718
      %951 = vmatmul.mubr.bf16.gmra.mxu0 %v710
      %v952 = vpop.f32.mrf.mxu0
      %v953 = vadd.f32 0.0, %v952
      %v954 = vpop.f32.mrf.mxu0
      %v955 = vpop.f32.mrf.mxu0
      %v956 = vadd.f32 0.0, %v955
      %v957 = vpop.f32.mrf.mxu0
      %958 = vdwg.mxu0
      %959 = vmatprep.subr.bf16.mxu0 0
      %960 = vmatpush1.bf16.msra.mxu0 %v861
      %961 = vmatprep.subr.bf16.mxu0 0
      %962 = vmatpush1.bf16.msra.mxu0 %v860
      %963 = vmatprep.subr.bf16.mxu0 0
      %964 = vmatpush1.bf16.msra.mxu0 %v859
      %965 = vmatprep.subr.bf16.mxu0 0
      %966 = vmatpush1.bf16.msra.mxu0 %v858
      %967 = vmatprep.subr.bf16.mxu0 0
      %968 = vmatpush1.bf16.msra.mxu0 %v857
      %969 = vmatprep.subr.bf16.mxu0 0
      %970 = vmatpush1.bf16.msra.mxu0 %v856
      %971 = vmatprep.subr.bf16.mxu0 0
      %972 = vmatpush1.bf16.msra.mxu0 %v855
      %973 = vmatprep.subr.bf16.mxu0 0
      %974 = vmatpush1.bf16.msra.mxu0 %v854
      %975 = vmatprep.subr.bf16.mxu0 0
      %976 = vmatpush2.bf16.msra.mxu0 0
      %977 = vmatprep.subr.bf16.mxu0 0
      %978 = vmatpush2.bf16.msra.mxu0 0
      %979 = vmatprep.subr.bf16.mxu0 0
      %980 = vmatpush2.bf16.msra.mxu0 0
      %981 = vmatprep.subr.bf16.mxu0 0
      %982 = vmatpush2.bf16.msra.mxu0 0
      %983 = vmatprep.subr.bf16.mxu0 0
      %984 = vmatpush2.bf16.msra.mxu0 0
      %985 = vmatprep.subr.bf16.mxu0 0
      %986 = vmatpush2.bf16.msra.mxu0 0
      %987 = vmatprep.subr.bf16.mxu0 0
      %988 = vmatpush2.bf16.msra.mxu0 0
      %989 = vmatprep.subr.bf16.mxu0 0
      %990 = vmatpush2.bf16.msra.mxu0 0
      %991 = vmatprep.mubr.bf16.mxu0 0
      %992 = vmatmul.mubr.bf16.gmra.mxu0 %v630
      %v993 = vpop.f32.mrf.mxu0
      %v994 = vadd.f32 %v921, %v993
      %v995 = vpop.f32.mrf.mxu0
      %v996 = vpop.f32.mrf.mxu0
      %v997 = vadd.f32 %v924, %v996
      %v998 = vpop.f32.mrf.mxu0
      %999 = vmatprep.mubr.bf16.mxu0 0
      %1000 = vmatmul.mubr.bf16.gmra.mxu0 %v654
      %v1001 = vpop.f32.mrf.mxu0
      %v1002 = vadd.f32 %v929, %v1001
      %v1003 = vpop.f32.mrf.mxu0
      %v1004 = vpop.f32.mrf.mxu0
      %v1005 = vadd.f32 %v932, %v1004
      %v1006 = vpop.f32.mrf.mxu0
      %1007 = vmatprep.mubr.bf16.mxu0 0
      %1008 = vmatmul.mubr.bf16.gmra.mxu0 %v678
      %v1009 = vpop.f32.mrf.mxu0
      %v1010 = vadd.f32 %v937, %v1009
      %v1011 = vpop.f32.mrf.mxu0
      %v1012 = vpop.f32.mrf.mxu0
      %v1013 = vadd.f32 %v940, %v1012
      %v1014 = vpop.f32.mrf.mxu0
      %1015 = vmatprep.mubr.bf16.mxu0 0
      %1016 = vmatmul.mubr.bf16.gmra.mxu0 %v702
      %v1017 = vpop.f32.mrf.mxu0
      %v1018 = vadd.f32 %v945, %v1017
      %v1019 = vpop.f32.mrf.mxu0
      %v1020 = vpop.f32.mrf.mxu0
      %v1021 = vadd.f32 %v948, %v1020
      %v1022 = vpop.f32.mrf.mxu0
      %1023 = vmatprep.mubr.bf16.mxu0 0
      %1024 = vmatmul.mubr.bf16.gmra.mxu0 %v726
      %v1025 = vpop.f32.mrf.mxu0
      %v1026 = vadd.f32 %v953, %v1025
      %v1027 = vpop.f32.mrf.mxu0
      %v1028 = vpop.f32.mrf.mxu0
      %v1029 = vadd.f32 %v956, %v1028
      %v1030 = vpop.f32.mrf.mxu0
      %1031 = vdwg.mxu0
      %v1080 = vunpack.c.l.b16 %v485
      %v1081 = vunpack.c.l.b16 %v486
      %v1082 = vunpack.c.l.b16 %v487
      %v1083 = vunpack.c.l.b16 %v488
      %v1084 = vunpack.c.l.b16 %v489
      %v1085 = vunpack.c.l.b16 %v490
      %v1086 = vunpack.c.l.b16 %v491
      %v1087 = vunpack.c.l.b16 %v492
      %v1088 = vunpack.c.l.b16 %v493
      %v1089 = vunpack.c.l.b16 %v494
      %v1090 = vunpack.c.l.b16 %v495
      %v1091 = vunpack.c.l.b16 %v496
      %v1092 = vunpack.c.l.b16 %v497
      %v1093 = vunpack.c.l.b16 %v498
      %v1094 = vunpack.c.l.b16 %v499
      %v1095 = vunpack.c.l.b16 %v500
      %v1096 = vunpack.c.l.b16 %v501
      %v1097 = vunpack.c.l.b16 %v502
      %v1098 = vunpack.c.l.b16 %v503
      %v1099 = vunpack.c.l.b16 %v504
      %v1100 = vunpack.c.l.b16 %v505
      %v1101 = vunpack.c.l.b16 %v506
      %v1102 = vunpack.c.l.b16 %v507
      %v1103 = vunpack.c.l.b16 %v508
      %v1104 = vunpack.c.l.b16 %v509
      %v1105 = vunpack.c.l.b16 %v510
      %v1106 = vunpack.c.l.b16 %v511
      %v1107 = vunpack.c.l.b16 %v512
      %v1108 = vunpack.c.l.b16 %v513
      %v1109 = vunpack.c.l.b16 %v514
      %v1110 = vunpack.c.l.b16 %v515
      %v1111 = vunpack.c.l.b16 %v516
      %v1112 = vunpack.c.l.b16 %v517
      %v1113 = vunpack.c.l.b16 %v518
      %v1114 = vunpack.c.l.b16 %v519
      %v1115 = vunpack.c.l.b16 %v520
      %v1116 = vunpack.c.l.b16 %v521
      %v1117 = vunpack.c.l.b16 %v522
      %v1118 = vunpack.c.l.b16 %v523
      %v1119 = vunpack.c.l.b16 %v524
      %v1120 = vunpack.c.l.b16 %v525
      %v1121 = vunpack.c.l.b16 %v526
      %v1122 = vunpack.c.l.b16 %v527
      %v1123 = vunpack.c.l.b16 %v528
      %v1124 = vunpack.c.l.b16 %v529
      %v1125 = vunpack.c.l.b16 %v530
      %v1126 = vunpack.c.l.b16 %v531
      %v1127 = vunpack.c.l.b16 %v532
      %v1128 = vpack.c.b16 %v1081, %v1080
      %v1129 = vpack.c.b16 %v1083, %v1082
      %v1130 = vpack.c.b16 %v1085, %v1084
      %v1131 = vpack.c.b16 %v1087, %v1086
      %v1132 = vpack.c.b16 %v1089, %v1088
      %v1133 = vpack.c.b16 %v1091, %v1090
      %v1134 = vpack.c.b16 %v1093, %v1092
      %v1135 = vpack.c.b16 %v1095, %v1094
      %v1136 = vpack.c.b16 %v1097, %v1096
      %v1137 = vpack.c.b16 %v1099, %v1098
      %v1138 = vpack.c.b16 %v1101, %v1100
      %v1139 = vpack.c.b16 %v1103, %v1102
      %v1140 = vpack.c.b16 %v1105, %v1104
      %v1141 = vpack.c.b16 %v1107, %v1106
      %v1142 = vpack.c.b16 %v1109, %v1108
      %v1143 = vpack.c.b16 %v1111, %v1110
      %v1144 = vpack.c.b16 %v1113, %v1112
      %v1145 = vpack.c.b16 %v1115, %v1114
      %v1146 = vpack.c.b16 %v1117, %v1116
      %v1147 = vpack.c.b16 %v1119, %v1118
      %v1148 = vpack.c.b16 %v1121, %v1120
      %v1149 = vpack.c.b16 %v1123, %v1122
      %v1150 = vpack.c.b16 %v1125, %v1124
      %v1151 = vpack.c.b16 %v1127, %v1126
      %1176 = vmatprep.subr.bf16.mxu0 0
      %1177 = vmatpush1.bf16.msra.mxu0 %v1135
      %1178 = vmatprep.subr.bf16.mxu0 0
      %1179 = vmatpush1.bf16.msra.mxu0 %v1134
      %1180 = vmatprep.subr.bf16.mxu0 0
      %1181 = vmatpush1.bf16.msra.mxu0 %v1133
      %1182 = vmatprep.subr.bf16.mxu0 0
      %1183 = vmatpush1.bf16.msra.mxu0 %v1132
      %1184 = vmatprep.subr.bf16.mxu0 0
      %1185 = vmatpush1.bf16.msra.mxu0 %v1131
      %1186 = vmatprep.subr.bf16.mxu0 0
      %1187 = vmatpush1.bf16.msra.mxu0 %v1130
      %1188 = vmatprep.subr.bf16.mxu0 0
      %1189 = vmatpush1.bf16.msra.mxu0 %v1129
      %1190 = vmatprep.subr.bf16.mxu0 0
      %1191 = vmatpush1.bf16.msra.mxu0 %v1128
      %1192 = vmatprep.subr.bf16.mxu0 0
      %1193 = vmatpush2.bf16.msra.mxu0 %v1143
      %1194 = vmatprep.subr.bf16.mxu0 0
      %1195 = vmatpush2.bf16.msra.mxu0 %v1142
      %1196 = vmatprep.subr.bf16.mxu0 0
      %1197 = vmatpush2.bf16.msra.mxu0 %v1141
      %1198 = vmatprep.subr.bf16.mxu0 0
      %1199 = vmatpush2.bf16.msra.mxu0 %v1140
      %1200 = vmatprep.subr.bf16.mxu0 0
      %1201 = vmatpush2.bf16.msra.mxu0 %v1139
      %1202 = vmatprep.subr.bf16.mxu0 0
      %1203 = vmatpush2.bf16.msra.mxu0 %v1138
      %1204 = vmatprep.subr.bf16.mxu0 0
      %1205 = vmatpush2.bf16.msra.mxu0 %v1137
      %1206 = vmatprep.subr.bf16.mxu0 0
      %1207 = vmatpush2.bf16.msra.mxu0 %v1136
      %1208 = vmatprep.mubr.bf16.mxu0 %v445
      %1209 = vmatmul.mubr.bf16.gmra.mxu0 %v415
      %v1210 = vpop.f32.mrf.mxu0
      %v1211 = vadd.f32 %v994, %v1210
      %v1212 = vpop.f32.mrf.mxu0
      %v1213 = vpop.f32.mrf.mxu0
      %v1214 = vadd.f32 %v997, %v1213
      %v1215 = vpop.f32.mrf.mxu0
      %1216 = vmatprep.mubr.bf16.mxu0 %v446
      %1217 = vmatmul.mubr.bf16.gmra.mxu0 %v416
      %v1218 = vpop.f32.mrf.mxu0
      %v1219 = vadd.f32 %v1002, %v1218
      %v1220 = vpop.f32.mrf.mxu0
      %v1221 = vpop.f32.mrf.mxu0
      %v1222 = vadd.f32 %v1005, %v1221
      %v1223 = vpop.f32.mrf.mxu0
      %1224 = vmatprep.mubr.bf16.mxu0 %v447
      %1225 = vmatmul.mubr.bf16.gmra.mxu0 %v417
      %v1226 = vpop.f32.mrf.mxu0
      %v1227 = vadd.f32 %v1010, %v1226
      %v1228 = vpop.f32.mrf.mxu0
      %v1229 = vpop.f32.mrf.mxu0
      %v1230 = vadd.f32 %v1013, %v1229
      %v1231 = vpop.f32.mrf.mxu0
      %1232 = vmatprep.mubr.bf16.mxu0 %v448
      %1233 = vmatmul.mubr.bf16.gmra.mxu0 %v418
      %v1234 = vpop.f32.mrf.mxu0
      %v1235 = vadd.f32 %v1018, %v1234
      %v1236 = vpop.f32.mrf.mxu0
      %v1237 = vpop.f32.mrf.mxu0
      %v1238 = vadd.f32 %v1021, %v1237
      %v1239 = vpop.f32.mrf.mxu0
      %1240 = vmatprep.mubr.bf16.mxu0 %v449
      %1241 = vmatmul.mubr.bf16.gmra.mxu0 %v419
      %v1242 = vpop.f32.mrf.mxu0
      %v1243 = vadd.f32 %v1026, %v1242
      %v1244 = vpop.f32.mrf.mxu0
      %v1245 = vpop.f32.mrf.mxu0
      %v1246 = vadd.f32 %v1029, %v1245
      %v1247 = vpop.f32.mrf.mxu0
      %1248 = vdwg.mxu0
      %1249 = vmatprep.subr.bf16.mxu0 0
      %1250 = vmatpush1.bf16.msra.mxu0 %v1151
      %1251 = vmatprep.subr.bf16.mxu0 0
      %1252 = vmatpush1.bf16.msra.mxu0 %v1150
      %1253 = vmatprep.subr.bf16.mxu0 0
      %1254 = vmatpush1.bf16.msra.mxu0 %v1149
      %1255 = vmatprep.subr.bf16.mxu0 0
      %1256 = vmatpush1.bf16.msra.mxu0 %v1148
      %1257 = vmatprep.subr.bf16.mxu0 0
      %1258 = vmatpush1.bf16.msra.mxu0 %v1147
      %1259 = vmatprep.subr.bf16.mxu0 0
      %1260 = vmatpush1.bf16.msra.mxu0 %v1146
      %1261 = vmatprep.subr.bf16.mxu0 0
      %1262 = vmatpush1.bf16.msra.mxu0 %v1145
      %1263 = vmatprep.subr.bf16.mxu0 0
      %1264 = vmatpush1.bf16.msra.mxu0 %v1144
      %1265 = vmatprep.subr.bf16.mxu0 0
      %1266 = vmatpush2.bf16.msra.mxu0 0
      %1267 = vmatprep.subr.bf16.mxu0 0
      %1268 = vmatpush2.bf16.msra.mxu0 0
      %1269 = vmatprep.subr.bf16.mxu0 0
      %1270 = vmatpush2.bf16.msra.mxu0 0
      %1271 = vmatprep.subr.bf16.mxu0 0
      %1272 = vmatpush2.bf16.msra.mxu0 0
      %1273 = vmatprep.subr.bf16.mxu0 0
      %1274 = vmatpush2.bf16.msra.mxu0 0
      %1275 = vmatprep.subr.bf16.mxu0 0
      %1276 = vmatpush2.bf16.msra.mxu0 0
      %1277 = vmatprep.subr.bf16.mxu0 0
      %1278 = vmatpush2.bf16.msra.mxu0 0
      %1279 = vmatprep.subr.bf16.mxu0 0
      %1280 = vmatpush2.bf16.msra.mxu0 0
      %1281 = vmatprep.mubr.bf16.mxu0 0
      %1282 = vmatmul.mubr.bf16.gmra.mxu0 %v475
      %v1283 = vpop.f32.mrf.mxu0
      %v1284 = vadd.f32 %v1211, %v1283
      %v1285 = vpop.f32.mrf.mxu0
      %v1286 = vpop.f32.mrf.mxu0
      %v1287 = vadd.f32 %v1214, %v1286
      %v1288 = vpop.f32.mrf.mxu0
      %1289 = vmatprep.mubr.bf16.mxu0 0
      %1290 = vmatmul.mubr.bf16.gmra.mxu0 %v476
      %v1291 = vpop.f32.mrf.mxu0
      %v1292 = vadd.f32 %v1219, %v1291
      %v1293 = vpop.f32.mrf.mxu0
      %v1294 = vpop.f32.mrf.mxu0
      %v1295 = vadd.f32 %v1222, %v1294
      %v1296 = vpop.f32.mrf.mxu0
      %1297 = vmatprep.mubr.bf16.mxu0 0
      %1298 = vmatmul.mubr.bf16.gmra.mxu0 %v477
      %v1299 = vpop.f32.mrf.mxu0
      %v1300 = vadd.f32 %v1227, %v1299
      %v1301 = vpop.f32.mrf.mxu0
      %v1302 = vpop.f32.mrf.mxu0
      %v1303 = vadd.f32 %v1230, %v1302
      %v1304 = vpop.f32.mrf.mxu0
      %1305 = vmatprep.mubr.bf16.mxu0 0
      %1306 = vmatmul.mubr.bf16.gmra.mxu0 %v478
      %v1307 = vpop.f32.mrf.mxu0
      %v1308 = vadd.f32 %v1235, %v1307
      %v1309 = vpop.f32.mrf.mxu0
      %v1310 = vpop.f32.mrf.mxu0
      %v1311 = vadd.f32 %v1238, %v1310
      %v1312 = vpop.f32.mrf.mxu0
      %1313 = vmatprep.mubr.bf16.mxu0 0
      %1314 = vmatmul.mubr.bf16.gmra.mxu0 %v479
      %v1315 = vpop.f32.mrf.mxu0
      %v1316 = vadd.f32 %v1243, %v1315
      %v1317 = vpop.f32.mrf.mxu0
      %v1318 = vpop.f32.mrf.mxu0
      %v1319 = vadd.f32 %v1246, %v1318
      %v1320 = vpop.f32.mrf.mxu0
      %1321 = vdwg.mxu0
      %v1322 = vld [vmem:[%s324] sm:$0xe]
      %v1323 = vld [vmem:[%s334] sm:$0xe]
      %v1324 = vld [vmem:[%s345] sm:$0xe]
      %v1326 = vunpack.c.l.b16 %v1322
      %v1327 = vpack.c.b16 %v406, %v1326
      %v1329 = vunpack.c.l.b16 %v1323
      %v1330 = vpack.c.b16 %v436, %v1329
      %v1332 = vunpack.c.l.b16 %v1324
      %v1333 = vpack.c.b16 %v466, %v1332
      %s1334 = scalar_lea.vmem %s3, 384
      %v1335 = vld [vmem:[%s1334] sm:$0xf]
      %v1336 = vld [vmem:[%s1334 + $0x4] sm:$0xf]
      %v1337 = vld [vmem:[%s1334 + $0x8] sm:$0xf]
      %v1338 = vld [vmem:[%s1334 + $0xc] sm:$0xf]
      %v1339 = vld [vmem:[%s1334 + $0x10] sm:$0xf]
      %v1340 = vld [vmem:[%s1334 + $0x14] sm:$0xf]
      %v1341 = vld [vmem:[%s1334 + $0x18] sm:$0xf]
      %v1342 = vld [vmem:[%s1334 + $0x1c] sm:$0xf]
      %v1343 = vld [vmem:[%s1334 + $0x20] sm:$0xf]
      %v1344 = vld [vmem:[%s1334 + $0x24] sm:$0xf]
      %v1345 = vld [vmem:[%s1334 + $0x28] sm:$0xf]
      %v1346 = vld [vmem:[%s1334 + $0x2c] sm:$0xf]
      %v1347 = vld [vmem:[%s1334 + $0x30] sm:$0xf]
      %v1348 = vld [vmem:[%s1334 + $0x34] sm:$0xf]
      %v1349 = vld [vmem:[%s1334 + $0x38] sm:$0xf]
      %v1350 = vld [vmem:[%s1334 + $0x3c] sm:$0xf]
      %v1351 = vld [vmem:[%s1334 + $0x40] sm:$0xf]
      %v1352 = vld [vmem:[%s1334 + $0x44] sm:$0xf]
      %v1353 = vld [vmem:[%s1334 + $0x48] sm:$0xf]
      %v1354 = vld [vmem:[%s1334 + $0x4c] sm:$0xf]
      %v1355 = vld [vmem:[%s1334 + $0x50] sm:$0xf]
      %v1356 = vld [vmem:[%s1334 + $0x54] sm:$0xf]
      %v1357 = vld [vmem:[%s1334 + $0x58] sm:$0xf]
      %v1358 = vld [vmem:[%s1334 + $0x5c] sm:$0xf]
      %v1359 = vld [vmem:[%s1334 + $0x60] sm:$0xf]
      %v1360 = vld [vmem:[%s1334 + $0x64] sm:$0xf]
      %v1361 = vld [vmem:[%s1334 + $0x68] sm:$0xf]
      %v1362 = vld [vmem:[%s1334 + $0x6c] sm:$0xf]
      %v1363 = vld [vmem:[%s1334 + $0x70] sm:$0xf]
      %v1364 = vld [vmem:[%s1334 + $0x74] sm:$0xf]
      %v1365 = vld [vmem:[%s1334 + $0x78] sm:$0xf]
      %v1366 = vld [vmem:[%s1334 + $0x7c] sm:$0xf]
      %v1367 = vld [vmem:[%s1334 + $0x80] sm:$0xf]
      %v1368 = vld [vmem:[%s1334 + $0x84] sm:$0xf]
      %v1369 = vld [vmem:[%s1334 + $0x88] sm:$0xf]
      %v1370 = vld [vmem:[%s1334 + $0x8c] sm:$0xf]
      %v1371 = vld [vmem:[%s1334 + $0x90] sm:$0xf]
      %v1372 = vld [vmem:[%s1334 + $0x94] sm:$0xf]
      %v1373 = vld [vmem:[%s1334 + $0x98] sm:$0xf]
      %v1374 = vld [vmem:[%s1334 + $0x9c] sm:$0xf]
      %v1375 = vld [vmem:[%s1334 + $0xa0] sm:$0xf]
      %v1376 = vld [vmem:[%s1334 + $0xa4] sm:$0xf]
      %v1377 = vld [vmem:[%s1334 + $0xa8] sm:$0xf]
      %v1378 = vld [vmem:[%s1334 + $0xac] sm:$0xf]
      %v1379 = vld [vmem:[%s1334 + $0xb0] sm:$0xf]
      %v1380 = vld [vmem:[%s1334 + $0xb4] sm:$0xf]
      %v1381 = vld [vmem:[%s1334 + $0xb8] sm:$0xf]
      %v1382 = vld [vmem:[%s1334 + $0xbc] sm:$0xf]
      %vm1383 = vcmask 1046528
      %v1384 = vrot.slane %v1327, 1
      %v1385 = vrot.slane %v416, 1
      %v1386 = vsel %vm1383, %v1384, %v1385
      %v1387 = vrot.slane %v1330, 1
      %v1388 = vrot.slane %v446, 1
      %v1389 = vsel %vm1383, %v1387, %v1388
      %v1390 = vrot.slane %v1333, 1
      %v1391 = vrot.slane %v476, 1
      %v1392 = vsel %vm1383, %v1390, %v1391
      %v1393 = vrot.slane %v417, 1
      %v1394 = vsel %vm1383, %v1385, %v1393
      %v1395 = vrot.slane %v447, 1
      %v1396 = vsel %vm1383, %v1388, %v1395
      %v1397 = vrot.slane %v477, 1
      %v1398 = vsel %vm1383, %v1391, %v1397
      %v1399 = vrot.slane %v418, 1
      %v1400 = vsel %vm1383, %v1393, %v1399
      %v1401 = vrot.slane %v448, 1
      %v1402 = vsel %vm1383, %v1395, %v1401
      %v1403 = vrot.slane %v478, 1
      %v1404 = vsel %vm1383, %v1397, %v1403
      %v1405 = vrot.slane %v419, 1
      %v1406 = vsel %vm1383, %v1399, %v1405
      %v1407 = vrot.slane %v449, 1
      %v1408 = vsel %vm1383, %v1401, %v1407
      %v1409 = vrot.slane %v479, 1
      %v1410 = vsel %vm1383, %v1403, %v1409
      %v1411 = vrot.slane %v538, 1
      %v1412 = vsel %vm1383, %v1405, %v1411
      %v1413 = vrot.slane %v541, 1
      %v1414 = vsel %vm1383, %v1407, %v1413
      %v1415 = vrot.slane %v544, 1
      %v1416 = vsel %vm1383, %v1409, %v1415
      %v1480 = vunpack.c.l.b16 %v1335
      %v1481 = vunpack.c.l.b16 %v1336
      %v1482 = vunpack.c.l.b16 %v1337
      %v1483 = vunpack.c.l.b16 %v1338
      %v1484 = vunpack.c.l.b16 %v1339
      %v1485 = vunpack.c.l.b16 %v1340
      %v1486 = vunpack.c.l.b16 %v1341
      %v1487 = vunpack.c.l.b16 %v1342
      %v1488 = vunpack.c.l.b16 %v1343
      %v1489 = vunpack.c.l.b16 %v1344
      %v1490 = vunpack.c.l.b16 %v1345
      %v1491 = vunpack.c.l.b16 %v1346
      %v1492 = vunpack.c.l.b16 %v1347
      %v1493 = vunpack.c.l.b16 %v1348
      %v1494 = vunpack.c.l.b16 %v1349
      %v1495 = vunpack.c.l.b16 %v1350
      %v1496 = vunpack.c.l.b16 %v1351
      %v1497 = vunpack.c.l.b16 %v1352
      %v1498 = vunpack.c.l.b16 %v1353
      %v1499 = vunpack.c.l.b16 %v1354
      %v1500 = vunpack.c.l.b16 %v1355
      %v1501 = vunpack.c.l.b16 %v1356
      %v1502 = vunpack.c.l.b16 %v1357
      %v1503 = vunpack.c.l.b16 %v1358
      %v1504 = vunpack.c.l.b16 %v1359
      %v1505 = vunpack.c.l.b16 %v1360
      %v1506 = vunpack.c.l.b16 %v1361
      %v1507 = vunpack.c.l.b16 %v1362
      %v1508 = vunpack.c.l.b16 %v1363
      %v1509 = vunpack.c.l.b16 %v1364
      %v1510 = vunpack.c.l.b16 %v1365
      %v1511 = vunpack.c.l.b16 %v1366
      %v1512 = vunpack.c.l.b16 %v1367
      %v1513 = vunpack.c.l.b16 %v1368
      %v1514 = vunpack.c.l.b16 %v1369
      %v1515 = vunpack.c.l.b16 %v1370
      %v1516 = vunpack.c.l.b16 %v1371
      %v1517 = vunpack.c.l.b16 %v1372
      %v1518 = vunpack.c.l.b16 %v1373
      %v1519 = vunpack.c.l.b16 %v1374
      %v1520 = vunpack.c.l.b16 %v1375
      %v1521 = vunpack.c.l.b16 %v1376
      %v1522 = vunpack.c.l.b16 %v1377
      %v1523 = vunpack.c.l.b16 %v1378
      %v1524 = vunpack.c.l.b16 %v1379
      %v1525 = vunpack.c.l.b16 %v1380
      %v1526 = vunpack.c.l.b16 %v1381
      %v1527 = vunpack.c.l.b16 %v1382
      %v1528 = vpack.c.b16 %v1481, %v1480
      %v1529 = vpack.c.b16 %v1483, %v1482
      %v1530 = vpack.c.b16 %v1485, %v1484
      %v1531 = vpack.c.b16 %v1487, %v1486
      %v1532 = vpack.c.b16 %v1489, %v1488
      %v1533 = vpack.c.b16 %v1491, %v1490
      %v1534 = vpack.c.b16 %v1493, %v1492
      %v1535 = vpack.c.b16 %v1495, %v1494
      %v1536 = vpack.c.b16 %v1497, %v1496
      %v1537 = vpack.c.b16 %v1499, %v1498
      %v1538 = vpack.c.b16 %v1501, %v1500
      %v1539 = vpack.c.b16 %v1503, %v1502
      %v1540 = vpack.c.b16 %v1505, %v1504
      %v1541 = vpack.c.b16 %v1507, %v1506
      %v1542 = vpack.c.b16 %v1509, %v1508
      %v1543 = vpack.c.b16 %v1511, %v1510
      %v1544 = vpack.c.b16 %v1513, %v1512
      %v1545 = vpack.c.b16 %v1515, %v1514
      %v1546 = vpack.c.b16 %v1517, %v1516
      %v1547 = vpack.c.b16 %v1519, %v1518
      %v1548 = vpack.c.b16 %v1521, %v1520
      %v1549 = vpack.c.b16 %v1523, %v1522
      %v1550 = vpack.c.b16 %v1525, %v1524
      %v1551 = vpack.c.b16 %v1527, %v1526
      %1576 = vmatprep.subr.bf16.mxu0 0
      %1577 = vmatpush1.bf16.msra.mxu0 %v1535
      %1578 = vmatprep.subr.bf16.mxu0 0
      %1579 = vmatpush1.bf16.msra.mxu0 %v1534
      %1580 = vmatprep.subr.bf16.mxu0 0
      %1581 = vmatpush1.bf16.msra.mxu0 %v1533
      %1582 = vmatprep.subr.bf16.mxu0 0
      %1583 = vmatpush1.bf16.msra.mxu0 %v1532
      %1584 = vmatprep.subr.bf16.mxu0 0
      %1585 = vmatpush1.bf16.msra.mxu0 %v1531
      %1586 = vmatprep.subr.bf16.mxu0 0
      %1587 = vmatpush1.bf16.msra.mxu0 %v1530
      %1588 = vmatprep.subr.bf16.mxu0 0
      %1589 = vmatpush1.bf16.msra.mxu0 %v1529
      %1590 = vmatprep.subr.bf16.mxu0 0
      %1591 = vmatpush1.bf16.msra.mxu0 %v1528
      %1592 = vmatprep.subr.bf16.mxu0 0
      %1593 = vmatpush2.bf16.msra.mxu0 %v1543
      %1594 = vmatprep.subr.bf16.mxu0 0
      %1595 = vmatpush2.bf16.msra.mxu0 %v1542
      %1596 = vmatprep.subr.bf16.mxu0 0
      %1597 = vmatpush2.bf16.msra.mxu0 %v1541
      %1598 = vmatprep.subr.bf16.mxu0 0
      %1599 = vmatpush2.bf16.msra.mxu0 %v1540
      %1600 = vmatprep.subr.bf16.mxu0 0
      %1601 = vmatpush2.bf16.msra.mxu0 %v1539
      %1602 = vmatprep.subr.bf16.mxu0 0
      %1603 = vmatpush2.bf16.msra.mxu0 %v1538
      %1604 = vmatprep.subr.bf16.mxu0 0
      %1605 = vmatpush2.bf16.msra.mxu0 %v1537
      %1606 = vmatprep.subr.bf16.mxu0 0
      %1607 = vmatpush2.bf16.msra.mxu0 %v1536
      %1608 = vmatprep.mubr.bf16.mxu0 %v1389
      %1609 = vmatmul.mubr.bf16.gmra.mxu0 %v1386
      %v1610 = vpop.f32.mrf.mxu0
      %v1611 = vadd.f32 0.0, %v1610
      %v1612 = vpop.f32.mrf.mxu0
      %v1613 = vpop.f32.mrf.mxu0
      %v1614 = vadd.f32 0.0, %v1613
      %v1615 = vpop.f32.mrf.mxu0
      %1616 = vmatprep.mubr.bf16.mxu0 %v1396
      %1617 = vmatmul.mubr.bf16.gmra.mxu0 %v1394
      %v1618 = vpop.f32.mrf.mxu0
      %v1619 = vadd.f32 0.0, %v1618
      %v1620 = vpop.f32.mrf.mxu0
      %v1621 = vpop.f32.mrf.mxu0
      %v1622 = vadd.f32 0.0, %v1621
      %v1623 = vpop.f32.mrf.mxu0
      %1624 = vmatprep.mubr.bf16.mxu0 %v1402
      %1625 = vmatmul.mubr.bf16.gmra.mxu0 %v1400
      %v1626 = vpop.f32.mrf.mxu0
      %v1627 = vadd.f32 0.0, %v1626
      %v1628 = vpop.f32.mrf.mxu0
      %v1629 = vpop.f32.mrf.mxu0
      %v1630 = vadd.f32 0.0, %v1629
      %v1631 = vpop.f32.mrf.mxu0
      %1632 = vmatprep.mubr.bf16.mxu0 %v1408
      %1633 = vmatmul.mubr.bf16.gmra.mxu0 %v1406
      %v1634 = vpop.f32.mrf.mxu0
      %v1635 = vadd.f32 0.0, %v1634
      %v1636 = vpop.f32.mrf.mxu0
      %v1637 = vpop.f32.mrf.mxu0
      %v1638 = vadd.f32 0.0, %v1637
      %v1639 = vpop.f32.mrf.mxu0
      %1640 = vmatprep.mubr.bf16.mxu0 %v1414
      %1641 = vmatmul.mubr.bf16.gmra.mxu0 %v1412
      %v1642 = vpop.f32.mrf.mxu0
      %v1643 = vadd.f32 0.0, %v1642
      %v1644 = vpop.f32.mrf.mxu0
      %v1645 = vpop.f32.mrf.mxu0
      %v1646 = vadd.f32 0.0, %v1645
      %v1647 = vpop.f32.mrf.mxu0
      %1648 = vdwg.mxu0
      %1649 = vmatprep.subr.bf16.mxu0 0
      %1650 = vmatpush1.bf16.msra.mxu0 %v1551
      %1651 = vmatprep.subr.bf16.mxu0 0
      %1652 = vmatpush1.bf16.msra.mxu0 %v1550
      %1653 = vmatprep.subr.bf16.mxu0 0
      %1654 = vmatpush1.bf16.msra.mxu0 %v1549
      %1655 = vmatprep.subr.bf16.mxu0 0
      %1656 = vmatpush1.bf16.msra.mxu0 %v1548
      %1657 = vmatprep.subr.bf16.mxu0 0
      %1658 = vmatpush1.bf16.msra.mxu0 %v1547
      %1659 = vmatprep.subr.bf16.mxu0 0
      %1660 = vmatpush1.bf16.msra.mxu0 %v1546
      %1661 = vmatprep.subr.bf16.mxu0 0
      %1662 = vmatpush1.bf16.msra.mxu0 %v1545
      %1663 = vmatprep.subr.bf16.mxu0 0
      %1664 = vmatpush1.bf16.msra.mxu0 %v1544
      %1665 = vmatprep.subr.bf16.mxu0 0
      %1666 = vmatpush2.bf16.msra.mxu0 0
      %1667 = vmatprep.subr.bf16.mxu0 0
      %1668 = vmatpush2.bf16.msra.mxu0 0
      %1669 = vmatprep.subr.bf16.mxu0 0
      %1670 = vmatpush2.bf16.msra.mxu0 0
      %1671 = vmatprep.subr.bf16.mxu0 0
      %1672 = vmatpush2.bf16.msra.mxu0 0
      %1673 = vmatprep.subr.bf16.mxu0 0
      %1674 = vmatpush2.bf16.msra.mxu0 0
      %1675 = vmatprep.subr.bf16.mxu0 0
      %1676 = vmatpush2.bf16.msra.mxu0 0
      %1677 = vmatprep.subr.bf16.mxu0 0
      %1678 = vmatpush2.bf16.msra.mxu0 0
      %1679 = vmatprep.subr.bf16.mxu0 0
      %1680 = vmatpush2.bf16.msra.mxu0 0
      %1681 = vmatprep.mubr.bf16.mxu0 0
      %1682 = vmatmul.mubr.bf16.gmra.mxu0 %v1392
      %v1683 = vpop.f32.mrf.mxu0
      %v1684 = vadd.f32 %v1611, %v1683
      %v1685 = vpop.f32.mrf.mxu0
      %v1686 = vpop.f32.mrf.mxu0
      %v1687 = vadd.f32 %v1614, %v1686
      %v1688 = vpop.f32.mrf.mxu0
      %1689 = vmatprep.mubr.bf16.mxu0 0
      %1690 = vmatmul.mubr.bf16.gmra.mxu0 %v1398
      %v1691 = vpop.f32.mrf.mxu0
      %v1692 = vadd.f32 %v1619, %v1691
      %v1693 = vpop.f32.mrf.mxu0
      %v1694 = vpop.f32.mrf.mxu0
      %v1695 = vadd.f32 %v1622, %v1694
      %v1696 = vpop.f32.mrf.mxu0
      %1697 = vmatprep.mubr.bf16.mxu0 0
      %1698 = vmatmul.mubr.bf16.gmra.mxu0 %v1404
      %v1699 = vpop.f32.mrf.mxu0
      %v1700 = vadd.f32 %v1627, %v1699
      %v1701 = vpop.f32.mrf.mxu0
      %v1702 = vpop.f32.mrf.mxu0
      %v1703 = vadd.f32 %v1630, %v1702
      %v1704 = vpop.f32.mrf.mxu0
      %1705 = vmatprep.mubr.bf16.mxu0 0
      %1706 = vmatmul.mubr.bf16.gmra.mxu0 %v1410
      %v1707 = vpop.f32.mrf.mxu0
      %v1708 = vadd.f32 %v1635, %v1707
      %v1709 = vpop.f32.mrf.mxu0
      %v1710 = vpop.f32.mrf.mxu0
      %v1711 = vadd.f32 %v1638, %v1710
      %v1712 = vpop.f32.mrf.mxu0
      %1713 = vmatprep.mubr.bf16.mxu0 0
      %1714 = vmatmul.mubr.bf16.gmra.mxu0 %v1416
      %v1715 = vpop.f32.mrf.mxu0
      %v1716 = vadd.f32 %v1643, %v1715
      %v1717 = vpop.f32.mrf.mxu0
      %v1718 = vpop.f32.mrf.mxu0
      %v1719 = vadd.f32 %v1646, %v1718
      %v1720 = vpop.f32.mrf.mxu0
      %1721 = vdwg.mxu0
      %v1722 = vadd.f32 %v1284, %v1684
      %v1723 = vadd.f32 %v1287, %v1687
      %v1724 = vadd.f32 %v1292, %v1692
      %v1725 = vadd.f32 %v1295, %v1695
      %v1726 = vadd.f32 %v1300, %v1700
      %v1727 = vadd.f32 %v1303, %v1703
      %v1728 = vadd.f32 %v1308, %v1708
      %v1729 = vadd.f32 %v1311, %v1711
      %v1730 = vadd.f32 %v1316, %v1716
      %v1731 = vadd.f32 %v1319, %v1719
      %v1732 = vld [vmem:[%s324 + $0x4] sm:$0xe]
      %v1733 = vld [vmem:[%s324 + $0x8] sm:$0xf]
      %v1734 = vld [vmem:[%s324 + $0xc] sm:$0xf]
      %v1735 = vld [vmem:[%s324 + $0x10] sm:$0xf]
      %v1736 = vld [vmem:[%s324 + $0x14] sm:$0xf]
      %v1737 = vld [vmem:[%s324 + $0x18] sm:$0xf]
      %v1738 = vld [vmem:[%s324 + $0x1c] sm:$0xf]
      %v1739 = vld [vmem:[%s324 + $0x20] sm:$0xf]
      %v1740 = vld [vmem:[%s324 + $0x24] sm:$0xf]
      %v1741 = vld [vmem:[%s324 + $0x28] sm:$0xf]
      %v1742 = vld [vmem:[%s324 + $0x2c] sm:$0x1]
      %v1743 = vld [vmem:[%s334 + $0x4] sm:$0xe]
      %v1744 = vld [vmem:[%s334 + $0x8] sm:$0xf]
      %v1745 = vld [vmem:[%s334 + $0xc] sm:$0xf]
      %v1746 = vld [vmem:[%s334 + $0x10] sm:$0xf]
      %v1747 = vld [vmem:[%s334 + $0x14] sm:$0xf]
      %v1748 = vld [vmem:[%s334 + $0x18] sm:$0xf]
      %v1749 = vld [vmem:[%s334 + $0x1c] sm:$0xf]
      %v1750 = vld [vmem:[%s334 + $0x20] sm:$0xf]
      %v1751 = vld [vmem:[%s334 + $0x24] sm:$0xf]
      %v1752 = vld [vmem:[%s334 + $0x28] sm:$0xf]
      %v1753 = vld [vmem:[%s334 + $0x2c] sm:$0x1]
      %v1754 = vld [vmem:[%s345 + $0x4] sm:$0xe]
      %v1755 = vld [vmem:[%s345 + $0x8] sm:$0xf]
      %v1756 = vld [vmem:[%s345 + $0xc] sm:$0xf]
      %v1757 = vld [vmem:[%s345 + $0x10] sm:$0xf]
      %v1758 = vld [vmem:[%s345 + $0x14] sm:$0xf]
      %v1759 = vld [vmem:[%s345 + $0x18] sm:$0xf]
      %v1760 = vld [vmem:[%s345 + $0x1c] sm:$0xf]
      %v1761 = vld [vmem:[%s345 + $0x20] sm:$0xf]
      %v1762 = vld [vmem:[%s345 + $0x24] sm:$0xf]
      %v1763 = vld [vmem:[%s345 + $0x28] sm:$0xf]
      %v1764 = vld [vmem:[%s345 + $0x2c] sm:$0x1]
      %v1776 = vunpack.c.l.b16 %v1732
      %v1777 = vunpack.c.l.b16 %v1733
      %v1778 = vunpack.c.l.b16 %v1734
      %v1779 = vunpack.c.l.b16 %v1735
      %v1780 = vunpack.c.l.b16 %v1736
      %v1781 = vunpack.c.l.b16 %v1737
      %v1782 = vunpack.c.l.b16 %v1738
      %v1783 = vunpack.c.l.b16 %v1739
      %v1784 = vunpack.c.l.b16 %v1740
      %v1785 = vunpack.c.l.b16 %v1741
      %v1786 = vunpack.c.l.b16 %v1742
      %v1787 = vpack.c.b16 %v1777, %v1776
      %v1788 = vpack.c.b16 %v1779, %v1778
      %v1789 = vpack.c.b16 %v1781, %v1780
      %v1790 = vpack.c.b16 %v1783, %v1782
      %v1791 = vpack.c.b16 %v1785, %v1784
      %v1792 = vpack.c.b16 %v1786, %v1786
      %v1804 = vunpack.c.l.b16 %v1743
      %v1805 = vunpack.c.l.b16 %v1744
      %v1806 = vunpack.c.l.b16 %v1745
      %v1807 = vunpack.c.l.b16 %v1746
      %v1808 = vunpack.c.l.b16 %v1747
      %v1809 = vunpack.c.l.b16 %v1748
      %v1810 = vunpack.c.l.b16 %v1749
      %v1811 = vunpack.c.l.b16 %v1750
      %v1812 = vunpack.c.l.b16 %v1751
      %v1813 = vunpack.c.l.b16 %v1752
      %v1814 = vunpack.c.l.b16 %v1753
      %v1815 = vpack.c.b16 %v1805, %v1804
      %v1816 = vpack.c.b16 %v1807, %v1806
      %v1817 = vpack.c.b16 %v1809, %v1808
      %v1818 = vpack.c.b16 %v1811, %v1810
      %v1819 = vpack.c.b16 %v1813, %v1812
      %v1820 = vpack.c.b16 %v1814, %v1814
      %v1832 = vunpack.c.l.b16 %v1754
      %v1833 = vunpack.c.l.b16 %v1755
      %v1834 = vunpack.c.l.b16 %v1756
      %v1835 = vunpack.c.l.b16 %v1757
      %v1836 = vunpack.c.l.b16 %v1758
      %v1837 = vunpack.c.l.b16 %v1759
      %v1838 = vunpack.c.l.b16 %v1760
      %v1839 = vunpack.c.l.b16 %v1761
      %v1840 = vunpack.c.l.b16 %v1762
      %v1841 = vunpack.c.l.b16 %v1763
      %v1842 = vunpack.c.l.b16 %v1764
      %v1843 = vpack.c.b16 %v1833, %v1832
      %v1844 = vpack.c.b16 %v1835, %v1834
      %v1845 = vpack.c.b16 %v1837, %v1836
      %v1846 = vpack.c.b16 %v1839, %v1838
      %v1847 = vpack.c.b16 %v1841, %v1840
      %v1848 = vpack.c.b16 %v1842, %v1842
      %s1849 = scalar_lea.vmem %s3, 576
      %v1850 = vld [vmem:[%s1849] sm:$0xf]
      %v1851 = vld [vmem:[%s1849 + $0x4] sm:$0xf]
      %v1852 = vld [vmem:[%s1849 + $0x8] sm:$0xf]
      %v1853 = vld [vmem:[%s1849 + $0xc] sm:$0xf]
      %v1854 = vld [vmem:[%s1849 + $0x10] sm:$0xf]
      %v1855 = vld [vmem:[%s1849 + $0x14] sm:$0xf]
      %v1856 = vld [vmem:[%s1849 + $0x18] sm:$0xf]
      %v1857 = vld [vmem:[%s1849 + $0x1c] sm:$0xf]
      %v1858 = vld [vmem:[%s1849 + $0x20] sm:$0xf]
      %v1859 = vld [vmem:[%s1849 + $0x24] sm:$0xf]
      %v1860 = vld [vmem:[%s1849 + $0x28] sm:$0xf]
      %v1861 = vld [vmem:[%s1849 + $0x2c] sm:$0xf]
      %v1862 = vld [vmem:[%s1849 + $0x30] sm:$0xf]
      %v1863 = vld [vmem:[%s1849 + $0x34] sm:$0xf]
      %v1864 = vld [vmem:[%s1849 + $0x38] sm:$0xf]
      %v1865 = vld [vmem:[%s1849 + $0x3c] sm:$0xf]
      %v1866 = vld [vmem:[%s1849 + $0x40] sm:$0xf]
      %v1867 = vld [vmem:[%s1849 + $0x44] sm:$0xf]
      %v1868 = vld [vmem:[%s1849 + $0x48] sm:$0xf]
      %v1869 = vld [vmem:[%s1849 + $0x4c] sm:$0xf]
      %v1870 = vld [vmem:[%s1849 + $0x50] sm:$0xf]
      %v1871 = vld [vmem:[%s1849 + $0x54] sm:$0xf]
      %v1872 = vld [vmem:[%s1849 + $0x58] sm:$0xf]
      %v1873 = vld [vmem:[%s1849 + $0x5c] sm:$0xf]
      %v1874 = vld [vmem:[%s1849 + $0x60] sm:$0xf]
      %v1875 = vld [vmem:[%s1849 + $0x64] sm:$0xf]
      %v1876 = vld [vmem:[%s1849 + $0x68] sm:$0xf]
      %v1877 = vld [vmem:[%s1849 + $0x6c] sm:$0xf]
      %v1878 = vld [vmem:[%s1849 + $0x70] sm:$0xf]
      %v1879 = vld [vmem:[%s1849 + $0x74] sm:$0xf]
      %v1880 = vld [vmem:[%s1849 + $0x78] sm:$0xf]
      %v1881 = vld [vmem:[%s1849 + $0x7c] sm:$0xf]
      %v1882 = vld [vmem:[%s1849 + $0x80] sm:$0xf]
      %v1883 = vld [vmem:[%s1849 + $0x84] sm:$0xf]
      %v1884 = vld [vmem:[%s1849 + $0x88] sm:$0xf]
      %v1885 = vld [vmem:[%s1849 + $0x8c] sm:$0xf]
      %v1886 = vld [vmem:[%s1849 + $0x90] sm:$0xf]
      %v1887 = vld [vmem:[%s1849 + $0x94] sm:$0xf]
      %v1888 = vld [vmem:[%s1849 + $0x98] sm:$0xf]
      %v1889 = vld [vmem:[%s1849 + $0x9c] sm:$0xf]
      %v1890 = vld [vmem:[%s1849 + $0xa0] sm:$0xf]
      %v1891 = vld [vmem:[%s1849 + $0xa4] sm:$0xf]
      %v1892 = vld [vmem:[%s1849 + $0xa8] sm:$0xf]
      %v1893 = vld [vmem:[%s1849 + $0xac] sm:$0xf]
      %v1894 = vld [vmem:[%s1849 + $0xb0] sm:$0xf]
      %v1895 = vld [vmem:[%s1849 + $0xb4] sm:$0xf]
      %v1896 = vld [vmem:[%s1849 + $0xb8] sm:$0xf]
      %v1897 = vld [vmem:[%s1849 + $0xbc] sm:$0xf]
      %v1898 = vrot.slane %v1787, 1
      %v1899 = vrot.slane %v1788, 1
      %v1900 = vsel %vm1383, %v1898, %v1899
      %v1901 = vrot.slane %v1815, 1
      %v1902 = vrot.slane %v1816, 1
      %v1903 = vsel %vm1383, %v1901, %v1902
      %v1904 = vrot.slane %v1843, 1
      %v1905 = vrot.slane %v1844, 1
      %v1906 = vsel %vm1383, %v1904, %v1905
      %v1907 = vrot.slane %v1789, 1
      %v1908 = vsel %vm1383, %v1899, %v1907
      %v1909 = vrot.slane %v1817, 1
      %v1910 = vsel %vm1383, %v1902, %v1909
      %v1911 = vrot.slane %v1845, 1
      %v1912 = vsel %vm1383, %v1905, %v1911
      %v1913 = vrot.slane %v1790, 1
      %v1914 = vsel %vm1383, %v1907, %v1913
      %v1915 = vrot.slane %v1818, 1
      %v1916 = vsel %vm1383, %v1909, %v1915
      %v1917 = vrot.slane %v1846, 1
      %v1918 = vsel %vm1383, %v1911, %v1917
      %v1919 = vrot.slane %v1791, 1
      %v1920 = vsel %vm1383, %v1913, %v1919
      %v1921 = vrot.slane %v1819, 1
      %v1922 = vsel %vm1383, %v1915, %v1921
      %v1923 = vrot.slane %v1847, 1
      %v1924 = vsel %vm1383, %v1917, %v1923
      %v1925 = vrot.slane %v1792, 1
      %v1926 = vsel %vm1383, %v1919, %v1925
      %v1927 = vrot.slane %v1820, 1
      %v1928 = vsel %vm1383, %v1921, %v1927
      %v1929 = vrot.slane %v1848, 1
      %v1930 = vsel %vm1383, %v1923, %v1929
      %v1994 = vunpack.c.l.b16 %v1850
      %v1995 = vunpack.c.l.b16 %v1851
      %v1996 = vunpack.c.l.b16 %v1852
      %v1997 = vunpack.c.l.b16 %v1853
      %v1998 = vunpack.c.l.b16 %v1854
      %v1999 = vunpack.c.l.b16 %v1855
      %v2000 = vunpack.c.l.b16 %v1856
      %v2001 = vunpack.c.l.b16 %v1857
      %v2002 = vunpack.c.l.b16 %v1858
      %v2003 = vunpack.c.l.b16 %v1859
      %v2004 = vunpack.c.l.b16 %v1860
      %v2005 = vunpack.c.l.b16 %v1861
      %v2006 = vunpack.c.l.b16 %v1862
      %v2007 = vunpack.c.l.b16 %v1863
      %v2008 = vunpack.c.l.b16 %v1864
      %v2009 = vunpack.c.l.b16 %v1865
      %v2010 = vunpack.c.l.b16 %v1866
      %v2011 = vunpack.c.l.b16 %v1867
      %v2012 = vunpack.c.l.b16 %v1868
      %v2013 = vunpack.c.l.b16 %v1869
      %v2014 = vunpack.c.l.b16 %v1870
      %v2015 = vunpack.c.l.b16 %v1871
      %v2016 = vunpack.c.l.b16 %v1872
      %v2017 = vunpack.c.l.b16 %v1873
      %v2018 = vunpack.c.l.b16 %v1874
      %v2019 = vunpack.c.l.b16 %v1875
      %v2020 = vunpack.c.l.b16 %v1876
      %v2021 = vunpack.c.l.b16 %v1877
      %v2022 = vunpack.c.l.b16 %v1878
      %v2023 = vunpack.c.l.b16 %v1879
      %v2024 = vunpack.c.l.b16 %v1880
      %v2025 = vunpack.c.l.b16 %v1881
      %v2026 = vunpack.c.l.b16 %v1882
      %v2027 = vunpack.c.l.b16 %v1883
      %v2028 = vunpack.c.l.b16 %v1884
      %v2029 = vunpack.c.l.b16 %v1885
      %v2030 = vunpack.c.l.b16 %v1886
      %v2031 = vunpack.c.l.b16 %v1887
      %v2032 = vunpack.c.l.b16 %v1888
      %v2033 = vunpack.c.l.b16 %v1889
      %v2034 = vunpack.c.l.b16 %v1890
      %v2035 = vunpack.c.l.b16 %v1891
      %v2036 = vunpack.c.l.b16 %v1892
      %v2037 = vunpack.c.l.b16 %v1893
      %v2038 = vunpack.c.l.b16 %v1894
      %v2039 = vunpack.c.l.b16 %v1895
      %v2040 = vunpack.c.l.b16 %v1896
      %v2041 = vunpack.c.l.b16 %v1897
      %v2042 = vpack.c.b16 %v1995, %v1994
      %v2043 = vpack.c.b16 %v1997, %v1996
      %v2044 = vpack.c.b16 %v1999, %v1998
      %v2045 = vpack.c.b16 %v2001, %v2000
      %v2046 = vpack.c.b16 %v2003, %v2002
      %v2047 = vpack.c.b16 %v2005, %v2004
      %v2048 = vpack.c.b16 %v2007, %v2006
      %v2049 = vpack.c.b16 %v2009, %v2008
      %v2050 = vpack.c.b16 %v2011, %v2010
      %v2051 = vpack.c.b16 %v2013, %v2012
      %v2052 = vpack.c.b16 %v2015, %v2014
      %v2053 = vpack.c.b16 %v2017, %v2016
      %v2054 = vpack.c.b16 %v2019, %v2018
      %v2055 = vpack.c.b16 %v2021, %v2020
      %v2056 = vpack.c.b16 %v2023, %v2022
      %v2057 = vpack.c.b16 %v2025, %v2024
      %v2058 = vpack.c.b16 %v2027, %v2026
      %v2059 = vpack.c.b16 %v2029, %v2028
      %v2060 = vpack.c.b16 %v2031, %v2030
      %v2061 = vpack.c.b16 %v2033, %v2032
      %v2062 = vpack.c.b16 %v2035, %v2034
      %v2063 = vpack.c.b16 %v2037, %v2036
      %v2064 = vpack.c.b16 %v2039, %v2038
      %v2065 = vpack.c.b16 %v2041, %v2040
      %2090 = vmatprep.subr.bf16.mxu0 0
      %2091 = vmatpush1.bf16.msra.mxu0 %v2049
      %2092 = vmatprep.subr.bf16.mxu0 0
      %2093 = vmatpush1.bf16.msra.mxu0 %v2048
      %2094 = vmatprep.subr.bf16.mxu0 0
      %2095 = vmatpush1.bf16.msra.mxu0 %v2047
      %2096 = vmatprep.subr.bf16.mxu0 0
      %2097 = vmatpush1.bf16.msra.mxu0 %v2046
      %2098 = vmatprep.subr.bf16.mxu0 0
      %2099 = vmatpush1.bf16.msra.mxu0 %v2045
      %2100 = vmatprep.subr.bf16.mxu0 0
      %2101 = vmatpush1.bf16.msra.mxu0 %v2044
      %2102 = vmatprep.subr.bf16.mxu0 0
      %2103 = vmatpush1.bf16.msra.mxu0 %v2043
      %2104 = vmatprep.subr.bf16.mxu0 0
      %2105 = vmatpush1.bf16.msra.mxu0 %v2042
      %2106 = vmatprep.subr.bf16.mxu0 0
      %2107 = vmatpush2.bf16.msra.mxu0 %v2057
      %2108 = vmatprep.subr.bf16.mxu0 0
      %2109 = vmatpush2.bf16.msra.mxu0 %v2056
      %2110 = vmatprep.subr.bf16.mxu0 0
      %2111 = vmatpush2.bf16.msra.mxu0 %v2055
      %2112 = vmatprep.subr.bf16.mxu0 0
      %2113 = vmatpush2.bf16.msra.mxu0 %v2054
      %2114 = vmatprep.subr.bf16.mxu0 0
      %2115 = vmatpush2.bf16.msra.mxu0 %v2053
      %2116 = vmatprep.subr.bf16.mxu0 0
      %2117 = vmatpush2.bf16.msra.mxu0 %v2052
      %2118 = vmatprep.subr.bf16.mxu0 0
      %2119 = vmatpush2.bf16.msra.mxu0 %v2051
      %2120 = vmatprep.subr.bf16.mxu0 0
      %2121 = vmatpush2.bf16.msra.mxu0 %v2050
      %2122 = vmatprep.mubr.bf16.mxu0 %v1903
      %2123 = vmatmul.mubr.bf16.gmra.mxu0 %v1900
      %v2124 = vpop.f32.mrf.mxu0
      %v2125 = vadd.f32 0.0, %v2124
      %v2126 = vpop.f32.mrf.mxu0
      %v2127 = vpop.f32.mrf.mxu0
      %v2128 = vadd.f32 0.0, %v2127
      %v2129 = vpop.f32.mrf.mxu0
      %2130 = vmatprep.mubr.bf16.mxu0 %v1910
      %2131 = vmatmul.mubr.bf16.gmra.mxu0 %v1908
      %v2132 = vpop.f32.mrf.mxu0
      %v2133 = vadd.f32 0.0, %v2132
      %v2134 = vpop.f32.mrf.mxu0
      %v2135 = vpop.f32.mrf.mxu0
      %v2136 = vadd.f32 0.0, %v2135
      %v2137 = vpop.f32.mrf.mxu0
      %2138 = vmatprep.mubr.bf16.mxu0 %v1916
      %2139 = vmatmul.mubr.bf16.gmra.mxu0 %v1914
      %v2140 = vpop.f32.mrf.mxu0
      %v2141 = vadd.f32 0.0, %v2140
      %v2142 = vpop.f32.mrf.mxu0
      %v2143 = vpop.f32.mrf.mxu0
      %v2144 = vadd.f32 0.0, %v2143
      %v2145 = vpop.f32.mrf.mxu0
      %2146 = vmatprep.mubr.bf16.mxu0 %v1922
      %2147 = vmatmul.mubr.bf16.gmra.mxu0 %v1920
      %v2148 = vpop.f32.mrf.mxu0
      %v2149 = vadd.f32 0.0, %v2148
      %v2150 = vpop.f32.mrf.mxu0
      %v2151 = vpop.f32.mrf.mxu0
      %v2152 = vadd.f32 0.0, %v2151
      %v2153 = vpop.f32.mrf.mxu0
      %2154 = vmatprep.mubr.bf16.mxu0 %v1928
      %2155 = vmatmul.mubr.bf16.gmra.mxu0 %v1926
      %v2156 = vpop.f32.mrf.mxu0
      %v2157 = vadd.f32 0.0, %v2156
      %v2158 = vpop.f32.mrf.mxu0
      %v2159 = vpop.f32.mrf.mxu0
      %v2160 = vadd.f32 0.0, %v2159
      %v2161 = vpop.f32.mrf.mxu0
      %2162 = vdwg.mxu0
      %2163 = vmatprep.subr.bf16.mxu0 0
      %2164 = vmatpush1.bf16.msra.mxu0 %v2065
      %2165 = vmatprep.subr.bf16.mxu0 0
      %2166 = vmatpush1.bf16.msra.mxu0 %v2064
      %2167 = vmatprep.subr.bf16.mxu0 0
      %2168 = vmatpush1.bf16.msra.mxu0 %v2063
      %2169 = vmatprep.subr.bf16.mxu0 0
      %2170 = vmatpush1.bf16.msra.mxu0 %v2062
      %2171 = vmatprep.subr.bf16.mxu0 0
      %2172 = vmatpush1.bf16.msra.mxu0 %v2061
      %2173 = vmatprep.subr.bf16.mxu0 0
      %2174 = vmatpush1.bf16.msra.mxu0 %v2060
      %2175 = vmatprep.subr.bf16.mxu0 0
      %2176 = vmatpush1.bf16.msra.mxu0 %v2059
      %2177 = vmatprep.subr.bf16.mxu0 0
      %2178 = vmatpush1.bf16.msra.mxu0 %v2058
      %2179 = vmatprep.subr.bf16.mxu0 0
      %2180 = vmatpush2.bf16.msra.mxu0 0
      %2181 = vmatprep.subr.bf16.mxu0 0
      %2182 = vmatpush2.bf16.msra.mxu0 0
      %2183 = vmatprep.subr.bf16.mxu0 0
      %2184 = vmatpush2.bf16.msra.mxu0 0
      %2185 = vmatprep.subr.bf16.mxu0 0
      %2186 = vmatpush2.bf16.msra.mxu0 0
      %2187 = vmatprep.subr.bf16.mxu0 0
      %2188 = vmatpush2.bf16.msra.mxu0 0
      %2189 = vmatprep.subr.bf16.mxu0 0
      %2190 = vmatpush2.bf16.msra.mxu0 0
      %2191 = vmatprep.subr.bf16.mxu0 0
      %2192 = vmatpush2.bf16.msra.mxu0 0
      %2193 = vmatprep.subr.bf16.mxu0 0
      %2194 = vmatpush2.bf16.msra.mxu0 0
      %2195 = vmatprep.mubr.bf16.mxu0 0
      %2196 = vmatmul.mubr.bf16.gmra.mxu0 %v1906
      %v2197 = vpop.f32.mrf.mxu0
      %v2198 = vadd.f32 %v2125, %v2197
      %v2199 = vpop.f32.mrf.mxu0
      %v2200 = vpop.f32.mrf.mxu0
      %v2201 = vadd.f32 %v2128, %v2200
      %v2202 = vpop.f32.mrf.mxu0
      %2203 = vmatprep.mubr.bf16.mxu0 0
      %2204 = vmatmul.mubr.bf16.gmra.mxu0 %v1912
      %v2205 = vpop.f32.mrf.mxu0
      %v2206 = vadd.f32 %v2133, %v2205
      %v2207 = vpop.f32.mrf.mxu0
      %v2208 = vpop.f32.mrf.mxu0
      %v2209 = vadd.f32 %v2136, %v2208
      %v2210 = vpop.f32.mrf.mxu0
      %2211 = vmatprep.mubr.bf16.mxu0 0
      %2212 = vmatmul.mubr.bf16.gmra.mxu0 %v1918
      %v2213 = vpop.f32.mrf.mxu0
      %v2214 = vadd.f32 %v2141, %v2213
      %v2215 = vpop.f32.mrf.mxu0
      %v2216 = vpop.f32.mrf.mxu0
      %v2217 = vadd.f32 %v2144, %v2216
      %v2218 = vpop.f32.mrf.mxu0
      %2219 = vmatprep.mubr.bf16.mxu0 0
      %2220 = vmatmul.mubr.bf16.gmra.mxu0 %v1924
      %v2221 = vpop.f32.mrf.mxu0
      %v2222 = vadd.f32 %v2149, %v2221
      %v2223 = vpop.f32.mrf.mxu0
      %v2224 = vpop.f32.mrf.mxu0
      %v2225 = vadd.f32 %v2152, %v2224
      %v2226 = vpop.f32.mrf.mxu0
      %2227 = vmatprep.mubr.bf16.mxu0 0
      %2228 = vmatmul.mubr.bf16.gmra.mxu0 %v1930
      %v2229 = vpop.f32.mrf.mxu0
      %v2230 = vadd.f32 %v2157, %v2229
      %v2231 = vpop.f32.mrf.mxu0
      %v2232 = vpop.f32.mrf.mxu0
      %v2233 = vadd.f32 %v2160, %v2232
      %v2234 = vpop.f32.mrf.mxu0
      %2235 = vdwg.mxu0
      %v2236 = vadd.f32 %v1722, %v2198
      %v2237 = vadd.f32 %v1723, %v2201
      %v2238 = vadd.f32 %v1724, %v2206
      %v2239 = vadd.f32 %v1725, %v2209
      %v2240 = vadd.f32 %v1726, %v2214
      %v2241 = vadd.f32 %v1727, %v2217
      %v2242 = vadd.f32 %v1728, %v2222
      %v2243 = vadd.f32 %v1729, %v2225
      %v2244 = vadd.f32 %v1730, %v2230
      %v2245 = vadd.f32 %v1731, %v2233
      %v2246 = vld [vmem:[%s324 + $0x2c] sm:$0x3]
      %v2247 = vld [vmem:[%s334 + $0x2c] sm:$0x3]
      %v2248 = vld [vmem:[%s345 + $0x2c] sm:$0x3]
      %v2250 = vunpack.c.l.b16 %v2246
      %v2251 = vpack.c.b16 %v2250, %v2250
      %v2253 = vunpack.c.l.b16 %v2247
      %v2254 = vpack.c.b16 %v2253, %v2253
      %v2256 = vunpack.c.l.b16 %v2248
      %v2257 = vpack.c.b16 %v2256, %v2256
      %s2258 = scalar_lea.vmem %s3, 768
      %v2259 = vld [vmem:[%s2258] sm:$0xf]
      %v2260 = vld [vmem:[%s2258 + $0x4] sm:$0xf]
      %v2261 = vld [vmem:[%s2258 + $0x8] sm:$0xf]
      %v2262 = vld [vmem:[%s2258 + $0xc] sm:$0xf]
      %v2263 = vld [vmem:[%s2258 + $0x10] sm:$0xf]
      %v2264 = vld [vmem:[%s2258 + $0x14] sm:$0xf]
      %v2265 = vld [vmem:[%s2258 + $0x18] sm:$0xf]
      %v2266 = vld [vmem:[%s2258 + $0x1c] sm:$0xf]
      %v2267 = vld [vmem:[%s2258 + $0x20] sm:$0xf]
      %v2268 = vld [vmem:[%s2258 + $0x24] sm:$0xf]
      %v2269 = vld [vmem:[%s2258 + $0x28] sm:$0xf]
      %v2270 = vld [vmem:[%s2258 + $0x2c] sm:$0xf]
      %v2271 = vld [vmem:[%s2258 + $0x30] sm:$0xf]
      %v2272 = vld [vmem:[%s2258 + $0x34] sm:$0xf]
      %v2273 = vld [vmem:[%s2258 + $0x38] sm:$0xf]
      %v2274 = vld [vmem:[%s2258 + $0x3c] sm:$0xf]
      %v2275 = vld [vmem:[%s2258 + $0x40] sm:$0xf]
      %v2276 = vld [vmem:[%s2258 + $0x44] sm:$0xf]
      %v2277 = vld [vmem:[%s2258 + $0x48] sm:$0xf]
      %v2278 = vld [vmem:[%s2258 + $0x4c] sm:$0xf]
      %v2279 = vld [vmem:[%s2258 + $0x50] sm:$0xf]
      %v2280 = vld [vmem:[%s2258 + $0x54] sm:$0xf]
      %v2281 = vld [vmem:[%s2258 + $0x58] sm:$0xf]
      %v2282 = vld [vmem:[%s2258 + $0x5c] sm:$0xf]
      %v2283 = vld [vmem:[%s2258 + $0x60] sm:$0xf]
      %v2284 = vld [vmem:[%s2258 + $0x64] sm:$0xf]
      %v2285 = vld [vmem:[%s2258 + $0x68] sm:$0xf]
      %v2286 = vld [vmem:[%s2258 + $0x6c] sm:$0xf]
      %v2287 = vld [vmem:[%s2258 + $0x70] sm:$0xf]
      %v2288 = vld [vmem:[%s2258 + $0x74] sm:$0xf]
      %v2289 = vld [vmem:[%s2258 + $0x78] sm:$0xf]
      %v2290 = vld [vmem:[%s2258 + $0x7c] sm:$0xf]
      %v2291 = vld [vmem:[%s2258 + $0x80] sm:$0xf]
      %v2292 = vld [vmem:[%s2258 + $0x84] sm:$0xf]
      %v2293 = vld [vmem:[%s2258 + $0x88] sm:$0xf]
      %v2294 = vld [vmem:[%s2258 + $0x8c] sm:$0xf]
      %v2295 = vld [vmem:[%s2258 + $0x90] sm:$0xf]
      %v2296 = vld [vmem:[%s2258 + $0x94] sm:$0xf]
      %v2297 = vld [vmem:[%s2258 + $0x98] sm:$0xf]
      %v2298 = vld [vmem:[%s2258 + $0x9c] sm:$0xf]
      %v2299 = vld [vmem:[%s2258 + $0xa0] sm:$0xf]
      %v2300 = vld [vmem:[%s2258 + $0xa4] sm:$0xf]
      %v2301 = vld [vmem:[%s2258 + $0xa8] sm:$0xf]
      %v2302 = vld [vmem:[%s2258 + $0xac] sm:$0xf]
      %v2303 = vld [vmem:[%s2258 + $0xb0] sm:$0xf]
      %v2304 = vld [vmem:[%s2258 + $0xb4] sm:$0xf]
      %v2305 = vld [vmem:[%s2258 + $0xb8] sm:$0xf]
      %v2306 = vld [vmem:[%s2258 + $0xbc] sm:$0xf]
      %vm2307 = vsmask.f32 6400
      %v2309 = vshrl.u32 %v1787, 16
      %v2311 = vrot.slane %v2309, 1
      %v2312 = vshll.u32 %v1787, 16
      %v2314 = vrot.slane %v2312, 2
      %v2315 = vor.u32 %v2311, %v2314
      %v2317 = vshrl.u32 %v1788, 16
      %v2319 = vrot.slane %v2317, 1
      %v2320 = vshll.u32 %v1788, 16
      %v2322 = vrot.slane %v2320, 2
      %v2323 = vor.u32 %v2319, %v2322
      %v2324 = vsel %vm2307, %v2315, %v2323
      %v2326 = vshrl.u32 %v1815, 16
      %v2328 = vrot.slane %v2326, 1
      %v2329 = vshll.u32 %v1815, 16
      %v2331 = vrot.slane %v2329, 2
      %v2332 = vor.u32 %v2328, %v2331
      %v2334 = vshrl.u32 %v1816, 16
      %v2336 = vrot.slane %v2334, 1
      %v2337 = vshll.u32 %v1816, 16
      %v2339 = vrot.slane %v2337, 2
      %v2340 = vor.u32 %v2336, %v2339
      %v2341 = vsel %vm2307, %v2332, %v2340
      %v2343 = vshrl.u32 %v1843, 16
      %v2345 = vrot.slane %v2343, 1
      %v2346 = vshll.u32 %v1843, 16
      %v2348 = vrot.slane %v2346, 2
      %v2349 = vor.u32 %v2345, %v2348
      %v2351 = vshrl.u32 %v1844, 16
      %v2353 = vrot.slane %v2351, 1
      %v2354 = vshll.u32 %v1844, 16
      %v2356 = vrot.slane %v2354, 2
      %v2357 = vor.u32 %v2353, %v2356
      %v2358 = vsel %vm2307, %v2349, %v2357
      %v2360 = vshrl.u32 %v1789, 16
      %v2362 = vrot.slane %v2360, 1
      %v2363 = vshll.u32 %v1789, 16
      %v2365 = vrot.slane %v2363, 2
      %v2366 = vor.u32 %v2362, %v2365
      %v2367 = vsel %vm2307, %v2323, %v2366
      %v2369 = vshrl.u32 %v1817, 16
      %v2371 = vrot.slane %v2369, 1
      %v2372 = vshll.u32 %v1817, 16
      %v2374 = vrot.slane %v2372, 2
      %v2375 = vor.u32 %v2371, %v2374
      %v2376 = vsel %vm2307, %v2340, %v2375
      %v2378 = vshrl.u32 %v1845, 16
      %v2380 = vrot.slane %v2378, 1
      %v2381 = vshll.u32 %v1845, 16
      %v2383 = vrot.slane %v2381, 2
      %v2384 = vor.u32 %v2380, %v2383
      %v2385 = vsel %vm2307, %v2357, %v2384
      %v2387 = vshrl.u32 %v1790, 16
      %v2389 = vrot.slane %v2387, 1
      %v2390 = vshll.u32 %v1790, 16
      %v2392 = vrot.slane %v2390, 2
      %v2393 = vor.u32 %v2389, %v2392
      %v2394 = vsel %vm2307, %v2366, %v2393
      %v2396 = vshrl.u32 %v1818, 16
      %v2398 = vrot.slane %v2396, 1
      %v2399 = vshll.u32 %v1818, 16
      %v2401 = vrot.slane %v2399, 2
      %v2402 = vor.u32 %v2398, %v2401
      %v2403 = vsel %vm2307, %v2375, %v2402
      %v2405 = vshrl.u32 %v1846, 16
      %v2407 = vrot.slane %v2405, 1
      %v2408 = vshll.u32 %v1846, 16
      %v2410 = vrot.slane %v2408, 2
      %v2411 = vor.u32 %v2407, %v2410
      %v2412 = vsel %vm2307, %v2384, %v2411
      %v2414 = vshrl.u32 %v1791, 16
      %v2416 = vrot.slane %v2414, 1
      %v2417 = vshll.u32 %v1791, 16
      %v2419 = vrot.slane %v2417, 2
      %v2420 = vor.u32 %v2416, %v2419
      %v2421 = vsel %vm2307, %v2393, %v2420
      %v2423 = vshrl.u32 %v1819, 16
      %v2425 = vrot.slane %v2423, 1
      %v2426 = vshll.u32 %v1819, 16
      %v2428 = vrot.slane %v2426, 2
      %v2429 = vor.u32 %v2425, %v2428
      %v2430 = vsel %vm2307, %v2402, %v2429
      %v2432 = vshrl.u32 %v1847, 16
      %v2434 = vrot.slane %v2432, 1
      %v2435 = vshll.u32 %v1847, 16
      %v2437 = vrot.slane %v2435, 2
      %v2438 = vor.u32 %v2434, %v2437
      %v2439 = vsel %vm2307, %v2411, %v2438
      %v2441 = vshrl.u32 %v2251, 16
      %v2443 = vrot.slane %v2441, 1
      %v2444 = vshll.u32 %v2251, 16
      %v2446 = vrot.slane %v2444, 2
      %v2447 = vor.u32 %v2443, %v2446
      %v2448 = vsel %vm2307, %v2420, %v2447
      %v2450 = vshrl.u32 %v2254, 16
      %v2452 = vrot.slane %v2450, 1
      %v2453 = vshll.u32 %v2254, 16
      %v2455 = vrot.slane %v2453, 2
      %v2456 = vor.u32 %v2452, %v2455
      %v2457 = vsel %vm2307, %v2429, %v2456
      %v2459 = vshrl.u32 %v2257, 16
      %v2461 = vrot.slane %v2459, 1
      %v2462 = vshll.u32 %v2257, 16
      %v2464 = vrot.slane %v2462, 2
      %v2465 = vor.u32 %v2461, %v2464
      %v2466 = vsel %vm2307, %v2438, %v2465
      %v2530 = vunpack.c.l.b16 %v2259
      %v2531 = vunpack.c.l.b16 %v2260
      %v2532 = vunpack.c.l.b16 %v2261
      %v2533 = vunpack.c.l.b16 %v2262
      %v2534 = vunpack.c.l.b16 %v2263
      %v2535 = vunpack.c.l.b16 %v2264
      %v2536 = vunpack.c.l.b16 %v2265
      %v2537 = vunpack.c.l.b16 %v2266
      %v2538 = vunpack.c.l.b16 %v2267
      %v2539 = vunpack.c.l.b16 %v2268
      %v2540 = vunpack.c.l.b16 %v2269
      %v2541 = vunpack.c.l.b16 %v2270
      %v2542 = vunpack.c.l.b16 %v2271
      %v2543 = vunpack.c.l.b16 %v2272
      %v2544 = vunpack.c.l.b16 %v2273
      %v2545 = vunpack.c.l.b16 %v2274
      %v2546 = vunpack.c.l.b16 %v2275
      %v2547 = vunpack.c.l.b16 %v2276
      %v2548 = vunpack.c.l.b16 %v2277
      %v2549 = vunpack.c.l.b16 %v2278
      %v2550 = vunpack.c.l.b16 %v2279
      %v2551 = vunpack.c.l.b16 %v2280
      %v2552 = vunpack.c.l.b16 %v2281
      %v2553 = vunpack.c.l.b16 %v2282
      %v2554 = vunpack.c.l.b16 %v2283
      %v2555 = vunpack.c.l.b16 %v2284
      %v2556 = vunpack.c.l.b16 %v2285
      %v2557 = vunpack.c.l.b16 %v2286
      %v2558 = vunpack.c.l.b16 %v2287
      %v2559 = vunpack.c.l.b16 %v2288
      %v2560 = vunpack.c.l.b16 %v2289
      %v2561 = vunpack.c.l.b16 %v2290
      %v2562 = vunpack.c.l.b16 %v2291
      %v2563 = vunpack.c.l.b16 %v2292
      %v2564 = vunpack.c.l.b16 %v2293
      %v2565 = vunpack.c.l.b16 %v2294
      %v2566 = vunpack.c.l.b16 %v2295
      %v2567 = vunpack.c.l.b16 %v2296
      %v2568 = vunpack.c.l.b16 %v2297
      %v2569 = vunpack.c.l.b16 %v2298
      %v2570 = vunpack.c.l.b16 %v2299
      %v2571 = vunpack.c.l.b16 %v2300
      %v2572 = vunpack.c.l.b16 %v2301
      %v2573 = vunpack.c.l.b16 %v2302
      %v2574 = vunpack.c.l.b16 %v2303
      %v2575 = vunpack.c.l.b16 %v2304
      %v2576 = vunpack.c.l.b16 %v2305
      %v2577 = vunpack.c.l.b16 %v2306
      %v2578 = vpack.c.b16 %v2531, %v2530
      %v2579 = vpack.c.b16 %v2533, %v2532
      %v2580 = vpack.c.b16 %v2535, %v2534
      %v2581 = vpack.c.b16 %v2537, %v2536
      %v2582 = vpack.c.b16 %v2539, %v2538
      %v2583 = vpack.c.b16 %v2541, %v2540
      %v2584 = vpack.c.b16 %v2543, %v2542
      %v2585 = vpack.c.b16 %v2545, %v2544
      %v2586 = vpack.c.b16 %v2547, %v2546
      %v2587 = vpack.c.b16 %v2549, %v2548
      %v2588 = vpack.c.b16 %v2551, %v2550
      %v2589 = vpack.c.b16 %v2553, %v2552
      %v2590 = vpack.c.b16 %v2555, %v2554
      %v2591 = vpack.c.b16 %v2557, %v2556
      %v2592 = vpack.c.b16 %v2559, %v2558
      %v2593 = vpack.c.b16 %v2561, %v2560
      %v2594 = vpack.c.b16 %v2563, %v2562
      %v2595 = vpack.c.b16 %v2565, %v2564
      %v2596 = vpack.c.b16 %v2567, %v2566
      %v2597 = vpack.c.b16 %v2569, %v2568
      %v2598 = vpack.c.b16 %v2571, %v2570
      %v2599 = vpack.c.b16 %v2573, %v2572
      %v2600 = vpack.c.b16 %v2575, %v2574
      %v2601 = vpack.c.b16 %v2577, %v2576
      %2626 = vmatprep.subr.bf16.mxu0 0
      %2627 = vmatpush1.bf16.msra.mxu0 %v2585
      %2628 = vmatprep.subr.bf16.mxu0 0
      %2629 = vmatpush1.bf16.msra.mxu0 %v2584
      %2630 = vmatprep.subr.bf16.mxu0 0
      %2631 = vmatpush1.bf16.msra.mxu0 %v2583
      %2632 = vmatprep.subr.bf16.mxu0 0
      %2633 = vmatpush1.bf16.msra.mxu0 %v2582
      %2634 = vmatprep.subr.bf16.mxu0 0
      %2635 = vmatpush1.bf16.msra.mxu0 %v2581
      %2636 = vmatprep.subr.bf16.mxu0 0
      %2637 = vmatpush1.bf16.msra.mxu0 %v2580
      %2638 = vmatprep.subr.bf16.mxu0 0
      %2639 = vmatpush1.bf16.msra.mxu0 %v2579
      %2640 = vmatprep.subr.bf16.mxu0 0
      %2641 = vmatpush1.bf16.msra.mxu0 %v2578
      %2642 = vmatprep.subr.bf16.mxu0 0
      %2643 = vmatpush2.bf16.msra.mxu0 %v2593
      %2644 = vmatprep.subr.bf16.mxu0 0
      %2645 = vmatpush2.bf16.msra.mxu0 %v2592
      %2646 = vmatprep.subr.bf16.mxu0 0
      %2647 = vmatpush2.bf16.msra.mxu0 %v2591
      %2648 = vmatprep.subr.bf16.mxu0 0
      %2649 = vmatpush2.bf16.msra.mxu0 %v2590
      %2650 = vmatprep.subr.bf16.mxu0 0
      %2651 = vmatpush2.bf16.msra.mxu0 %v2589
      %2652 = vmatprep.subr.bf16.mxu0 0
      %2653 = vmatpush2.bf16.msra.mxu0 %v2588
      %2654 = vmatprep.subr.bf16.mxu0 0
      %2655 = vmatpush2.bf16.msra.mxu0 %v2587
      %2656 = vmatprep.subr.bf16.mxu0 0
      %2657 = vmatpush2.bf16.msra.mxu0 %v2586
      %2658 = vmatprep.mubr.bf16.mxu0 %v2341
      %2659 = vmatmul.mubr.bf16.gmra.mxu0 %v2324
      %v2660 = vpop.f32.mrf.mxu0
      %v2661 = vadd.f32 0.0, %v2660
      %v2662 = vpop.f32.mrf.mxu0
      %v2663 = vpop.f32.mrf.mxu0
      %v2664 = vadd.f32 0.0, %v2663
      %v2665 = vpop.f32.mrf.mxu0
      %2666 = vmatprep.mubr.bf16.mxu0 %v2376
      %2667 = vmatmul.mubr.bf16.gmra.mxu0 %v2367
      %v2668 = vpop.f32.mrf.mxu0
      %v2669 = vadd.f32 0.0, %v2668
      %v2670 = vpop.f32.mrf.mxu0
      %v2671 = vpop.f32.mrf.mxu0
      %v2672 = vadd.f32 0.0, %v2671
      %v2673 = vpop.f32.mrf.mxu0
      %2674 = vmatprep.mubr.bf16.mxu0 %v2403
      %2675 = vmatmul.mubr.bf16.gmra.mxu0 %v2394
      %v2676 = vpop.f32.mrf.mxu0
      %v2677 = vadd.f32 0.0, %v2676
      %v2678 = vpop.f32.mrf.mxu0
      %v2679 = vpop.f32.mrf.mxu0
      %v2680 = vadd.f32 0.0, %v2679
      %v2681 = vpop.f32.mrf.mxu0
      %2682 = vmatprep.mubr.bf16.mxu0 %v2430
      %2683 = vmatmul.mubr.bf16.gmra.mxu0 %v2421
      %v2684 = vpop.f32.mrf.mxu0
      %v2685 = vadd.f32 0.0, %v2684
      %v2686 = vpop.f32.mrf.mxu0
      %v2687 = vpop.f32.mrf.mxu0
      %v2688 = vadd.f32 0.0, %v2687
      %v2689 = vpop.f32.mrf.mxu0
      %2690 = vmatprep.mubr.bf16.mxu0 %v2457
      %2691 = vmatmul.mubr.bf16.gmra.mxu0 %v2448
      %v2692 = vpop.f32.mrf.mxu0
      %v2693 = vadd.f32 0.0, %v2692
      %v2694 = vpop.f32.mrf.mxu0
      %v2695 = vpop.f32.mrf.mxu0
      %v2696 = vadd.f32 0.0, %v2695
      %v2697 = vpop.f32.mrf.mxu0
      %2698 = vdwg.mxu0
      %2699 = vmatprep.subr.bf16.mxu0 0
      %2700 = vmatpush1.bf16.msra.mxu0 %v2601
      %2701 = vmatprep.subr.bf16.mxu0 0
      %2702 = vmatpush1.bf16.msra.mxu0 %v2600
      %2703 = vmatprep.subr.bf16.mxu0 0
      %2704 = vmatpush1.bf16.msra.mxu0 %v2599
      %2705 = vmatprep.subr.bf16.mxu0 0
      %2706 = vmatpush1.bf16.msra.mxu0 %v2598
      %2707 = vmatprep.subr.bf16.mxu0 0
      %2708 = vmatpush1.bf16.msra.mxu0 %v2597
      %2709 = vmatprep.subr.bf16.mxu0 0
      %2710 = vmatpush1.bf16.msra.mxu0 %v2596
      %2711 = vmatprep.subr.bf16.mxu0 0
      %2712 = vmatpush1.bf16.msra.mxu0 %v2595
      %2713 = vmatprep.subr.bf16.mxu0 0
      %2714 = vmatpush1.bf16.msra.mxu0 %v2594
      %2715 = vmatprep.subr.bf16.mxu0 0
      %2716 = vmatpush2.bf16.msra.mxu0 0
      %2717 = vmatprep.subr.bf16.mxu0 0
      %2718 = vmatpush2.bf16.msra.mxu0 0
      %2719 = vmatprep.subr.bf16.mxu0 0
      %2720 = vmatpush2.bf16.msra.mxu0 0
      %2721 = vmatprep.subr.bf16.mxu0 0
      %2722 = vmatpush2.bf16.msra.mxu0 0
      %2723 = vmatprep.subr.bf16.mxu0 0
      %2724 = vmatpush2.bf16.msra.mxu0 0
      %2725 = vmatprep.subr.bf16.mxu0 0
      %2726 = vmatpush2.bf16.msra.mxu0 0
      %2727 = vmatprep.subr.bf16.mxu0 0
      %2728 = vmatpush2.bf16.msra.mxu0 0
      %2729 = vmatprep.subr.bf16.mxu0 0
      %2730 = vmatpush2.bf16.msra.mxu0 0
      %2731 = vmatprep.mubr.bf16.mxu0 0
      %2732 = vmatmul.mubr.bf16.gmra.mxu0 %v2358
      %v2733 = vpop.f32.mrf.mxu0
      %v2734 = vadd.f32 %v2661, %v2733
      %v2735 = vpop.f32.mrf.mxu0
      %v2736 = vpop.f32.mrf.mxu0
      %v2737 = vadd.f32 %v2664, %v2736
      %v2738 = vpop.f32.mrf.mxu0
      %2739 = vmatprep.mubr.bf16.mxu0 0
      %2740 = vmatmul.mubr.bf16.gmra.mxu0 %v2385
      %v2741 = vpop.f32.mrf.mxu0
      %v2742 = vadd.f32 %v2669, %v2741
      %v2743 = vpop.f32.mrf.mxu0
      %v2744 = vpop.f32.mrf.mxu0
      %v2745 = vadd.f32 %v2672, %v2744
      %v2746 = vpop.f32.mrf.mxu0
      %2747 = vmatprep.mubr.bf16.mxu0 0
      %2748 = vmatmul.mubr.bf16.gmra.mxu0 %v2412
      %v2749 = vpop.f32.mrf.mxu0
      %v2750 = vadd.f32 %v2677, %v2749
      %v2751 = vpop.f32.mrf.mxu0
      %v2752 = vpop.f32.mrf.mxu0
      %v2753 = vadd.f32 %v2680, %v2752
      %v2754 = vpop.f32.mrf.mxu0
      %2755 = vmatprep.mubr.bf16.mxu0 0
      %2756 = vmatmul.mubr.bf16.gmra.mxu0 %v2439
      %v2757 = vpop.f32.mrf.mxu0
      %v2758 = vadd.f32 %v2685, %v2757
      %v2759 = vpop.f32.mrf.mxu0
      %v2760 = vpop.f32.mrf.mxu0
      %v2761 = vadd.f32 %v2688, %v2760
      %v2762 = vpop.f32.mrf.mxu0
      %2763 = vmatprep.mubr.bf16.mxu0 0
      %2764 = vmatmul.mubr.bf16.gmra.mxu0 %v2466
      %v2765 = vpop.f32.mrf.mxu0
      %v2766 = vadd.f32 %v2693, %v2765
      %v2767 = vpop.f32.mrf.mxu0
      %v2768 = vpop.f32.mrf.mxu0
      %v2769 = vadd.f32 %v2696, %v2768
      %v2770 = vpop.f32.mrf.mxu0
      %2771 = vdwg.mxu0
      %v2772 = vadd.f32 %v2236, %v2734
      %v2773 = vadd.f32 %v2237, %v2737
      %v2774 = vadd.f32 %v2238, %v2742
      %v2775 = vadd.f32 %v2239, %v2745
      %v2776 = vadd.f32 %v2240, %v2750
      %v2777 = vadd.f32 %v2241, %v2753
      %v2778 = vadd.f32 %v2242, %v2758
      %v2779 = vadd.f32 %v2243, %v2761
      %v2780 = vadd.f32 %v2244, %v2766
      %v2781 = vadd.f32 %v2245, %v2769
      %v2782 = vld [vmem:[%s324 + $0x4] sm:$0xc]
      %v2783 = vld [vmem:[%s334 + $0x4] sm:$0xc]
      %v2784 = vld [vmem:[%s345 + $0x4] sm:$0xc]
      %v2786 = vunpack.c.l.b16 %v2782
      %v2787 = vpack.c.b16 %v1777, %v2786
      %v2789 = vunpack.c.l.b16 %v2783
      %v2790 = vpack.c.b16 %v1805, %v2789
      %v2792 = vunpack.c.l.b16 %v2784
      %v2793 = vpack.c.b16 %v1833, %v2792
      %s2794 = scalar_lea.vmem %s3, 960
      %v2795 = vld [vmem:[%s2794] sm:$0xf]
      %v2796 = vld [vmem:[%s2794 + $0x4] sm:$0xf]
      %v2797 = vld [vmem:[%s2794 + $0x8] sm:$0xf]
      %v2798 = vld [vmem:[%s2794 + $0xc] sm:$0xf]
      %v2799 = vld [vmem:[%s2794 + $0x10] sm:$0xf]
      %v2800 = vld [vmem:[%s2794 + $0x14] sm:$0xf]
      %v2801 = vld [vmem:[%s2794 + $0x18] sm:$0xf]
      %v2802 = vld [vmem:[%s2794 + $0x1c] sm:$0xf]
      %v2803 = vld [vmem:[%s2794 + $0x20] sm:$0xf]
      %v2804 = vld [vmem:[%s2794 + $0x24] sm:$0xf]
      %v2805 = vld [vmem:[%s2794 + $0x28] sm:$0xf]
      %v2806 = vld [vmem:[%s2794 + $0x2c] sm:$0xf]
      %v2807 = vld [vmem:[%s2794 + $0x30] sm:$0xf]
      %v2808 = vld [vmem:[%s2794 + $0x34] sm:$0xf]
      %v2809 = vld [vmem:[%s2794 + $0x38] sm:$0xf]
      %v2810 = vld [vmem:[%s2794 + $0x3c] sm:$0xf]
      %v2811 = vld [vmem:[%s2794 + $0x40] sm:$0xf]
      %v2812 = vld [vmem:[%s2794 + $0x44] sm:$0xf]
      %v2813 = vld [vmem:[%s2794 + $0x48] sm:$0xf]
      %v2814 = vld [vmem:[%s2794 + $0x4c] sm:$0xf]
      %v2815 = vld [vmem:[%s2794 + $0x50] sm:$0xf]
      %v2816 = vld [vmem:[%s2794 + $0x54] sm:$0xf]
      %v2817 = vld [vmem:[%s2794 + $0x58] sm:$0xf]
      %v2818 = vld [vmem:[%s2794 + $0x5c] sm:$0xf]
      %v2819 = vld [vmem:[%s2794 + $0x60] sm:$0xf]
      %v2820 = vld [vmem:[%s2794 + $0x64] sm:$0xf]
      %v2821 = vld [vmem:[%s2794 + $0x68] sm:$0xf]
      %v2822 = vld [vmem:[%s2794 + $0x6c] sm:$0xf]
      %v2823 = vld [vmem:[%s2794 + $0x70] sm:$0xf]
      %v2824 = vld [vmem:[%s2794 + $0x74] sm:$0xf]
      %v2825 = vld [vmem:[%s2794 + $0x78] sm:$0xf]
      %v2826 = vld [vmem:[%s2794 + $0x7c] sm:$0xf]
      %v2827 = vld [vmem:[%s2794 + $0x80] sm:$0xf]
      %v2828 = vld [vmem:[%s2794 + $0x84] sm:$0xf]
      %v2829 = vld [vmem:[%s2794 + $0x88] sm:$0xf]
      %v2830 = vld [vmem:[%s2794 + $0x8c] sm:$0xf]
      %v2831 = vld [vmem:[%s2794 + $0x90] sm:$0xf]
      %v2832 = vld [vmem:[%s2794 + $0x94] sm:$0xf]
      %v2833 = vld [vmem:[%s2794 + $0x98] sm:$0xf]
      %v2834 = vld [vmem:[%s2794 + $0x9c] sm:$0xf]
      %v2835 = vld [vmem:[%s2794 + $0xa0] sm:$0xf]
      %v2836 = vld [vmem:[%s2794 + $0xa4] sm:$0xf]
      %v2837 = vld [vmem:[%s2794 + $0xa8] sm:$0xf]
      %v2838 = vld [vmem:[%s2794 + $0xac] sm:$0xf]
      %v2839 = vld [vmem:[%s2794 + $0xb0] sm:$0xf]
      %v2840 = vld [vmem:[%s2794 + $0xb4] sm:$0xf]
      %v2841 = vld [vmem:[%s2794 + $0xb8] sm:$0xf]
      %v2842 = vld [vmem:[%s2794 + $0xbc] sm:$0xf]
      %vm2843 = vcmask 1045504
      %v2844 = vrot.slane %v2787, 2
      %v2845 = vrot.slane %v1788, 2
      %v2846 = vsel %vm2843, %v2844, %v2845
      %v2847 = vrot.slane %v2790, 2
      %v2848 = vrot.slane %v1816, 2
      %v2849 = vsel %vm2843, %v2847, %v2848
      %v2850 = vrot.slane %v2793, 2
      %v2851 = vrot.slane %v1844, 2
      %v2852 = vsel %vm2843, %v2850, %v2851
      %v2853 = vrot.slane %v1789, 2
      %v2854 = vsel %vm2843, %v2845, %v2853
      %v2855 = vrot.slane %v1817, 2
      %v2856 = vsel %vm2843, %v2848, %v2855
      %v2857 = vrot.slane %v1845, 2
      %v2858 = vsel %vm2843, %v2851, %v2857
      %v2859 = vrot.slane %v1790, 2
      %v2860 = vsel %vm2843, %v2853, %v2859
      %v2861 = vrot.slane %v1818, 2
      %v2862 = vsel %vm2843, %v2855, %v2861
      %v2863 = vrot.slane %v1846, 2
      %v2864 = vsel %vm2843, %v2857, %v2863
      %v2865 = vrot.slane %v1791, 2
      %v2866 = vsel %vm2843, %v2859, %v2865
      %v2867 = vrot.slane %v1819, 2
      %v2868 = vsel %vm2843, %v2861, %v2867
      %v2869 = vrot.slane %v1847, 2
      %v2870 = vsel %vm2843, %v2863, %v2869
      %v2871 = vrot.slane %v2251, 2
      %v2872 = vsel %vm2843, %v2865, %v2871
      %v2873 = vrot.slane %v2254, 2
      %v2874 = vsel %vm2843, %v2867, %v2873
      %v2875 = vrot.slane %v2257, 2
      %v2876 = vsel %vm2843, %v2869, %v2875
      %v2940 = vunpack.c.l.b16 %v2795
      %v2941 = vunpack.c.l.b16 %v2796
      %v2942 = vunpack.c.l.b16 %v2797
      %v2943 = vunpack.c.l.b16 %v2798
      %v2944 = vunpack.c.l.b16 %v2799
      %v2945 = vunpack.c.l.b16 %v2800
      %v2946 = vunpack.c.l.b16 %v2801
      %v2947 = vunpack.c.l.b16 %v2802
      %v2948 = vunpack.c.l.b16 %v2803
      %v2949 = vunpack.c.l.b16 %v2804
      %v2950 = vunpack.c.l.b16 %v2805
      %v2951 = vunpack.c.l.b16 %v2806
      %v2952 = vunpack.c.l.b16 %v2807
      %v2953 = vunpack.c.l.b16 %v2808
      %v2954 = vunpack.c.l.b16 %v2809
      %v2955 = vunpack.c.l.b16 %v2810
      %v2956 = vunpack.c.l.b16 %v2811
      %v2957 = vunpack.c.l.b16 %v2812
      %v2958 = vunpack.c.l.b16 %v2813
      %v2959 = vunpack.c.l.b16 %v2814
      %v2960 = vunpack.c.l.b16 %v2815
      %v2961 = vunpack.c.l.b16 %v2816
      %v2962 = vunpack.c.l.b16 %v2817
      %v2963 = vunpack.c.l.b16 %v2818
      %v2964 = vunpack.c.l.b16 %v2819
      %v2965 = vunpack.c.l.b16 %v2820
      %v2966 = vunpack.c.l.b16 %v2821
      %v2967 = vunpack.c.l.b16 %v2822
      %v2968 = vunpack.c.l.b16 %v2823
      %v2969 = vunpack.c.l.b16 %v2824
      %v2970 = vunpack.c.l.b16 %v2825
      %v2971 = vunpack.c.l.b16 %v2826
      %v2972 = vunpack.c.l.b16 %v2827
      %v2973 = vunpack.c.l.b16 %v2828
      %v2974 = vunpack.c.l.b16 %v2829
      %v2975 = vunpack.c.l.b16 %v2830
      %v2976 = vunpack.c.l.b16 %v2831
      %v2977 = vunpack.c.l.b16 %v2832
      %v2978 = vunpack.c.l.b16 %v2833
      %v2979 = vunpack.c.l.b16 %v2834
      %v2980 = vunpack.c.l.b16 %v2835
      %v2981 = vunpack.c.l.b16 %v2836
      %v2982 = vunpack.c.l.b16 %v2837
      %v2983 = vunpack.c.l.b16 %v2838
      %v2984 = vunpack.c.l.b16 %v2839
      %v2985 = vunpack.c.l.b16 %v2840
      %v2986 = vunpack.c.l.b16 %v2841
      %v2987 = vunpack.c.l.b16 %v2842
      %v2988 = vpack.c.b16 %v2941, %v2940
      %v2989 = vpack.c.b16 %v2943, %v2942
      %v2990 = vpack.c.b16 %v2945, %v2944
      %v2991 = vpack.c.b16 %v2947, %v2946
      %v2992 = vpack.c.b16 %v2949, %v2948
      %v2993 = vpack.c.b16 %v2951, %v2950
      %v2994 = vpack.c.b16 %v2953, %v2952
      %v2995 = vpack.c.b16 %v2955, %v2954
      %v2996 = vpack.c.b16 %v2957, %v2956
      %v2997 = vpack.c.b16 %v2959, %v2958
      %v2998 = vpack.c.b16 %v2961, %v2960
      %v2999 = vpack.c.b16 %v2963, %v2962
      %v3000 = vpack.c.b16 %v2965, %v2964
      %v3001 = vpack.c.b16 %v2967, %v2966
      %v3002 = vpack.c.b16 %v2969, %v2968
      %v3003 = vpack.c.b16 %v2971, %v2970
      %v3004 = vpack.c.b16 %v2973, %v2972
      %v3005 = vpack.c.b16 %v2975, %v2974
      %v3006 = vpack.c.b16 %v2977, %v2976
      %v3007 = vpack.c.b16 %v2979, %v2978
      %v3008 = vpack.c.b16 %v2981, %v2980
      %v3009 = vpack.c.b16 %v2983, %v2982
      %v3010 = vpack.c.b16 %v2985, %v2984
      %v3011 = vpack.c.b16 %v2987, %v2986
      %3036 = vmatprep.subr.bf16.mxu0 0
      %3037 = vmatpush1.bf16.msra.mxu0 %v2995
      %3038 = vmatprep.subr.bf16.mxu0 0
      %3039 = vmatpush1.bf16.msra.mxu0 %v2994
      %3040 = vmatprep.subr.bf16.mxu0 0
      %3041 = vmatpush1.bf16.msra.mxu0 %v2993
      %3042 = vmatprep.subr.bf16.mxu0 0
      %3043 = vmatpush1.bf16.msra.mxu0 %v2992
      %3044 = vmatprep.subr.bf16.mxu0 0
      %3045 = vmatpush1.bf16.msra.mxu0 %v2991
      %3046 = vmatprep.subr.bf16.mxu0 0
      %3047 = vmatpush1.bf16.msra.mxu0 %v2990
      %3048 = vmatprep.subr.bf16.mxu0 0
      %3049 = vmatpush1.bf16.msra.mxu0 %v2989
      %3050 = vmatprep.subr.bf16.mxu0 0
      %3051 = vmatpush1.bf16.msra.mxu0 %v2988
      %3052 = vmatprep.subr.bf16.mxu0 0
      %3053 = vmatpush2.bf16.msra.mxu0 %v3003
      %3054 = vmatprep.subr.bf16.mxu0 0
      %3055 = vmatpush2.bf16.msra.mxu0 %v3002
      %3056 = vmatprep.subr.bf16.mxu0 0
      %3057 = vmatpush2.bf16.msra.mxu0 %v3001
      %3058 = vmatprep.subr.bf16.mxu0 0
      %3059 = vmatpush2.bf16.msra.mxu0 %v3000
      %3060 = vmatprep.subr.bf16.mxu0 0
      %3061 = vmatpush2.bf16.msra.mxu0 %v2999
      %3062 = vmatprep.subr.bf16.mxu0 0
      %3063 = vmatpush2.bf16.msra.mxu0 %v2998
      %3064 = vmatprep.subr.bf16.mxu0 0
      %3065 = vmatpush2.bf16.msra.mxu0 %v2997
      %3066 = vmatprep.subr.bf16.mxu0 0
      %3067 = vmatpush2.bf16.msra.mxu0 %v2996
      %3068 = vmatprep.mubr.bf16.mxu0 %v2849
      %3069 = vmatmul.mubr.bf16.gmra.mxu0 %v2846
      %v3070 = vpop.f32.mrf.mxu0
      %v3071 = vadd.f32 0.0, %v3070
      %v3072 = vpop.f32.mrf.mxu0
      %v3073 = vpop.f32.mrf.mxu0
      %v3074 = vadd.f32 0.0, %v3073
      %v3075 = vpop.f32.mrf.mxu0
      %3076 = vmatprep.mubr.bf16.mxu0 %v2856
      %3077 = vmatmul.mubr.bf16.gmra.mxu0 %v2854
      %v3078 = vpop.f32.mrf.mxu0
      %v3079 = vadd.f32 0.0, %v3078
      %v3080 = vpop.f32.mrf.mxu0
      %v3081 = vpop.f32.mrf.mxu0
      %v3082 = vadd.f32 0.0, %v3081
      %v3083 = vpop.f32.mrf.mxu0
      %3084 = vmatprep.mubr.bf16.mxu0 %v2862
      %3085 = vmatmul.mubr.bf16.gmra.mxu0 %v2860
      %v3086 = vpop.f32.mrf.mxu0
      %v3087 = vadd.f32 0.0, %v3086
      %v3088 = vpop.f32.mrf.mxu0
      %v3089 = vpop.f32.mrf.mxu0
      %v3090 = vadd.f32 0.0, %v3089
      %v3091 = vpop.f32.mrf.mxu0
      %3092 = vmatprep.mubr.bf16.mxu0 %v2868
      %3093 = vmatmul.mubr.bf16.gmra.mxu0 %v2866
      %v3094 = vpop.f32.mrf.mxu0
      %v3095 = vadd.f32 0.0, %v3094
      %v3096 = vpop.f32.mrf.mxu0
      %v3097 = vpop.f32.mrf.mxu0
      %v3098 = vadd.f32 0.0, %v3097
      %v3099 = vpop.f32.mrf.mxu0
      %3100 = vmatprep.mubr.bf16.mxu0 %v2874
      %3101 = vmatmul.mubr.bf16.gmra.mxu0 %v2872
      %v3102 = vpop.f32.mrf.mxu0
      %v3103 = vadd.f32 0.0, %v3102
      %v3104 = vpop.f32.mrf.mxu0
      %v3105 = vpop.f32.mrf.mxu0
      %v3106 = vadd.f32 0.0, %v3105
      %v3107 = vpop.f32.mrf.mxu0
      %3108 = vdwg.mxu0
      %3109 = vmatprep.subr.bf16.mxu0 0
      %3110 = vmatpush1.bf16.msra.mxu0 %v3011
      %3111 = vmatprep.subr.bf16.mxu0 0
      %3112 = vmatpush1.bf16.msra.mxu0 %v3010
      %3113 = vmatprep.subr.bf16.mxu0 0
      %3114 = vmatpush1.bf16.msra.mxu0 %v3009
      %3115 = vmatprep.subr.bf16.mxu0 0
      %3116 = vmatpush1.bf16.msra.mxu0 %v3008
      %3117 = vmatprep.subr.bf16.mxu0 0
      %3118 = vmatpush1.bf16.msra.mxu0 %v3007
      %3119 = vmatprep.subr.bf16.mxu0 0
      %3120 = vmatpush1.bf16.msra.mxu0 %v3006
      %3121 = vmatprep.subr.bf16.mxu0 0
      %3122 = vmatpush1.bf16.msra.mxu0 %v3005
      %3123 = vmatprep.subr.bf16.mxu0 0
      %3124 = vmatpush1.bf16.msra.mxu0 %v3004
      %3125 = vmatprep.subr.bf16.mxu0 0
      %3126 = vmatpush2.bf16.msra.mxu0 0
      %3127 = vmatprep.subr.bf16.mxu0 0
      %3128 = vmatpush2.bf16.msra.mxu0 0
      %3129 = vmatprep.subr.bf16.mxu0 0
      %3130 = vmatpush2.bf16.msra.mxu0 0
      %3131 = vmatprep.subr.bf16.mxu0 0
      %3132 = vmatpush2.bf16.msra.mxu0 0
      %3133 = vmatprep.subr.bf16.mxu0 0
      %3134 = vmatpush2.bf16.msra.mxu0 0
      %3135 = vmatprep.subr.bf16.mxu0 0
      %3136 = vmatpush2.bf16.msra.mxu0 0
      %3137 = vmatprep.subr.bf16.mxu0 0
      %3138 = vmatpush2.bf16.msra.mxu0 0
      %3139 = vmatprep.subr.bf16.mxu0 0
      %3140 = vmatpush2.bf16.msra.mxu0 0
      %3141 = vmatprep.mubr.bf16.mxu0 0
      %3142 = vmatmul.mubr.bf16.gmra.mxu0 %v2852
      %v3143 = vpop.f32.mrf.mxu0
      %v3144 = vadd.f32 %v3071, %v3143
      %v3145 = vpop.f32.mrf.mxu0
      %v3146 = vpop.f32.mrf.mxu0
      %v3147 = vadd.f32 %v3074, %v3146
      %v3148 = vpop.f32.mrf.mxu0
      %3149 = vmatprep.mubr.bf16.mxu0 0
      %3150 = vmatmul.mubr.bf16.gmra.mxu0 %v2858
      %v3151 = vpop.f32.mrf.mxu0
      %v3152 = vadd.f32 %v3079, %v3151
      %v3153 = vpop.f32.mrf.mxu0
      %v3154 = vpop.f32.mrf.mxu0
      %v3155 = vadd.f32 %v3082, %v3154
      %v3156 = vpop.f32.mrf.mxu0
      %3157 = vmatprep.mubr.bf16.mxu0 0
      %3158 = vmatmul.mubr.bf16.gmra.mxu0 %v2864
      %v3159 = vpop.f32.mrf.mxu0
      %v3160 = vadd.f32 %v3087, %v3159
      %v3161 = vpop.f32.mrf.mxu0
      %v3162 = vpop.f32.mrf.mxu0
      %v3163 = vadd.f32 %v3090, %v3162
      %v3164 = vpop.f32.mrf.mxu0
      %3165 = vmatprep.mubr.bf16.mxu0 0
      %3166 = vmatmul.mubr.bf16.gmra.mxu0 %v2870
      %v3167 = vpop.f32.mrf.mxu0
      %v3168 = vadd.f32 %v3095, %v3167
      %v3169 = vpop.f32.mrf.mxu0
      %v3170 = vpop.f32.mrf.mxu0
      %v3171 = vadd.f32 %v3098, %v3170
      %v3172 = vpop.f32.mrf.mxu0
      %3173 = vmatprep.mubr.bf16.mxu0 0
      %3174 = vmatmul.mubr.bf16.gmra.mxu0 %v2876
      %v3175 = vpop.f32.mrf.mxu0
      %v3176 = vadd.f32 %v3103, %v3175
      %v3177 = vpop.f32.mrf.mxu0
      %v3178 = vpop.f32.mrf.mxu0
      %v3179 = vadd.f32 %v3106, %v3178
      %v3180 = vpop.f32.mrf.mxu0
      %3181 = vdwg.mxu0
      %v3182 = vadd.f32 %v2772, %v3144
      %v3183 = vadd.f32 %v2773, %v3147
      %v3184 = vadd.f32 %v2774, %v3152
      %v3185 = vadd.f32 %v2775, %v3155
      %v3186 = vadd.f32 %v2776, %v3160
      %v3187 = vadd.f32 %v2777, %v3163
      %v3188 = vadd.f32 %v2778, %v3168
      %v3189 = vadd.f32 %v2779, %v3171
      %v3190 = vadd.f32 %v2780, %v3176
      %v3191 = vadd.f32 %v2781, %v3179
      %v3192 = vld [vmem:[%s324 + $0x8] sm:$0xc]
      %v3193 = vld [vmem:[%s324 + $0xc] sm:$0xf]
      %v3194 = vld [vmem:[%s324 + $0x10] sm:$0xf]
      %v3195 = vld [vmem:[%s324 + $0x14] sm:$0xf]
      %v3196 = vld [vmem:[%s324 + $0x18] sm:$0xf]
      %v3197 = vld [vmem:[%s324 + $0x1c] sm:$0xf]
      %v3198 = vld [vmem:[%s324 + $0x20] sm:$0xf]
      %v3199 = vld [vmem:[%s324 + $0x24] sm:$0xf]
      %v3200 = vld [vmem:[%s324 + $0x28] sm:$0xf]
      %v3201 = vld [vmem:[%s324 + $0x2c] sm:$0xf]
      %v3202 = vld [vmem:[%s324 + $0x30] sm:$0x3]
      %v3203 = vld [vmem:[%s334 + $0x8] sm:$0xc]
      %v3204 = vld [vmem:[%s334 + $0xc] sm:$0xf]
      %v3205 = vld [vmem:[%s334 + $0x10] sm:$0xf]
      %v3206 = vld [vmem:[%s334 + $0x14] sm:$0xf]
      %v3207 = vld [vmem:[%s334 + $0x18] sm:$0xf]
      %v3208 = vld [vmem:[%s334 + $0x1c] sm:$0xf]
      %v3209 = vld [vmem:[%s334 + $0x20] sm:$0xf]
      %v3210 = vld [vmem:[%s334 + $0x24] sm:$0xf]
      %v3211 = vld [vmem:[%s334 + $0x28] sm:$0xf]
      %v3212 = vld [vmem:[%s334 + $0x2c] sm:$0xf]
      %v3213 = vld [vmem:[%s334 + $0x30] sm:$0x3]
      %v3214 = vld [vmem:[%s345 + $0x8] sm:$0xc]
      %v3215 = vld [vmem:[%s345 + $0xc] sm:$0xf]
      %v3216 = vld [vmem:[%s345 + $0x10] sm:$0xf]
      %v3217 = vld [vmem:[%s345 + $0x14] sm:$0xf]
      %v3218 = vld [vmem:[%s345 + $0x18] sm:$0xf]
      %v3219 = vld [vmem:[%s345 + $0x1c] sm:$0xf]
      %v3220 = vld [vmem:[%s345 + $0x20] sm:$0xf]
      %v3221 = vld [vmem:[%s345 + $0x24] sm:$0xf]
      %v3222 = vld [vmem:[%s345 + $0x28] sm:$0xf]
      %v3223 = vld [vmem:[%s345 + $0x2c] sm:$0xf]
      %v3224 = vld [vmem:[%s345 + $0x30] sm:$0x3]
      %v3236 = vunpack.c.l.b16 %v3192
      %v3237 = vunpack.c.l.b16 %v3193
      %v3238 = vunpack.c.l.b16 %v3194
      %v3239 = vunpack.c.l.b16 %v3195
      %v3240 = vunpack.c.l.b16 %v3196
      %v3241 = vunpack.c.l.b16 %v3197
      %v3242 = vunpack.c.l.b16 %v3198
      %v3243 = vunpack.c.l.b16 %v3199
      %v3244 = vunpack.c.l.b16 %v3200
      %v3245 = vunpack.c.l.b16 %v3201
      %v3246 = vunpack.c.l.b16 %v3202
      %v3247 = vpack.c.b16 %v3237, %v3236
      %v3248 = vpack.c.b16 %v3239, %v3238
      %v3249 = vpack.c.b16 %v3241, %v3240
      %v3250 = vpack.c.b16 %v3243, %v3242
      %v3251 = vpack.c.b16 %v3245, %v3244
      %v3252 = vpack.c.b16 %v3246, %v3246
      %v3264 = vunpack.c.l.b16 %v3203
      %v3265 = vunpack.c.l.b16 %v3204
      %v3266 = vunpack.c.l.b16 %v3205
      %v3267 = vunpack.c.l.b16 %v3206
      %v3268 = vunpack.c.l.b16 %v3207
      %v3269 = vunpack.c.l.b16 %v3208
      %v3270 = vunpack.c.l.b16 %v3209
      %v3271 = vunpack.c.l.b16 %v3210
      %v3272 = vunpack.c.l.b16 %v3211
      %v3273 = vunpack.c.l.b16 %v3212
      %v3274 = vunpack.c.l.b16 %v3213
      %v3275 = vpack.c.b16 %v3265, %v3264
      %v3276 = vpack.c.b16 %v3267, %v3266
      %v3277 = vpack.c.b16 %v3269, %v3268
      %v3278 = vpack.c.b16 %v3271, %v3270
      %v3279 = vpack.c.b16 %v3273, %v3272
      %v3280 = vpack.c.b16 %v3274, %v3274
      %v3292 = vunpack.c.l.b16 %v3214
      %v3293 = vunpack.c.l.b16 %v3215
      %v3294 = vunpack.c.l.b16 %v3216
      %v3295 = vunpack.c.l.b16 %v3217
      %v3296 = vunpack.c.l.b16 %v3218
      %v3297 = vunpack.c.l.b16 %v3219
      %v3298 = vunpack.c.l.b16 %v3220
      %v3299 = vunpack.c.l.b16 %v3221
      %v3300 = vunpack.c.l.b16 %v3222
      %v3301 = vunpack.c.l.b16 %v3223
      %v3302 = vunpack.c.l.b16 %v3224
      %v3303 = vpack.c.b16 %v3293, %v3292
      %v3304 = vpack.c.b16 %v3295, %v3294
      %v3305 = vpack.c.b16 %v3297, %v3296
      %v3306 = vpack.c.b16 %v3299, %v3298
      %v3307 = vpack.c.b16 %v3301, %v3300
      %v3308 = vpack.c.b16 %v3302, %v3302
      %s3309 = scalar_lea.vmem %s3, 1152
      %v3310 = vld [vmem:[%s3309] sm:$0xf]
      %v3311 = vld [vmem:[%s3309 + $0x4] sm:$0xf]
      %v3312 = vld [vmem:[%s3309 + $0x8] sm:$0xf]
      %v3313 = vld [vmem:[%s3309 + $0xc] sm:$0xf]
      %v3314 = vld [vmem:[%s3309 + $0x10] sm:$0xf]
      %v3315 = vld [vmem:[%s3309 + $0x14] sm:$0xf]
      %v3316 = vld [vmem:[%s3309 + $0x18] sm:$0xf]
      %v3317 = vld [vmem:[%s3309 + $0x1c] sm:$0xf]
      %v3318 = vld [vmem:[%s3309 + $0x20] sm:$0xf]
      %v3319 = vld [vmem:[%s3309 + $0x24] sm:$0xf]
      %v3320 = vld [vmem:[%s3309 + $0x28] sm:$0xf]
      %v3321 = vld [vmem:[%s3309 + $0x2c] sm:$0xf]
      %v3322 = vld [vmem:[%s3309 + $0x30] sm:$0xf]
      %v3323 = vld [vmem:[%s3309 + $0x34] sm:$0xf]
      %v3324 = vld [vmem:[%s3309 + $0x38] sm:$0xf]
      %v3325 = vld [vmem:[%s3309 + $0x3c] sm:$0xf]
      %v3326 = vld [vmem:[%s3309 + $0x40] sm:$0xf]
      %v3327 = vld [vmem:[%s3309 + $0x44] sm:$0xf]
      %v3328 = vld [vmem:[%s3309 + $0x48] sm:$0xf]
      %v3329 = vld [vmem:[%s3309 + $0x4c] sm:$0xf]
      %v3330 = vld [vmem:[%s3309 + $0x50] sm:$0xf]
      %v3331 = vld [vmem:[%s3309 + $0x54] sm:$0xf]
      %v3332 = vld [vmem:[%s3309 + $0x58] sm:$0xf]
      %v3333 = vld [vmem:[%s3309 + $0x5c] sm:$0xf]
      %v3334 = vld [vmem:[%s3309 + $0x60] sm:$0xf]
      %v3335 = vld [vmem:[%s3309 + $0x64] sm:$0xf]
      %v3336 = vld [vmem:[%s3309 + $0x68] sm:$0xf]
      %v3337 = vld [vmem:[%s3309 + $0x6c] sm:$0xf]
      %v3338 = vld [vmem:[%s3309 + $0x70] sm:$0xf]
      %v3339 = vld [vmem:[%s3309 + $0x74] sm:$0xf]
      %v3340 = vld [vmem:[%s3309 + $0x78] sm:$0xf]
      %v3341 = vld [vmem:[%s3309 + $0x7c] sm:$0xf]
      %v3342 = vld [vmem:[%s3309 + $0x80] sm:$0xf]
      %v3343 = vld [vmem:[%s3309 + $0x84] sm:$0xf]
      %v3344 = vld [vmem:[%s3309 + $0x88] sm:$0xf]
      %v3345 = vld [vmem:[%s3309 + $0x8c] sm:$0xf]
      %v3346 = vld [vmem:[%s3309 + $0x90] sm:$0xf]
      %v3347 = vld [vmem:[%s3309 + $0x94] sm:$0xf]
      %v3348 = vld [vmem:[%s3309 + $0x98] sm:$0xf]
      %v3349 = vld [vmem:[%s3309 + $0x9c] sm:$0xf]
      %v3350 = vld [vmem:[%s3309 + $0xa0] sm:$0xf]
      %v3351 = vld [vmem:[%s3309 + $0xa4] sm:$0xf]
      %v3352 = vld [vmem:[%s3309 + $0xa8] sm:$0xf]
      %v3353 = vld [vmem:[%s3309 + $0xac] sm:$0xf]
      %v3354 = vld [vmem:[%s3309 + $0xb0] sm:$0xf]
      %v3355 = vld [vmem:[%s3309 + $0xb4] sm:$0xf]
      %v3356 = vld [vmem:[%s3309 + $0xb8] sm:$0xf]
      %v3357 = vld [vmem:[%s3309 + $0xbc] sm:$0xf]
      %v3358 = vrot.slane %v3247, 2
      %v3359 = vrot.slane %v3248, 2
      %v3360 = vsel %vm2843, %v3358, %v3359
      %v3361 = vrot.slane %v3275, 2
      %v3362 = vrot.slane %v3276, 2
      %v3363 = vsel %vm2843, %v3361, %v3362
      %v3364 = vrot.slane %v3303, 2
      %v3365 = vrot.slane %v3304, 2
      %v3366 = vsel %vm2843, %v3364, %v3365
      %v3367 = vrot.slane %v3249, 2
      %v3368 = vsel %vm2843, %v3359, %v3367
      %v3369 = vrot.slane %v3277, 2
      %v3370 = vsel %vm2843, %v3362, %v3369
      %v3371 = vrot.slane %v3305, 2
      %v3372 = vsel %vm2843, %v3365, %v3371
      %v3373 = vrot.slane %v3250, 2
      %v3374 = vsel %vm2843, %v3367, %v3373
      %v3375 = vrot.slane %v3278, 2
      %v3376 = vsel %vm2843, %v3369, %v3375
      %v3377 = vrot.slane %v3306, 2
      %v3378 = vsel %vm2843, %v3371, %v3377
      %v3379 = vrot.slane %v3251, 2
      %v3380 = vsel %vm2843, %v3373, %v3379
      %v3381 = vrot.slane %v3279, 2
      %v3382 = vsel %vm2843, %v3375, %v3381
      %v3383 = vrot.slane %v3307, 2
      %v3384 = vsel %vm2843, %v3377, %v3383
      %v3385 = vrot.slane %v3252, 2
      %v3386 = vsel %vm2843, %v3379, %v3385
      %v3387 = vrot.slane %v3280, 2
      %v3388 = vsel %vm2843, %v3381, %v3387
      %v3389 = vrot.slane %v3308, 2
      %v3390 = vsel %vm2843, %v3383, %v3389
      %v3454 = vunpack.c.l.b16 %v3310
      %v3455 = vunpack.c.l.b16 %v3311
      %v3456 = vunpack.c.l.b16 %v3312
      %v3457 = vunpack.c.l.b16 %v3313
      %v3458 = vunpack.c.l.b16 %v3314
      %v3459 = vunpack.c.l.b16 %v3315
      %v3460 = vunpack.c.l.b16 %v3316
      %v3461 = vunpack.c.l.b16 %v3317
      %v3462 = vunpack.c.l.b16 %v3318
      %v3463 = vunpack.c.l.b16 %v3319
      %v3464 = vunpack.c.l.b16 %v3320
      %v3465 = vunpack.c.l.b16 %v3321
      %v3466 = vunpack.c.l.b16 %v3322
      %v3467 = vunpack.c.l.b16 %v3323
      %v3468 = vunpack.c.l.b16 %v3324
      %v3469 = vunpack.c.l.b16 %v3325
      %v3470 = vunpack.c.l.b16 %v3326
      %v3471 = vunpack.c.l.b16 %v3327
      %v3472 = vunpack.c.l.b16 %v3328
      %v3473 = vunpack.c.l.b16 %v3329
      %v3474 = vunpack.c.l.b16 %v3330
      %v3475 = vunpack.c.l.b16 %v3331
      %v3476 = vunpack.c.l.b16 %v3332
      %v3477 = vunpack.c.l.b16 %v3333
      %v3478 = vunpack.c.l.b16 %v3334
      %v3479 = vunpack.c.l.b16 %v3335
      %v3480 = vunpack.c.l.b16 %v3336
      %v3481 = vunpack.c.l.b16 %v3337
      %v3482 = vunpack.c.l.b16 %v3338
      %v3483 = vunpack.c.l.b16 %v3339
      %v3484 = vunpack.c.l.b16 %v3340
      %v3485 = vunpack.c.l.b16 %v3341
      %v3486 = vunpack.c.l.b16 %v3342
      %v3487 = vunpack.c.l.b16 %v3343
      %v3488 = vunpack.c.l.b16 %v3344
      %v3489 = vunpack.c.l.b16 %v3345
      %v3490 = vunpack.c.l.b16 %v3346
      %v3491 = vunpack.c.l.b16 %v3347
      %v3492 = vunpack.c.l.b16 %v3348
      %v3493 = vunpack.c.l.b16 %v3349
      %v3494 = vunpack.c.l.b16 %v3350
      %v3495 = vunpack.c.l.b16 %v3351
      %v3496 = vunpack.c.l.b16 %v3352
      %v3497 = vunpack.c.l.b16 %v3353
      %v3498 = vunpack.c.l.b16 %v3354
      %v3499 = vunpack.c.l.b16 %v3355
      %v3500 = vunpack.c.l.b16 %v3356
      %v3501 = vunpack.c.l.b16 %v3357
      %v3502 = vpack.c.b16 %v3455, %v3454
      %v3503 = vpack.c.b16 %v3457, %v3456
      %v3504 = vpack.c.b16 %v3459, %v3458
      %v3505 = vpack.c.b16 %v3461, %v3460
      %v3506 = vpack.c.b16 %v3463, %v3462
      %v3507 = vpack.c.b16 %v3465, %v3464
      %v3508 = vpack.c.b16 %v3467, %v3466
      %v3509 = vpack.c.b16 %v3469, %v3468
      %v3510 = vpack.c.b16 %v3471, %v3470
      %v3511 = vpack.c.b16 %v3473, %v3472
      %v3512 = vpack.c.b16 %v3475, %v3474
      %v3513 = vpack.c.b16 %v3477, %v3476
      %v3514 = vpack.c.b16 %v3479, %v3478
      %v3515 = vpack.c.b16 %v3481, %v3480
      %v3516 = vpack.c.b16 %v3483, %v3482
      %v3517 = vpack.c.b16 %v3485, %v3484
      %v3518 = vpack.c.b16 %v3487, %v3486
      %v3519 = vpack.c.b16 %v3489, %v3488
      %v3520 = vpack.c.b16 %v3491, %v3490
      %v3521 = vpack.c.b16 %v3493, %v3492
      %v3522 = vpack.c.b16 %v3495, %v3494
      %v3523 = vpack.c.b16 %v3497, %v3496
      %v3524 = vpack.c.b16 %v3499, %v3498
      %v3525 = vpack.c.b16 %v3501, %v3500
      %3550 = vmatprep.subr.bf16.mxu0 0
      %3551 = vmatpush1.bf16.msra.mxu0 %v3509
      %3552 = vmatprep.subr.bf16.mxu0 0
      %3553 = vmatpush1.bf16.msra.mxu0 %v3508
      %3554 = vmatprep.subr.bf16.mxu0 0
      %3555 = vmatpush1.bf16.msra.mxu0 %v3507
      %3556 = vmatprep.subr.bf16.mxu0 0
      %3557 = vmatpush1.bf16.msra.mxu0 %v3506
      %3558 = vmatprep.subr.bf16.mxu0 0
      %3559 = vmatpush1.bf16.msra.mxu0 %v3505
      %3560 = vmatprep.subr.bf16.mxu0 0
      %3561 = vmatpush1.bf16.msra.mxu0 %v3504
      %3562 = vmatprep.subr.bf16.mxu0 0
      %3563 = vmatpush1.bf16.msra.mxu0 %v3503
      %3564 = vmatprep.subr.bf16.mxu0 0
      %3565 = vmatpush1.bf16.msra.mxu0 %v3502
      %3566 = vmatprep.subr.bf16.mxu0 0
      %3567 = vmatpush2.bf16.msra.mxu0 %v3517
      %3568 = vmatprep.subr.bf16.mxu0 0
      %3569 = vmatpush2.bf16.msra.mxu0 %v3516
      %3570 = vmatprep.subr.bf16.mxu0 0
      %3571 = vmatpush2.bf16.msra.mxu0 %v3515
      %3572 = vmatprep.subr.bf16.mxu0 0
      %3573 = vmatpush2.bf16.msra.mxu0 %v3514
      %3574 = vmatprep.subr.bf16.mxu0 0
      %3575 = vmatpush2.bf16.msra.mxu0 %v3513
      %3576 = vmatprep.subr.bf16.mxu0 0
      %3577 = vmatpush2.bf16.msra.mxu0 %v3512
      %3578 = vmatprep.subr.bf16.mxu0 0
      %3579 = vmatpush2.bf16.msra.mxu0 %v3511
      %3580 = vmatprep.subr.bf16.mxu0 0
      %3581 = vmatpush2.bf16.msra.mxu0 %v3510
      %3582 = vmatprep.mubr.bf16.mxu0 %v3363
      %3583 = vmatmul.mubr.bf16.gmra.mxu0 %v3360
      %v3584 = vpop.f32.mrf.mxu0
      %v3585 = vadd.f32 0.0, %v3584
      %v3586 = vpop.f32.mrf.mxu0
      %v3587 = vpop.f32.mrf.mxu0
      %v3588 = vadd.f32 0.0, %v3587
      %v3589 = vpop.f32.mrf.mxu0
      %3590 = vmatprep.mubr.bf16.mxu0 %v3370
      %3591 = vmatmul.mubr.bf16.gmra.mxu0 %v3368
      %v3592 = vpop.f32.mrf.mxu0
      %v3593 = vadd.f32 0.0, %v3592
      %v3594 = vpop.f32.mrf.mxu0
      %v3595 = vpop.f32.mrf.mxu0
      %v3596 = vadd.f32 0.0, %v3595
      %v3597 = vpop.f32.mrf.mxu0
      %3598 = vmatprep.mubr.bf16.mxu0 %v3376
      %3599 = vmatmul.mubr.bf16.gmra.mxu0 %v3374
      %v3600 = vpop.f32.mrf.mxu0
      %v3601 = vadd.f32 0.0, %v3600
      %v3602 = vpop.f32.mrf.mxu0
      %v3603 = vpop.f32.mrf.mxu0
      %v3604 = vadd.f32 0.0, %v3603
      %v3605 = vpop.f32.mrf.mxu0
      %3606 = vmatprep.mubr.bf16.mxu0 %v3382
      %3607 = vmatmul.mubr.bf16.gmra.mxu0 %v3380
      %v3608 = vpop.f32.mrf.mxu0
      %v3609 = vadd.f32 0.0, %v3608
      %v3610 = vpop.f32.mrf.mxu0
      %v3611 = vpop.f32.mrf.mxu0
      %v3612 = vadd.f32 0.0, %v3611
      %v3613 = vpop.f32.mrf.mxu0
      %3614 = vmatprep.mubr.bf16.mxu0 %v3388
      %3615 = vmatmul.mubr.bf16.gmra.mxu0 %v3386
      %v3616 = vpop.f32.mrf.mxu0
      %v3617 = vadd.f32 0.0, %v3616
      %v3618 = vpop.f32.mrf.mxu0
      %v3619 = vpop.f32.mrf.mxu0
      %v3620 = vadd.f32 0.0, %v3619
      %v3621 = vpop.f32.mrf.mxu0
      %3622 = vdwg.mxu0
      %3623 = vmatprep.subr.bf16.mxu0 0
      %3624 = vmatpush1.bf16.msra.mxu0 %v3525
      %3625 = vmatprep.subr.bf16.mxu0 0
      %3626 = vmatpush1.bf16.msra.mxu0 %v3524
      %3627 = vmatprep.subr.bf16.mxu0 0
      %3628 = vmatpush1.bf16.msra.mxu0 %v3523
      %3629 = vmatprep.subr.bf16.mxu0 0
      %3630 = vmatpush1.bf16.msra.mxu0 %v3522
      %3631 = vmatprep.subr.bf16.mxu0 0
      %3632 = vmatpush1.bf16.msra.mxu0 %v3521
      %3633 = vmatprep.subr.bf16.mxu0 0
      %3634 = vmatpush1.bf16.msra.mxu0 %v3520
      %3635 = vmatprep.subr.bf16.mxu0 0
      %3636 = vmatpush1.bf16.msra.mxu0 %v3519
      %3637 = vmatprep.subr.bf16.mxu0 0
      %3638 = vmatpush1.bf16.msra.mxu0 %v3518
      %3639 = vmatprep.subr.bf16.mxu0 0
      %3640 = vmatpush2.bf16.msra.mxu0 0
      %3641 = vmatprep.subr.bf16.mxu0 0
      %3642 = vmatpush2.bf16.msra.mxu0 0
      %3643 = vmatprep.subr.bf16.mxu0 0
      %3644 = vmatpush2.bf16.msra.mxu0 0
      %3645 = vmatprep.subr.bf16.mxu0 0
      %3646 = vmatpush2.bf16.msra.mxu0 0
      %3647 = vmatprep.subr.bf16.mxu0 0
      %3648 = vmatpush2.bf16.msra.mxu0 0
      %3649 = vmatprep.subr.bf16.mxu0 0
      %3650 = vmatpush2.bf16.msra.mxu0 0
      %3651 = vmatprep.subr.bf16.mxu0 0
      %3652 = vmatpush2.bf16.msra.mxu0 0
      %3653 = vmatprep.subr.bf16.mxu0 0
      %3654 = vmatpush2.bf16.msra.mxu0 0
      %3655 = vmatprep.mubr.bf16.mxu0 0
      %3656 = vmatmul.mubr.bf16.gmra.mxu0 %v3366
      %v3657 = vpop.f32.mrf.mxu0
      %v3658 = vadd.f32 %v3585, %v3657
      %v3659 = vpop.f32.mrf.mxu0
      %v3660 = vpop.f32.mrf.mxu0
      %v3661 = vadd.f32 %v3588, %v3660
      %v3662 = vpop.f32.mrf.mxu0
      %3663 = vmatprep.mubr.bf16.mxu0 0
      %3664 = vmatmul.mubr.bf16.gmra.mxu0 %v3372
      %v3665 = vpop.f32.mrf.mxu0
      %v3666 = vadd.f32 %v3593, %v3665
      %v3667 = vpop.f32.mrf.mxu0
      %v3668 = vpop.f32.mrf.mxu0
      %v3669 = vadd.f32 %v3596, %v3668
      %v3670 = vpop.f32.mrf.mxu0
      %3671 = vmatprep.mubr.bf16.mxu0 0
      %3672 = vmatmul.mubr.bf16.gmra.mxu0 %v3378
      %v3673 = vpop.f32.mrf.mxu0
      %v3674 = vadd.f32 %v3601, %v3673
      %v3675 = vpop.f32.mrf.mxu0
      %v3676 = vpop.f32.mrf.mxu0
      %v3677 = vadd.f32 %v3604, %v3676
      %v3678 = vpop.f32.mrf.mxu0
      %3679 = vmatprep.mubr.bf16.mxu0 0
      %3680 = vmatmul.mubr.bf16.gmra.mxu0 %v3384
      %v3681 = vpop.f32.mrf.mxu0
      %v3682 = vadd.f32 %v3609, %v3681
      %v3683 = vpop.f32.mrf.mxu0
      %v3684 = vpop.f32.mrf.mxu0
      %v3685 = vadd.f32 %v3612, %v3684
      %v3686 = vpop.f32.mrf.mxu0
      %3687 = vmatprep.mubr.bf16.mxu0 0
      %3688 = vmatmul.mubr.bf16.gmra.mxu0 %v3390
      %v3689 = vpop.f32.mrf.mxu0
      %v3690 = vadd.f32 %v3617, %v3689
      %v3691 = vpop.f32.mrf.mxu0
      %v3692 = vpop.f32.mrf.mxu0
      %v3693 = vadd.f32 %v3620, %v3692
      %v3694 = vpop.f32.mrf.mxu0
      %3695 = vdwg.mxu0
      %v3696 = vadd.f32 %v3182, %v3658
      %v3697 = vadd.f32 %v3183, %v3661
      %v3698 = vadd.f32 %v3184, %v3666
      %v3699 = vadd.f32 %v3185, %v3669
      %v3700 = vadd.f32 %v3186, %v3674
      %v3701 = vadd.f32 %v3187, %v3677
      %v3702 = vadd.f32 %v3188, %v3682
      %v3703 = vadd.f32 %v3189, %v3685
      %v3704 = vadd.f32 %v3190, %v3690
      %v3705 = vadd.f32 %v3191, %v3693
      %v3706 = vld [vmem:[%s324 + $0x30] sm:$0x7]
      %v3707 = vld [vmem:[%s334 + $0x30] sm:$0x7]
      %v3708 = vld [vmem:[%s345 + $0x30] sm:$0x7]
      %v3710 = vunpack.c.l.b16 %v3706
      %v3711 = vpack.c.b16 %v3710, %v3710
      %v3713 = vunpack.c.l.b16 %v3707
      %v3714 = vpack.c.b16 %v3713, %v3713
      %v3716 = vunpack.c.l.b16 %v3708
      %v3717 = vpack.c.b16 %v3716, %v3716
      %s3718 = scalar_lea.vmem %s3, 1344
      %v3719 = vld [vmem:[%s3718] sm:$0xf]
      %v3720 = vld [vmem:[%s3718 + $0x4] sm:$0xf]
      %v3721 = vld [vmem:[%s3718 + $0x8] sm:$0xf]
      %v3722 = vld [vmem:[%s3718 + $0xc] sm:$0xf]
      %v3723 = vld [vmem:[%s3718 + $0x10] sm:$0xf]
      %v3724 = vld [vmem:[%s3718 + $0x14] sm:$0xf]
      %v3725 = vld [vmem:[%s3718 + $0x18] sm:$0xf]
      %v3726 = vld [vmem:[%s3718 + $0x1c] sm:$0xf]
      %v3727 = vld [vmem:[%s3718 + $0x20] sm:$0xf]
      %v3728 = vld [vmem:[%s3718 + $0x24] sm:$0xf]
      %v3729 = vld [vmem:[%s3718 + $0x28] sm:$0xf]
      %v3730 = vld [vmem:[%s3718 + $0x2c] sm:$0xf]
      %v3731 = vld [vmem:[%s3718 + $0x30] sm:$0xf]
      %v3732 = vld [vmem:[%s3718 + $0x34] sm:$0xf]
      %v3733 = vld [vmem:[%s3718 + $0x38] sm:$0xf]
      %v3734 = vld [vmem:[%s3718 + $0x3c] sm:$0xf]
      %v3735 = vld [vmem:[%s3718 + $0x40] sm:$0xf]
      %v3736 = vld [vmem:[%s3718 + $0x44] sm:$0xf]
      %v3737 = vld [vmem:[%s3718 + $0x48] sm:$0xf]
      %v3738 = vld [vmem:[%s3718 + $0x4c] sm:$0xf]
      %v3739 = vld [vmem:[%s3718 + $0x50] sm:$0xf]
      %v3740 = vld [vmem:[%s3718 + $0x54] sm:$0xf]
      %v3741 = vld [vmem:[%s3718 + $0x58] sm:$0xf]
      %v3742 = vld [vmem:[%s3718 + $0x5c] sm:$0xf]
      %v3743 = vld [vmem:[%s3718 + $0x60] sm:$0xf]
      %v3744 = vld [vmem:[%s3718 + $0x64] sm:$0xf]
      %v3745 = vld [vmem:[%s3718 + $0x68] sm:$0xf]
      %v3746 = vld [vmem:[%s3718 + $0x6c] sm:$0xf]
      %v3747 = vld [vmem:[%s3718 + $0x70] sm:$0xf]
      %v3748 = vld [vmem:[%s3718 + $0x74] sm:$0xf]
      %v3749 = vld [vmem:[%s3718 + $0x78] sm:$0xf]
      %v3750 = vld [vmem:[%s3718 + $0x7c] sm:$0xf]
      %v3751 = vld [vmem:[%s3718 + $0x80] sm:$0xf]
      %v3752 = vld [vmem:[%s3718 + $0x84] sm:$0xf]
      %v3753 = vld [vmem:[%s3718 + $0x88] sm:$0xf]
      %v3754 = vld [vmem:[%s3718 + $0x8c] sm:$0xf]
      %v3755 = vld [vmem:[%s3718 + $0x90] sm:$0xf]
      %v3756 = vld [vmem:[%s3718 + $0x94] sm:$0xf]
      %v3757 = vld [vmem:[%s3718 + $0x98] sm:$0xf]
      %v3758 = vld [vmem:[%s3718 + $0x9c] sm:$0xf]
      %v3759 = vld [vmem:[%s3718 + $0xa0] sm:$0xf]
      %v3760 = vld [vmem:[%s3718 + $0xa4] sm:$0xf]
      %v3761 = vld [vmem:[%s3718 + $0xa8] sm:$0xf]
      %v3762 = vld [vmem:[%s3718 + $0xac] sm:$0xf]
      %v3763 = vld [vmem:[%s3718 + $0xb0] sm:$0xf]
      %v3764 = vld [vmem:[%s3718 + $0xb4] sm:$0xf]
      %v3765 = vld [vmem:[%s3718 + $0xb8] sm:$0xf]
      %v3766 = vld [vmem:[%s3718 + $0xbc] sm:$0xf]
      %vm3767 = vsmask.f32 5376
      %v3769 = vshrl.u32 %v3247, 16
      %v3771 = vrot.slane %v3769, 2
      %v3772 = vshll.u32 %v3247, 16
      %v3774 = vrot.slane %v3772, 3
      %v3775 = vor.u32 %v3771, %v3774
      %v3777 = vshrl.u32 %v3248, 16
      %v3779 = vrot.slane %v3777, 2
      %v3780 = vshll.u32 %v3248, 16
      %v3782 = vrot.slane %v3780, 3
      %v3783 = vor.u32 %v3779, %v3782
      %v3784 = vsel %vm3767, %v3775, %v3783
      %v3786 = vshrl.u32 %v3275, 16
      %v3788 = vrot.slane %v3786, 2
      %v3789 = vshll.u32 %v3275, 16
      %v3791 = vrot.slane %v3789, 3
      %v3792 = vor.u32 %v3788, %v3791
      %v3794 = vshrl.u32 %v3276, 16
      %v3796 = vrot.slane %v3794, 2
      %v3797 = vshll.u32 %v3276, 16
      %v3799 = vrot.slane %v3797, 3
      %v3800 = vor.u32 %v3796, %v3799
      %v3801 = vsel %vm3767, %v3792, %v3800
      %v3803 = vshrl.u32 %v3303, 16
      %v3805 = vrot.slane %v3803, 2
      %v3806 = vshll.u32 %v3303, 16
      %v3808 = vrot.slane %v3806, 3
      %v3809 = vor.u32 %v3805, %v3808
      %v3811 = vshrl.u32 %v3304, 16
      %v3813 = vrot.slane %v3811, 2
      %v3814 = vshll.u32 %v3304, 16
      %v3816 = vrot.slane %v3814, 3
      %v3817 = vor.u32 %v3813, %v3816
      %v3818 = vsel %vm3767, %v3809, %v3817
      %v3820 = vshrl.u32 %v3249, 16
      %v3822 = vrot.slane %v3820, 2
      %v3823 = vshll.u32 %v3249, 16
      %v3825 = vrot.slane %v3823, 3
      %v3826 = vor.u32 %v3822, %v3825
      %v3827 = vsel %vm3767, %v3783, %v3826
      %v3829 = vshrl.u32 %v3277, 16
      %v3831 = vrot.slane %v3829, 2
      %v3832 = vshll.u32 %v3277, 16
      %v3834 = vrot.slane %v3832, 3
      %v3835 = vor.u32 %v3831, %v3834
      %v3836 = vsel %vm3767, %v3800, %v3835
      %v3838 = vshrl.u32 %v3305, 16
      %v3840 = vrot.slane %v3838, 2
      %v3841 = vshll.u32 %v3305, 16
      %v3843 = vrot.slane %v3841, 3
      %v3844 = vor.u32 %v3840, %v3843
      %v3845 = vsel %vm3767, %v3817, %v3844
      %v3847 = vshrl.u32 %v3250, 16
      %v3849 = vrot.slane %v3847, 2
      %v3850 = vshll.u32 %v3250, 16
      %v3852 = vrot.slane %v3850, 3
      %v3853 = vor.u32 %v3849, %v3852
      %v3854 = vsel %vm3767, %v3826, %v3853
      %v3856 = vshrl.u32 %v3278, 16
      %v3858 = vrot.slane %v3856, 2
      %v3859 = vshll.u32 %v3278, 16
      %v3861 = vrot.slane %v3859, 3
      %v3862 = vor.u32 %v3858, %v3861
      %v3863 = vsel %vm3767, %v3835, %v3862
      %v3865 = vshrl.u32 %v3306, 16
      %v3867 = vrot.slane %v3865, 2
      %v3868 = vshll.u32 %v3306, 16
      %v3870 = vrot.slane %v3868, 3
      %v3871 = vor.u32 %v3867, %v3870
      %v3872 = vsel %vm3767, %v3844, %v3871
      %v3874 = vshrl.u32 %v3251, 16
      %v3876 = vrot.slane %v3874, 2
      %v3877 = vshll.u32 %v3251, 16
      %v3879 = vrot.slane %v3877, 3
      %v3880 = vor.u32 %v3876, %v3879
      %v3881 = vsel %vm3767, %v3853, %v3880
      %v3883 = vshrl.u32 %v3279, 16
      %v3885 = vrot.slane %v3883, 2
      %v3886 = vshll.u32 %v3279, 16
      %v3888 = vrot.slane %v3886, 3
      %v3889 = vor.u32 %v3885, %v3888
      %v3890 = vsel %vm3767, %v3862, %v3889
      %v3892 = vshrl.u32 %v3307, 16
      %v3894 = vrot.slane %v3892, 2
      %v3895 = vshll.u32 %v3307, 16
      %v3897 = vrot.slane %v3895, 3
      %v3898 = vor.u32 %v3894, %v3897
      %v3899 = vsel %vm3767, %v3871, %v3898
      %v3901 = vshrl.u32 %v3711, 16
      %v3903 = vrot.slane %v3901, 2
      %v3904 = vshll.u32 %v3711, 16
      %v3906 = vrot.slane %v3904, 3
      %v3907 = vor.u32 %v3903, %v3906
      %v3908 = vsel %vm3767, %v3880, %v3907
      %v3910 = vshrl.u32 %v3714, 16
      %v3912 = vrot.slane %v3910, 2
      %v3913 = vshll.u32 %v3714, 16
      %v3915 = vrot.slane %v3913, 3
      %v3916 = vor.u32 %v3912, %v3915
      %v3917 = vsel %vm3767, %v3889, %v3916
      %v3919 = vshrl.u32 %v3717, 16
      %v3921 = vrot.slane %v3919, 2
      %v3922 = vshll.u32 %v3717, 16
      %v3924 = vrot.slane %v3922, 3
      %v3925 = vor.u32 %v3921, %v3924
      %v3926 = vsel %vm3767, %v3898, %v3925
      %v3990 = vunpack.c.l.b16 %v3719
      %v3991 = vunpack.c.l.b16 %v3720
      %v3992 = vunpack.c.l.b16 %v3721
      %v3993 = vunpack.c.l.b16 %v3722
      %v3994 = vunpack.c.l.b16 %v3723
      %v3995 = vunpack.c.l.b16 %v3724
      %v3996 = vunpack.c.l.b16 %v3725
      %v3997 = vunpack.c.l.b16 %v3726
      %v3998 = vunpack.c.l.b16 %v3727
      %v3999 = vunpack.c.l.b16 %v3728
      %v4000 = vunpack.c.l.b16 %v3729
      %v4001 = vunpack.c.l.b16 %v3730
      %v4002 = vunpack.c.l.b16 %v3731
      %v4003 = vunpack.c.l.b16 %v3732
      %v4004 = vunpack.c.l.b16 %v3733
      %v4005 = vunpack.c.l.b16 %v3734
      %v4006 = vunpack.c.l.b16 %v3735
      %v4007 = vunpack.c.l.b16 %v3736
      %v4008 = vunpack.c.l.b16 %v3737
      %v4009 = vunpack.c.l.b16 %v3738
      %v4010 = vunpack.c.l.b16 %v3739
      %v4011 = vunpack.c.l.b16 %v3740
      %v4012 = vunpack.c.l.b16 %v3741
      %v4013 = vunpack.c.l.b16 %v3742
      %v4014 = vunpack.c.l.b16 %v3743
      %v4015 = vunpack.c.l.b16 %v3744
      %v4016 = vunpack.c.l.b16 %v3745
      %v4017 = vunpack.c.l.b16 %v3746
      %v4018 = vunpack.c.l.b16 %v3747
      %v4019 = vunpack.c.l.b16 %v3748
      %v4020 = vunpack.c.l.b16 %v3749
      %v4021 = vunpack.c.l.b16 %v3750
      %v4022 = vunpack.c.l.b16 %v3751
      %v4023 = vunpack.c.l.b16 %v3752
      %v4024 = vunpack.c.l.b16 %v3753
      %v4025 = vunpack.c.l.b16 %v3754
      %v4026 = vunpack.c.l.b16 %v3755
      %v4027 = vunpack.c.l.b16 %v3756
      %v4028 = vunpack.c.l.b16 %v3757
      %v4029 = vunpack.c.l.b16 %v3758
      %v4030 = vunpack.c.l.b16 %v3759
      %v4031 = vunpack.c.l.b16 %v3760
      %v4032 = vunpack.c.l.b16 %v3761
      %v4033 = vunpack.c.l.b16 %v3762
      %v4034 = vunpack.c.l.b16 %v3763
      %v4035 = vunpack.c.l.b16 %v3764
      %v4036 = vunpack.c.l.b16 %v3765
      %v4037 = vunpack.c.l.b16 %v3766
      %v4038 = vpack.c.b16 %v3991, %v3990
      %v4039 = vpack.c.b16 %v3993, %v3992
      %v4040 = vpack.c.b16 %v3995, %v3994
      %v4041 = vpack.c.b16 %v3997, %v3996
      %v4042 = vpack.c.b16 %v3999, %v3998
      %v4043 = vpack.c.b16 %v4001, %v4000
      %v4044 = vpack.c.b16 %v4003, %v4002
      %v4045 = vpack.c.b16 %v4005, %v4004
      %v4046 = vpack.c.b16 %v4007, %v4006
      %v4047 = vpack.c.b16 %v4009, %v4008
      %v4048 = vpack.c.b16 %v4011, %v4010
      %v4049 = vpack.c.b16 %v4013, %v4012
      %v4050 = vpack.c.b16 %v4015, %v4014
      %v4051 = vpack.c.b16 %v4017, %v4016
      %v4052 = vpack.c.b16 %v4019, %v4018
      %v4053 = vpack.c.b16 %v4021, %v4020
      %v4054 = vpack.c.b16 %v4023, %v4022
      %v4055 = vpack.c.b16 %v4025, %v4024
      %v4056 = vpack.c.b16 %v4027, %v4026
      %v4057 = vpack.c.b16 %v4029, %v4028
      %v4058 = vpack.c.b16 %v4031, %v4030
      %v4059 = vpack.c.b16 %v4033, %v4032
      %v4060 = vpack.c.b16 %v4035, %v4034
      %v4061 = vpack.c.b16 %v4037, %v4036
      %4086 = vmatprep.subr.bf16.mxu0 0
      %4087 = vmatpush1.bf16.msra.mxu0 %v4045
      %4088 = vmatprep.subr.bf16.mxu0 0
      %4089 = vmatpush1.bf16.msra.mxu0 %v4044
      %4090 = vmatprep.subr.bf16.mxu0 0
      %4091 = vmatpush1.bf16.msra.mxu0 %v4043
      %4092 = vmatprep.subr.bf16.mxu0 0
      %4093 = vmatpush1.bf16.msra.mxu0 %v4042
      %4094 = vmatprep.subr.bf16.mxu0 0
      %4095 = vmatpush1.bf16.msra.mxu0 %v4041
      %4096 = vmatprep.subr.bf16.mxu0 0
      %4097 = vmatpush1.bf16.msra.mxu0 %v4040
      %4098 = vmatprep.subr.bf16.mxu0 0
      %4099 = vmatpush1.bf16.msra.mxu0 %v4039
      %4100 = vmatprep.subr.bf16.mxu0 0
      %4101 = vmatpush1.bf16.msra.mxu0 %v4038
      %4102 = vmatprep.subr.bf16.mxu0 0
      %4103 = vmatpush2.bf16.msra.mxu0 %v4053
      %4104 = vmatprep.subr.bf16.mxu0 0
      %4105 = vmatpush2.bf16.msra.mxu0 %v4052
      %4106 = vmatprep.subr.bf16.mxu0 0
      %4107 = vmatpush2.bf16.msra.mxu0 %v4051
      %4108 = vmatprep.subr.bf16.mxu0 0
      %4109 = vmatpush2.bf16.msra.mxu0 %v4050
      %4110 = vmatprep.subr.bf16.mxu0 0
      %4111 = vmatpush2.bf16.msra.mxu0 %v4049
      %4112 = vmatprep.subr.bf16.mxu0 0
      %4113 = vmatpush2.bf16.msra.mxu0 %v4048
      %4114 = vmatprep.subr.bf16.mxu0 0
      %4115 = vmatpush2.bf16.msra.mxu0 %v4047
      %4116 = vmatprep.subr.bf16.mxu0 0
      %4117 = vmatpush2.bf16.msra.mxu0 %v4046
      %4118 = vmatprep.mubr.bf16.mxu0 %v3801
      %4119 = vmatmul.mubr.bf16.gmra.mxu0 %v3784
      %v4120 = vpop.f32.mrf.mxu0
      %v4121 = vadd.f32 0.0, %v4120
      %v4122 = vpop.f32.mrf.mxu0
      %v4123 = vpop.f32.mrf.mxu0
      %v4124 = vadd.f32 0.0, %v4123
      %v4125 = vpop.f32.mrf.mxu0
      %4126 = vmatprep.mubr.bf16.mxu0 %v3836
      %4127 = vmatmul.mubr.bf16.gmra.mxu0 %v3827
      %v4128 = vpop.f32.mrf.mxu0
      %v4129 = vadd.f32 0.0, %v4128
      %v4130 = vpop.f32.mrf.mxu0
      %v4131 = vpop.f32.mrf.mxu0
      %v4132 = vadd.f32 0.0, %v4131
      %v4133 = vpop.f32.mrf.mxu0
      %4134 = vmatprep.mubr.bf16.mxu0 %v3863
      %4135 = vmatmul.mubr.bf16.gmra.mxu0 %v3854
      %v4136 = vpop.f32.mrf.mxu0
      %v4137 = vadd.f32 0.0, %v4136
      %v4138 = vpop.f32.mrf.mxu0
      %v4139 = vpop.f32.mrf.mxu0
      %v4140 = vadd.f32 0.0, %v4139
      %v4141 = vpop.f32.mrf.mxu0
      %4142 = vmatprep.mubr.bf16.mxu0 %v3890
      %4143 = vmatmul.mubr.bf16.gmra.mxu0 %v3881
      %v4144 = vpop.f32.mrf.mxu0
      %v4145 = vadd.f32 0.0, %v4144
      %v4146 = vpop.f32.mrf.mxu0
      %v4147 = vpop.f32.mrf.mxu0
      %v4148 = vadd.f32 0.0, %v4147
      %v4149 = vpop.f32.mrf.mxu0
      %4150 = vmatprep.mubr.bf16.mxu0 %v3917
      %4151 = vmatmul.mubr.bf16.gmra.mxu0 %v3908
      %v4152 = vpop.f32.mrf.mxu0
      %v4153 = vadd.f32 0.0, %v4152
      %v4154 = vpop.f32.mrf.mxu0
      %v4155 = vpop.f32.mrf.mxu0
      %v4156 = vadd.f32 0.0, %v4155
      %v4157 = vpop.f32.mrf.mxu0
      %4158 = vdwg.mxu0
      %4159 = vmatprep.subr.bf16.mxu0 0
      %4160 = vmatpush1.bf16.msra.mxu0 %v4061
      %4161 = vmatprep.subr.bf16.mxu0 0
      %4162 = vmatpush1.bf16.msra.mxu0 %v4060
      %4163 = vmatprep.subr.bf16.mxu0 0
      %4164 = vmatpush1.bf16.msra.mxu0 %v4059
      %4165 = vmatprep.subr.bf16.mxu0 0
      %4166 = vmatpush1.bf16.msra.mxu0 %v4058
      %4167 = vmatprep.subr.bf16.mxu0 0
      %4168 = vmatpush1.bf16.msra.mxu0 %v4057
      %4169 = vmatprep.subr.bf16.mxu0 0
      %4170 = vmatpush1.bf16.msra.mxu0 %v4056
      %4171 = vmatprep.subr.bf16.mxu0 0
      %4172 = vmatpush1.bf16.msra.mxu0 %v4055
      %4173 = vmatprep.subr.bf16.mxu0 0
      %4174 = vmatpush1.bf16.msra.mxu0 %v4054
      %4175 = vmatprep.subr.bf16.mxu0 0
      %4176 = vmatpush2.bf16.msra.mxu0 0
      %4177 = vmatprep.subr.bf16.mxu0 0
      %4178 = vmatpush2.bf16.msra.mxu0 0
      %4179 = vmatprep.subr.bf16.mxu0 0
      %4180 = vmatpush2.bf16.msra.mxu0 0
      %4181 = vmatprep.subr.bf16.mxu0 0
      %4182 = vmatpush2.bf16.msra.mxu0 0
      %4183 = vmatprep.subr.bf16.mxu0 0
      %4184 = vmatpush2.bf16.msra.mxu0 0
      %4185 = vmatprep.subr.bf16.mxu0 0
      %4186 = vmatpush2.bf16.msra.mxu0 0
      %4187 = vmatprep.subr.bf16.mxu0 0
      %4188 = vmatpush2.bf16.msra.mxu0 0
      %4189 = vmatprep.subr.bf16.mxu0 0
      %4190 = vmatpush2.bf16.msra.mxu0 0
      %4191 = vmatprep.mubr.bf16.mxu0 0
      %4192 = vmatmul.mubr.bf16.gmra.mxu0 %v3818
      %v4193 = vpop.f32.mrf.mxu0
      %v4194 = vadd.f32 %v4121, %v4193
      %v4195 = vpop.f32.mrf.mxu0
      %v4196 = vpop.f32.mrf.mxu0
      %v4197 = vadd.f32 %v4124, %v4196
      %v4198 = vpop.f32.mrf.mxu0
      %4199 = vmatprep.mubr.bf16.mxu0 0
      %4200 = vmatmul.mubr.bf16.gmra.mxu0 %v3845
      %v4201 = vpop.f32.mrf.mxu0
      %v4202 = vadd.f32 %v4129, %v4201
      %v4203 = vpop.f32.mrf.mxu0
      %v4204 = vpop.f32.mrf.mxu0
      %v4205 = vadd.f32 %v4132, %v4204
      %v4206 = vpop.f32.mrf.mxu0
      %4207 = vmatprep.mubr.bf16.mxu0 0
      %4208 = vmatmul.mubr.bf16.gmra.mxu0 %v3872
      %v4209 = vpop.f32.mrf.mxu0
      %v4210 = vadd.f32 %v4137, %v4209
      %v4211 = vpop.f32.mrf.mxu0
      %v4212 = vpop.f32.mrf.mxu0
      %v4213 = vadd.f32 %v4140, %v4212
      %v4214 = vpop.f32.mrf.mxu0
      %4215 = vmatprep.mubr.bf16.mxu0 0
      %4216 = vmatmul.mubr.bf16.gmra.mxu0 %v3899
      %v4217 = vpop.f32.mrf.mxu0
      %v4218 = vadd.f32 %v4145, %v4217
      %v4219 = vpop.f32.mrf.mxu0
      %v4220 = vpop.f32.mrf.mxu0
      %v4221 = vadd.f32 %v4148, %v4220
      %v4222 = vpop.f32.mrf.mxu0
      %4223 = vmatprep.mubr.bf16.mxu0 0
      %4224 = vmatmul.mubr.bf16.gmra.mxu0 %v3926
      %v4225 = vpop.f32.mrf.mxu0
      %v4226 = vadd.f32 %v4153, %v4225
      %v4227 = vpop.f32.mrf.mxu0
      %v4228 = vpop.f32.mrf.mxu0
      %v4229 = vadd.f32 %v4156, %v4228
      %v4230 = vpop.f32.mrf.mxu0
      %4231 = vdwg.mxu0
      %v4232 = vadd.f32 %v3696, %v4194
      %v4233 = vadd.f32 %v3697, %v4197
      %v4234 = vadd.f32 %v3698, %v4202
      %v4235 = vadd.f32 %v3699, %v4205
      %v4236 = vadd.f32 %v3700, %v4210
      %v4237 = vadd.f32 %v3701, %v4213
      %v4238 = vadd.f32 %v3702, %v4218
      %v4239 = vadd.f32 %v3703, %v4221
      %v4240 = vadd.f32 %v3704, %v4226
      %v4241 = vadd.f32 %v3705, %v4229
      %v4242 = vld [vmem:[%s324 + $0x8] sm:$0x8]
      %v4243 = vld [vmem:[%s334 + $0x8] sm:$0x8]
      %v4244 = vld [vmem:[%s345 + $0x8] sm:$0x8]
      %v4246 = vunpack.c.l.b16 %v4242
      %v4247 = vpack.c.b16 %v3237, %v4246
      %v4249 = vunpack.c.l.b16 %v4243
      %v4250 = vpack.c.b16 %v3265, %v4249
      %v4252 = vunpack.c.l.b16 %v4244
      %v4253 = vpack.c.b16 %v3293, %v4252
      %s4254 = scalar_lea.vmem %s3, 1536
      %v4255 = vld [vmem:[%s4254] sm:$0xf]
      %v4256 = vld [vmem:[%s4254 + $0x4] sm:$0xf]
      %v4257 = vld [vmem:[%s4254 + $0x8] sm:$0xf]
      %v4258 = vld [vmem:[%s4254 + $0xc] sm:$0xf]
      %v4259 = vld [vmem:[%s4254 + $0x10] sm:$0xf]
      %v4260 = vld [vmem:[%s4254 + $0x14] sm:$0xf]
      %v4261 = vld [vmem:[%s4254 + $0x18] sm:$0xf]
      %v4262 = vld [vmem:[%s4254 + $0x1c] sm:$0xf]
      %v4263 = vld [vmem:[%s4254 + $0x20] sm:$0xf]
      %v4264 = vld [vmem:[%s4254 + $0x24] sm:$0xf]
      %v4265 = vld [vmem:[%s4254 + $0x28] sm:$0xf]
      %v4266 = vld [vmem:[%s4254 + $0x2c] sm:$0xf]
      %v4267 = vld [vmem:[%s4254 + $0x30] sm:$0xf]
      %v4268 = vld [vmem:[%s4254 + $0x34] sm:$0xf]
      %v4269 = vld [vmem:[%s4254 + $0x38] sm:$0xf]
      %v4270 = vld [vmem:[%s4254 + $0x3c] sm:$0xf]
      %v4271 = vld [vmem:[%s4254 + $0x40] sm:$0xf]
      %v4272 = vld [vmem:[%s4254 + $0x44] sm:$0xf]
      %v4273 = vld [vmem:[%s4254 + $0x48] sm:$0xf]
      %v4274 = vld [vmem:[%s4254 + $0x4c] sm:$0xf]
      %v4275 = vld [vmem:[%s4254 + $0x50] sm:$0xf]
      %v4276 = vld [vmem:[%s4254 + $0x54] sm:$0xf]
      %v4277 = vld [vmem:[%s4254 + $0x58] sm:$0xf]
      %v4278 = vld [vmem:[%s4254 + $0x5c] sm:$0xf]
      %v4279 = vld [vmem:[%s4254 + $0x60] sm:$0xf]
      %v4280 = vld [vmem:[%s4254 + $0x64] sm:$0xf]
      %v4281 = vld [vmem:[%s4254 + $0x68] sm:$0xf]
      %v4282 = vld [vmem:[%s4254 + $0x6c] sm:$0xf]
      %v4283 = vld [vmem:[%s4254 + $0x70] sm:$0xf]
      %v4284 = vld [vmem:[%s4254 + $0x74] sm:$0xf]
      %v4285 = vld [vmem:[%s4254 + $0x78] sm:$0xf]
      %v4286 = vld [vmem:[%s4254 + $0x7c] sm:$0xf]
      %v4287 = vld [vmem:[%s4254 + $0x80] sm:$0xf]
      %v4288 = vld [vmem:[%s4254 + $0x84] sm:$0xf]
      %v4289 = vld [vmem:[%s4254 + $0x88] sm:$0xf]
      %v4290 = vld [vmem:[%s4254 + $0x8c] sm:$0xf]
      %v4291 = vld [vmem:[%s4254 + $0x90] sm:$0xf]
      %v4292 = vld [vmem:[%s4254 + $0x94] sm:$0xf]
      %v4293 = vld [vmem:[%s4254 + $0x98] sm:$0xf]
      %v4294 = vld [vmem:[%s4254 + $0x9c] sm:$0xf]
      %v4295 = vld [vmem:[%s4254 + $0xa0] sm:$0xf]
      %v4296 = vld [vmem:[%s4254 + $0xa4] sm:$0xf]
      %v4297 = vld [vmem:[%s4254 + $0xa8] sm:$0xf]
      %v4298 = vld [vmem:[%s4254 + $0xac] sm:$0xf]
      %v4299 = vld [vmem:[%s4254 + $0xb0] sm:$0xf]
      %v4300 = vld [vmem:[%s4254 + $0xb4] sm:$0xf]
      %v4301 = vld [vmem:[%s4254 + $0xb8] sm:$0xf]
      %v4302 = vld [vmem:[%s4254 + $0xbc] sm:$0xf]
      %vm4303 = vcmask 1044480
      %v4304 = vrot.slane %v4247, 3
      %v4305 = vrot.slane %v3248, 3
      %v4306 = vsel %vm4303, %v4304, %v4305
      %v4307 = vrot.slane %v4250, 3
      %v4308 = vrot.slane %v3276, 3
      %v4309 = vsel %vm4303, %v4307, %v4308
      %v4310 = vrot.slane %v4253, 3
      %v4311 = vrot.slane %v3304, 3
      %v4312 = vsel %vm4303, %v4310, %v4311
      %v4313 = vrot.slane %v3249, 3
      %v4314 = vsel %vm4303, %v4305, %v4313
      %v4315 = vrot.slane %v3277, 3
      %v4316 = vsel %vm4303, %v4308, %v4315
      %v4317 = vrot.slane %v3305, 3
      %v4318 = vsel %vm4303, %v4311, %v4317
      %v4319 = vrot.slane %v3250, 3
      %v4320 = vsel %vm4303, %v4313, %v4319
      %v4321 = vrot.slane %v3278, 3
      %v4322 = vsel %vm4303, %v4315, %v4321
      %v4323 = vrot.slane %v3306, 3
      %v4324 = vsel %vm4303, %v4317, %v4323
      %v4325 = vrot.slane %v3251, 3
      %v4326 = vsel %vm4303, %v4319, %v4325
      %v4327 = vrot.slane %v3279, 3
      %v4328 = vsel %vm4303, %v4321, %v4327
      %v4329 = vrot.slane %v3307, 3
      %v4330 = vsel %vm4303, %v4323, %v4329
      %v4331 = vrot.slane %v3711, 3
      %v4332 = vsel %vm4303, %v4325, %v4331
      %v4333 = vrot.slane %v3714, 3
      %v4334 = vsel %vm4303, %v4327, %v4333
      %v4335 = vrot.slane %v3717, 3
      %v4336 = vsel %vm4303, %v4329, %v4335
      %v4400 = vunpack.c.l.b16 %v4255
      %v4401 = vunpack.c.l.b16 %v4256
      %v4402 = vunpack.c.l.b16 %v4257
      %v4403 = vunpack.c.l.b16 %v4258
      %v4404 = vunpack.c.l.b16 %v4259
      %v4405 = vunpack.c.l.b16 %v4260
      %v4406 = vunpack.c.l.b16 %v4261
      %v4407 = vunpack.c.l.b16 %v4262
      %v4408 = vunpack.c.l.b16 %v4263
      %v4409 = vunpack.c.l.b16 %v4264
      %v4410 = vunpack.c.l.b16 %v4265
      %v4411 = vunpack.c.l.b16 %v4266
      %v4412 = vunpack.c.l.b16 %v4267
      %v4413 = vunpack.c.l.b16 %v4268
      %v4414 = vunpack.c.l.b16 %v4269
      %v4415 = vunpack.c.l.b16 %v4270
      %v4416 = vunpack.c.l.b16 %v4271
      %v4417 = vunpack.c.l.b16 %v4272
      %v4418 = vunpack.c.l.b16 %v4273
      %v4419 = vunpack.c.l.b16 %v4274
      %v4420 = vunpack.c.l.b16 %v4275
      %v4421 = vunpack.c.l.b16 %v4276
      %v4422 = vunpack.c.l.b16 %v4277
      %v4423 = vunpack.c.l.b16 %v4278
      %v4424 = vunpack.c.l.b16 %v4279
      %v4425 = vunpack.c.l.b16 %v4280
      %v4426 = vunpack.c.l.b16 %v4281
      %v4427 = vunpack.c.l.b16 %v4282
      %v4428 = vunpack.c.l.b16 %v4283
      %v4429 = vunpack.c.l.b16 %v4284
      %v4430 = vunpack.c.l.b16 %v4285
      %v4431 = vunpack.c.l.b16 %v4286
      %v4432 = vunpack.c.l.b16 %v4287
      %v4433 = vunpack.c.l.b16 %v4288
      %v4434 = vunpack.c.l.b16 %v4289
      %v4435 = vunpack.c.l.b16 %v4290
      %v4436 = vunpack.c.l.b16 %v4291
      %v4437 = vunpack.c.l.b16 %v4292
      %v4438 = vunpack.c.l.b16 %v4293
      %v4439 = vunpack.c.l.b16 %v4294
      %v4440 = vunpack.c.l.b16 %v4295
      %v4441 = vunpack.c.l.b16 %v4296
      %v4442 = vunpack.c.l.b16 %v4297
      %v4443 = vunpack.c.l.b16 %v4298
      %v4444 = vunpack.c.l.b16 %v4299
      %v4445 = vunpack.c.l.b16 %v4300
      %v4446 = vunpack.c.l.b16 %v4301
      %v4447 = vunpack.c.l.b16 %v4302
      %v4448 = vpack.c.b16 %v4401, %v4400
      %v4449 = vpack.c.b16 %v4403, %v4402
      %v4450 = vpack.c.b16 %v4405, %v4404
      %v4451 = vpack.c.b16 %v4407, %v4406
      %v4452 = vpack.c.b16 %v4409, %v4408
      %v4453 = vpack.c.b16 %v4411, %v4410
      %v4454 = vpack.c.b16 %v4413, %v4412
      %v4455 = vpack.c.b16 %v4415, %v4414
      %v4456 = vpack.c.b16 %v4417, %v4416
      %v4457 = vpack.c.b16 %v4419, %v4418
      %v4458 = vpack.c.b16 %v4421, %v4420
      %v4459 = vpack.c.b16 %v4423, %v4422
      %v4460 = vpack.c.b16 %v4425, %v4424
      %v4461 = vpack.c.b16 %v4427, %v4426
      %v4462 = vpack.c.b16 %v4429, %v4428
      %v4463 = vpack.c.b16 %v4431, %v4430
      %v4464 = vpack.c.b16 %v4433, %v4432
      %v4465 = vpack.c.b16 %v4435, %v4434
      %v4466 = vpack.c.b16 %v4437, %v4436
      %v4467 = vpack.c.b16 %v4439, %v4438
      %v4468 = vpack.c.b16 %v4441, %v4440
      %v4469 = vpack.c.b16 %v4443, %v4442
      %v4470 = vpack.c.b16 %v4445, %v4444
      %v4471 = vpack.c.b16 %v4447, %v4446
      %4496 = vmatprep.subr.bf16.mxu0 0
      %4497 = vmatpush1.bf16.msra.mxu0 %v4455
      %4498 = vmatprep.subr.bf16.mxu0 0
      %4499 = vmatpush1.bf16.msra.mxu0 %v4454
      %4500 = vmatprep.subr.bf16.mxu0 0
      %4501 = vmatpush1.bf16.msra.mxu0 %v4453
      %4502 = vmatprep.subr.bf16.mxu0 0
      %4503 = vmatpush1.bf16.msra.mxu0 %v4452
      %4504 = vmatprep.subr.bf16.mxu0 0
      %4505 = vmatpush1.bf16.msra.mxu0 %v4451
      %4506 = vmatprep.subr.bf16.mxu0 0
      %4507 = vmatpush1.bf16.msra.mxu0 %v4450
      %4508 = vmatprep.subr.bf16.mxu0 0
      %4509 = vmatpush1.bf16.msra.mxu0 %v4449
      %4510 = vmatprep.subr.bf16.mxu0 0
      %4511 = vmatpush1.bf16.msra.mxu0 %v4448
      %4512 = vmatprep.subr.bf16.mxu0 0
      %4513 = vmatpush2.bf16.msra.mxu0 %v4463
      %4514 = vmatprep.subr.bf16.mxu0 0
      %4515 = vmatpush2.bf16.msra.mxu0 %v4462
      %4516 = vmatprep.subr.bf16.mxu0 0
      %4517 = vmatpush2.bf16.msra.mxu0 %v4461
      %4518 = vmatprep.subr.bf16.mxu0 0
      %4519 = vmatpush2.bf16.msra.mxu0 %v4460
      %4520 = vmatprep.subr.bf16.mxu0 0
      %4521 = vmatpush2.bf16.msra.mxu0 %v4459
      %4522 = vmatprep.subr.bf16.mxu0 0
      %4523 = vmatpush2.bf16.msra.mxu0 %v4458
      %4524 = vmatprep.subr.bf16.mxu0 0
      %4525 = vmatpush2.bf16.msra.mxu0 %v4457
      %4526 = vmatprep.subr.bf16.mxu0 0
      %4527 = vmatpush2.bf16.msra.mxu0 %v4456
      %4528 = vmatprep.mubr.bf16.mxu0 %v4309
      %4529 = vmatmul.mubr.bf16.gmra.mxu0 %v4306
      %v4530 = vpop.f32.mrf.mxu0
      %v4531 = vadd.f32 0.0, %v4530
      %v4532 = vpop.f32.mrf.mxu0
      %v4533 = vpop.f32.mrf.mxu0
      %v4534 = vadd.f32 0.0, %v4533
      %v4535 = vpop.f32.mrf.mxu0
      %4536 = vmatprep.mubr.bf16.mxu0 %v4316
      %4537 = vmatmul.mubr.bf16.gmra.mxu0 %v4314
      %v4538 = vpop.f32.mrf.mxu0
      %v4539 = vadd.f32 0.0, %v4538
      %v4540 = vpop.f32.mrf.mxu0
      %v4541 = vpop.f32.mrf.mxu0
      %v4542 = vadd.f32 0.0, %v4541
      %v4543 = vpop.f32.mrf.mxu0
      %4544 = vmatprep.mubr.bf16.mxu0 %v4322
      %4545 = vmatmul.mubr.bf16.gmra.mxu0 %v4320
      %v4546 = vpop.f32.mrf.mxu0
      %v4547 = vadd.f32 0.0, %v4546
      %v4548 = vpop.f32.mrf.mxu0
      %v4549 = vpop.f32.mrf.mxu0
      %v4550 = vadd.f32 0.0, %v4549
      %v4551 = vpop.f32.mrf.mxu0
      %4552 = vmatprep.mubr.bf16.mxu0 %v4328
      %4553 = vmatmul.mubr.bf16.gmra.mxu0 %v4326
      %v4554 = vpop.f32.mrf.mxu0
      %v4555 = vadd.f32 0.0, %v4554
      %v4556 = vpop.f32.mrf.mxu0
      %v4557 = vpop.f32.mrf.mxu0
      %v4558 = vadd.f32 0.0, %v4557
      %v4559 = vpop.f32.mrf.mxu0
      %4560 = vmatprep.mubr.bf16.mxu0 %v4334
      %4561 = vmatmul.mubr.bf16.gmra.mxu0 %v4332
      %v4562 = vpop.f32.mrf.mxu0
      %v4563 = vadd.f32 0.0, %v4562
      %v4564 = vpop.f32.mrf.mxu0
      %v4565 = vpop.f32.mrf.mxu0
      %v4566 = vadd.f32 0.0, %v4565
      %v4567 = vpop.f32.mrf.mxu0
      %4568 = vdwg.mxu0
      %4569 = vmatprep.subr.bf16.mxu0 0
      %4570 = vmatpush1.bf16.msra.mxu0 %v4471
      %4571 = vmatprep.subr.bf16.mxu0 0
      %4572 = vmatpush1.bf16.msra.mxu0 %v4470
      %4573 = vmatprep.subr.bf16.mxu0 0
      %4574 = vmatpush1.bf16.msra.mxu0 %v4469
      %4575 = vmatprep.subr.bf16.mxu0 0
      %4576 = vmatpush1.bf16.msra.mxu0 %v4468
      %4577 = vmatprep.subr.bf16.mxu0 0
      %4578 = vmatpush1.bf16.msra.mxu0 %v4467
      %4579 = vmatprep.subr.bf16.mxu0 0
      %4580 = vmatpush1.bf16.msra.mxu0 %v4466
      %4581 = vmatprep.subr.bf16.mxu0 0
      %4582 = vmatpush1.bf16.msra.mxu0 %v4465
      %4583 = vmatprep.subr.bf16.mxu0 0
      %4584 = vmatpush1.bf16.msra.mxu0 %v4464
      %4585 = vmatprep.subr.bf16.mxu0 0
      %4586 = vmatpush2.bf16.msra.mxu0 0
      %4587 = vmatprep.subr.bf16.mxu0 0
      %4588 = vmatpush2.bf16.msra.mxu0 0
      %4589 = vmatprep.subr.bf16.mxu0 0
      %4590 = vmatpush2.bf16.msra.mxu0 0
      %4591 = vmatprep.subr.bf16.mxu0 0
      %4592 = vmatpush2.bf16.msra.mxu0 0
      %4593 = vmatprep.subr.bf16.mxu0 0
      %4594 = vmatpush2.bf16.msra.mxu0 0
      %4595 = vmatprep.subr.bf16.mxu0 0
      %4596 = vmatpush2.bf16.msra.mxu0 0
      %4597 = vmatprep.subr.bf16.mxu0 0
      %4598 = vmatpush2.bf16.msra.mxu0 0
      %4599 = vmatprep.subr.bf16.mxu0 0
      %4600 = vmatpush2.bf16.msra.mxu0 0
      %4601 = vmatprep.mubr.bf16.mxu0 0
      %4602 = vmatmul.mubr.bf16.gmra.mxu0 %v4312
      %v4603 = vpop.f32.mrf.mxu0
      %v4604 = vadd.f32 %v4531, %v4603
      %v4605 = vpop.f32.mrf.mxu0
      %v4606 = vpop.f32.mrf.mxu0
      %v4607 = vadd.f32 %v4534, %v4606
      %v4608 = vpop.f32.mrf.mxu0
      %4609 = vmatprep.mubr.bf16.mxu0 0
      %4610 = vmatmul.mubr.bf16.gmra.mxu0 %v4318
      %v4611 = vpop.f32.mrf.mxu0
      %v4612 = vadd.f32 %v4539, %v4611
      %v4613 = vpop.f32.mrf.mxu0
      %v4614 = vpop.f32.mrf.mxu0
      %v4615 = vadd.f32 %v4542, %v4614
      %v4616 = vpop.f32.mrf.mxu0
      %4617 = vmatprep.mubr.bf16.mxu0 0
      %4618 = vmatmul.mubr.bf16.gmra.mxu0 %v4324
      %v4619 = vpop.f32.mrf.mxu0
      %v4620 = vadd.f32 %v4547, %v4619
      %v4621 = vpop.f32.mrf.mxu0
      %v4622 = vpop.f32.mrf.mxu0
      %v4623 = vadd.f32 %v4550, %v4622
      %v4624 = vpop.f32.mrf.mxu0
      %4625 = vmatprep.mubr.bf16.mxu0 0
      %4626 = vmatmul.mubr.bf16.gmra.mxu0 %v4330
      %v4627 = vpop.f32.mrf.mxu0
      %v4628 = vadd.f32 %v4555, %v4627
      %v4629 = vpop.f32.mrf.mxu0
      %v4630 = vpop.f32.mrf.mxu0
      %v4631 = vadd.f32 %v4558, %v4630
      %v4632 = vpop.f32.mrf.mxu0
      %4633 = vmatprep.mubr.bf16.mxu0 0
      %4634 = vmatmul.mubr.bf16.gmra.mxu0 %v4336
      %v4635 = vpop.f32.mrf.mxu0
      %v4636 = vadd.f32 %v4563, %v4635
      %v4637 = vpop.f32.mrf.mxu0
      %v4638 = vpop.f32.mrf.mxu0
      %v4639 = vadd.f32 %v4566, %v4638
      %v4640 = vpop.f32.mrf.mxu0
      %4641 = vdwg.mxu0
      %v4642 = vadd.f32 %v4232, %v4604
      %v4643 = vadd.f32 %v4233, %v4607
      %v4644 = vadd.f32 %v4234, %v4612
      %v4645 = vadd.f32 %v4235, %v4615
      %v4646 = vadd.f32 %v4236, %v4620
      %v4647 = vadd.f32 %v4237, %v4623
      %v4648 = vadd.f32 %v4238, %v4628
      %v4649 = vadd.f32 %v4239, %v4631
      %v4650 = vadd.f32 %v4240, %v4636
      %v4651 = vadd.f32 %v4241, %v4639
      %v4652 = vpack.c.bf16 %v4643, %v4642
      %v4653 = vpack.c.bf16 %v4645, %v4644
      %v4654 = vpack.c.bf16 %v4647, %v4646
      %v4655 = vpack.c.bf16 %v4649, %v4648
      %v4656 = vpack.c.bf16 %v4651, %v4650
      %v4662 = vunpack.c.l.b16 %v4652
      %v4663 = vunpack.c.h.b16 %v4652
      %v4664 = vunpack.c.l.b16 %v4653
      %v4665 = vunpack.c.h.b16 %v4653
      %v4666 = vunpack.c.l.b16 %v4654
      %v4667 = vunpack.c.h.b16 %v4654
      %v4668 = vunpack.c.l.b16 %v4655
      %v4669 = vunpack.c.h.b16 %v4655
      %v4670 = vunpack.c.l.b16 %v4656
      %v4671 = vunpack.c.h.b16 %v4656
      %v4672 = vpack.c.b16 %v4662, %v4662
      %v4673 = vpack.c.b16 %v4663, %v4663
      %v4674 = vpack.c.b16 %v4664, %v4664
      %v4675 = vpack.c.b16 %v4665, %v4665
      %v4676 = vpack.c.b16 %v4666, %v4666
      %v4677 = vpack.c.b16 %v4667, %v4667
      %v4678 = vpack.c.b16 %v4668, %v4668
      %v4679 = vpack.c.b16 %v4669, %v4669
      %v4680 = vpack.c.b16 %v4670, %v4670
      %v4681 = vpack.c.b16 %v4671, %v4671
      %4692 = vst [vmem:[%s355] sm:$0xf] %v4672
      %4693 = vst [vmem:[%s355 + $0x4] sm:$0xf] %v4673
      %4694 = vst [vmem:[%s355 + $0x8] sm:$0xf] %v4674
      %4695 = vst [vmem:[%s355 + $0xc] sm:$0xf] %v4675
      %4696 = vst [vmem:[%s355 + $0x10] sm:$0xf] %v4676
      %4697 = vst [vmem:[%s355 + $0x14] sm:$0xf] %v4677
      %4698 = vst [vmem:[%s355 + $0x18] sm:$0xf] %v4678
      %4699 = vst [vmem:[%s355 + $0x1c] sm:$0xf] %v4679
      %4700 = vst [vmem:[%s355 + $0x20] sm:$0xf] %v4680
      %4701 = vst [vmem:[%s355 + $0x24] sm:$0xf] %v4681
      %v4702 = vlaneseq
      %v4703 = vshrl.u32 %v4702, 7
      %v4704 = vadd.s32 %v4703, 8
      %v4705 = vadd.s32 %v4703, 16
      %v4706 = vadd.s32 %v4703, 24
      %v4707 = vadd.s32 %v4703, 32
      %v4708 = vadd.s32 %v4703, 40
      %v4709 = vadd.s32 %v4703, 48
      %v4710 = vadd.s32 %v4703, 56
      %v4711 = vadd.s32 %v4703, 64
      %v4712 = vadd.s32 %v4703, 72
      %vm4713 = vcmp.lt.s32.totalorder %v4703, 0
      %v4714 = vsub.s32 0, %v4703
      %v4715 = vsel %vm4713, %v4714, %v4703
      %v4716 = vmul.u32.u64.compose %v4715, 3435973837
      %v4717 = vextract.low.u32 %v4716
      %v4718 = vextract.high.u32 %v4716
      %v4719 = vshrl.u32 %v4718, 3
      %v4720 = vmul.u32 %v4719, 10
      %v4721 = vsub.s32 %v4715, %v4720
      %v4722 = vsub.s32 0, %v4721
      %v4723 = vsel %vm4713, %v4722, %v4721
      %vm4724 = vcmp.lt.s32.totalorder %v4704, 0
      %v4725 = vsub.s32 0, %v4704
      %v4726 = vsel %vm4724, %v4725, %v4704
      %v4727 = vmul.u32.u64.compose %v4726, 3435973837
      %v4728 = vextract.low.u32 %v4727
      %v4729 = vextract.high.u32 %v4727
      %v4730 = vshrl.u32 %v4729, 3
      %v4731 = vmul.u32 %v4730, 10
      %v4732 = vsub.s32 %v4726, %v4731
      %v4733 = vsub.s32 0, %v4732
      %v4734 = vsel %vm4724, %v4733, %v4732
      %vm4735 = vcmp.lt.s32.totalorder %v4705, 0
      %v4736 = vsub.s32 0, %v4705
      %v4737 = vsel %vm4735, %v4736, %v4705
      %v4738 = vmul.u32.u64.compose %v4737, 3435973837
      %v4739 = vextract.low.u32 %v4738
      %v4740 = vextract.high.u32 %v4738
      %v4741 = vshrl.u32 %v4740, 3
      %v4742 = vmul.u32 %v4741, 10
      %v4743 = vsub.s32 %v4737, %v4742
      %v4744 = vsub.s32 0, %v4743
      %v4745 = vsel %vm4735, %v4744, %v4743
      %vm4746 = vcmp.lt.s32.totalorder %v4706, 0
      %v4747 = vsub.s32 0, %v4706
      %v4748 = vsel %vm4746, %v4747, %v4706
      %v4749 = vmul.u32.u64.compose %v4748, 3435973837
      %v4750 = vextract.low.u32 %v4749
      %v4751 = vextract.high.u32 %v4749
      %v4752 = vshrl.u32 %v4751, 3
      %v4753 = vmul.u32 %v4752, 10
      %v4754 = vsub.s32 %v4748, %v4753
      %v4755 = vsub.s32 0, %v4754
      %v4756 = vsel %vm4746, %v4755, %v4754
      %vm4757 = vcmp.lt.s32.totalorder %v4707, 0
      %v4758 = vsub.s32 0, %v4707
      %v4759 = vsel %vm4757, %v4758, %v4707
      %v4760 = vmul.u32.u64.compose %v4759, 3435973837
      %v4761 = vextract.low.u32 %v4760
      %v4762 = vextract.high.u32 %v4760
      %v4763 = vshrl.u32 %v4762, 3
      %v4764 = vmul.u32 %v4763, 10
      %v4765 = vsub.s32 %v4759, %v4764
      %v4766 = vsub.s32 0, %v4765
      %v4767 = vsel %vm4757, %v4766, %v4765
      %vm4768 = vcmp.lt.s32.totalorder %v4708, 0
      %v4769 = vsub.s32 0, %v4708
      %v4770 = vsel %vm4768, %v4769, %v4708
      %v4771 = vmul.u32.u64.compose %v4770, 3435973837
      %v4772 = vextract.low.u32 %v4771
      %v4773 = vextract.high.u32 %v4771
      %v4774 = vshrl.u32 %v4773, 3
      %v4775 = vmul.u32 %v4774, 10
      %v4776 = vsub.s32 %v4770, %v4775
      %v4777 = vsub.s32 0, %v4776
      %v4778 = vsel %vm4768, %v4777, %v4776
      %vm4779 = vcmp.lt.s32.totalorder %v4709, 0
      %v4780 = vsub.s32 0, %v4709
      %v4781 = vsel %vm4779, %v4780, %v4709
      %v4782 = vmul.u32.u64.compose %v4781, 3435973837
      %v4783 = vextract.low.u32 %v4782
      %v4784 = vextract.high.u32 %v4782
      %v4785 = vshrl.u32 %v4784, 3
      %v4786 = vmul.u32 %v4785, 10
      %v4787 = vsub.s32 %v4781, %v4786
      %v4788 = vsub.s32 0, %v4787
      %v4789 = vsel %vm4779, %v4788, %v4787
      %vm4790 = vcmp.lt.s32.totalorder %v4710, 0
      %v4791 = vsub.s32 0, %v4710
      %v4792 = vsel %vm4790, %v4791, %v4710
      %v4793 = vmul.u32.u64.compose %v4792, 3435973837
      %v4794 = vextract.low.u32 %v4793
      %v4795 = vextract.high.u32 %v4793
      %v4796 = vshrl.u32 %v4795, 3
      %v4797 = vmul.u32 %v4796, 10
      %v4798 = vsub.s32 %v4792, %v4797
      %v4799 = vsub.s32 0, %v4798
      %v4800 = vsel %vm4790, %v4799, %v4798
      %vm4801 = vcmp.lt.s32.totalorder %v4711, 0
      %v4802 = vsub.s32 0, %v4711
      %v4803 = vsel %vm4801, %v4802, %v4711
      %v4804 = vmul.u32.u64.compose %v4803, 3435973837
      %v4805 = vextract.low.u32 %v4804
      %v4806 = vextract.high.u32 %v4804
      %v4807 = vshrl.u32 %v4806, 3
      %v4808 = vmul.u32 %v4807, 10
      %v4809 = vsub.s32 %v4803, %v4808
      %v4810 = vsub.s32 0, %v4809
      %v4811 = vsel %vm4801, %v4810, %v4809
      %vm4812 = vcmp.lt.s32.totalorder %v4712, 0
      %v4813 = vsub.s32 0, %v4712
      %v4814 = vsel %vm4812, %v4813, %v4712
      %v4815 = vmul.u32.u64.compose %v4814, 3435973837
      %v4816 = vextract.low.u32 %v4815
      %v4817 = vextract.high.u32 %v4815
      %v4818 = vshrl.u32 %v4817, 3
      %v4819 = vmul.u32 %v4818, 10
      %v4820 = vsub.s32 %v4814, %v4819
      %v4821 = vsub.s32 0, %v4820
      %v4822 = vsel %vm4812, %v4821, %v4820
      %vm4823 = vcmp.ne.s32.totalorder %v4723, 0
      %vm4824 = vcmp.ne.s32.totalorder %v4734, 0
      %vm4825 = vcmp.ne.s32.totalorder %v4745, 0
      %vm4826 = vcmp.ne.s32.totalorder %v4756, 0
      %vm4827 = vcmp.ne.s32.totalorder %v4767, 0
      %vm4828 = vcmp.ne.s32.totalorder %v4778, 0
      %vm4829 = vcmp.ne.s32.totalorder %v4789, 0
      %vm4830 = vcmp.ne.s32.totalorder %v4800, 0
      %vm4831 = vcmp.ne.s32.totalorder %v4811, 0
      %vm4832 = vcmp.ne.s32.totalorder %v4822, 0
      %vm4833 = vcmp.lt.s32.totalorder %v4723, 0
      %vm4834 = vcmp.lt.s32.totalorder %v4734, 0
      %vm4835 = vcmp.lt.s32.totalorder %v4745, 0
      %vm4836 = vcmp.lt.s32.totalorder %v4756, 0
      %vm4837 = vcmp.lt.s32.totalorder %v4767, 0
      %vm4838 = vcmp.lt.s32.totalorder %v4778, 0
      %vm4839 = vcmp.lt.s32.totalorder %v4789, 0
      %vm4840 = vcmp.lt.s32.totalorder %v4800, 0
      %vm4841 = vcmp.lt.s32.totalorder %v4811, 0
      %vm4842 = vcmp.lt.s32.totalorder %v4822, 0
      %vm4843 = vmand %vm4833, %vm4823
      %vm4844 = vmand %vm4834, %vm4824
      %vm4845 = vmand %vm4835, %vm4825
      %vm4846 = vmand %vm4836, %vm4826
      %vm4847 = vmand %vm4837, %vm4827
      %vm4848 = vmand %vm4838, %vm4828
      %vm4849 = vmand %vm4839, %vm4829
      %vm4850 = vmand %vm4840, %vm4830
      %vm4851 = vmand %vm4841, %vm4831
      %vm4852 = vmand %vm4842, %vm4832
      %v4853 = vadd.s32 %v4723, 10
      %v4854 = vadd.s32 %v4734, 10
      %v4855 = vadd.s32 %v4745, 10
      %v4856 = vadd.s32 %v4756, 10
      %v4857 = vadd.s32 %v4767, 10
      %v4858 = vadd.s32 %v4778, 10
      %v4859 = vadd.s32 %v4789, 10
      %v4860 = vadd.s32 %v4800, 10
      %v4861 = vadd.s32 %v4811, 10
      %v4862 = vadd.s32 %v4822, 10
      %v4863 = vsel %vm4843, %v4853, %v4723
      %v4864 = vsel %vm4844, %v4854, %v4734
      %v4865 = vsel %vm4845, %v4855, %v4745
      %v4866 = vsel %vm4846, %v4856, %v4756
      %v4867 = vsel %vm4847, %v4857, %v4767
      %v4868 = vsel %vm4848, %v4858, %v4778
      %v4869 = vsel %vm4849, %v4859, %v4789
      %v4870 = vsel %vm4850, %v4860, %v4800
      %v4871 = vsel %vm4851, %v4861, %v4811
      %v4872 = vsel %vm4852, %v4862, %v4822
      %vm4873 = vcmp.lt.s32.totalorder %v4863, 8
      %vm4874 = vcmp.lt.s32.totalorder %v4864, 8
      %vm4875 = vcmp.lt.s32.totalorder %v4865, 8
      %vm4876 = vcmp.lt.s32.totalorder %v4866, 8
      %vm4877 = vcmp.lt.s32.totalorder %v4867, 8
      %vm4878 = vcmp.lt.s32.totalorder %v4868, 8
      %vm4879 = vcmp.lt.s32.totalorder %v4869, 8
      %vm4880 = vcmp.lt.s32.totalorder %v4870, 8
      %vm4881 = vcmp.lt.s32.totalorder %v4871, 8
      %vm4882 = vcmp.lt.s32.totalorder %v4872, 8
      %v4883 = vsel %vm4873, 1, 0
      %v4884 = vsel %vm4874, 1, 0
      %v4885 = vsel %vm4875, 1, 0
      %v4886 = vsel %vm4876, 1, 0
      %v4887 = vsel %vm4877, 1, 0
      %v4888 = vsel %vm4878, 1, 0
      %v4889 = vsel %vm4879, 1, 0
      %v4890 = vsel %vm4880, 1, 0
      %v4891 = vsel %vm4881, 1, 0
      %v4892 = vsel %vm4882, 1, 0
      %vm4893 = vcmp.eq.s32.totalorder %v4883, 1
      %vm4894 = vcmp.eq.s32.totalorder %v4884, 1
      %vm4895 = vcmp.eq.s32.totalorder %v4885, 1
      %vm4896 = vcmp.eq.s32.totalorder %v4886, 1
      %vm4897 = vcmp.eq.s32.totalorder %v4887, 1
      %vm4898 = vcmp.eq.s32.totalorder %v4888, 1
      %vm4899 = vcmp.eq.s32.totalorder %v4889, 1
      %vm4900 = vcmp.eq.s32.totalorder %v4890, 1
      %vm4901 = vcmp.eq.s32.totalorder %v4891, 1
      %vm4902 = vcmp.eq.s32.totalorder %v4892, 1
      %v4903 = vsel %vm4893, %v4642, 0.0
      %v4904 = vsel %vm4894, %v4643, 0.0
      %v4905 = vsel %vm4895, %v4644, 0.0
      %v4906 = vsel %vm4896, %v4645, 0.0
      %v4907 = vsel %vm4897, %v4646, 0.0
      %v4908 = vsel %vm4898, %v4647, 0.0
      %v4909 = vsel %vm4899, %v4648, 0.0
      %v4910 = vsel %vm4900, %v4649, 0.0
      %v4911 = vsel %vm4901, %v4650, 0.0
      %v4912 = vsel %vm4902, %v4651, 0.0
      %v4913 = vadd.f32 %v4903, %v4904
      %v4914 = vadd.f32 %v4913, %v4905
      %v4915 = vadd.f32 %v4914, %v4906
      %v4916 = vadd.f32 %v4915, %v4907
      %v4917 = vadd.f32 %v4916, %v4908
      %v4918 = vadd.f32 %v4917, %v4909
      %v4919 = vadd.f32 %v4918, %v4910
      %v4920 = vadd.f32 %v4919, %v4911
      %v4921 = vadd.f32 %v4920, %v4912
      %v4922 = vrot.slane %v4921, 4
      %v4923 = vadd.f32 %v4921, %v4922
      %v4924 = vrot.slane %v4923, 2
      %v4925 = vadd.f32 %v4923, %v4924
      %v4926 = vrot.slane %v4925, 1
      %v4927 = vadd.f32 %v4925, %v4926
      %v4928 = vadd.f32 %v4927, 0.0
      %v4929 = vmul.f32 %v4903, %v4903
      %v4930 = vmul.f32 %v4904, %v4904
      %v4931 = vmul.f32 %v4905, %v4905
      %v4932 = vmul.f32 %v4906, %v4906
      %v4933 = vmul.f32 %v4907, %v4907
      %v4934 = vmul.f32 %v4908, %v4908
      %v4935 = vmul.f32 %v4909, %v4909
      %v4936 = vmul.f32 %v4910, %v4910
      %v4937 = vmul.f32 %v4911, %v4911
      %v4938 = vmul.f32 %v4912, %v4912
      %v4939 = vadd.f32 %v4929, %v4930
      %v4940 = vadd.f32 %v4939, %v4931
      %v4941 = vadd.f32 %v4940, %v4932
      %v4942 = vadd.f32 %v4941, %v4933
      %v4943 = vadd.f32 %v4942, %v4934
      %v4944 = vadd.f32 %v4943, %v4935
      %v4945 = vadd.f32 %v4944, %v4936
      %v4946 = vadd.f32 %v4945, %v4937
      %v4947 = vadd.f32 %v4946, %v4938
      %v4948 = vrot.slane %v4947, 4
      %v4949 = vadd.f32 %v4947, %v4948
      %v4950 = vrot.slane %v4949, 2
      %v4951 = vadd.f32 %v4949, %v4950
      %v4952 = vrot.slane %v4951, 1
      %v4953 = vadd.f32 %v4951, %v4952
      %v4954 = vadd.f32 %v4953, 0.0
      %vm4955 = vcmask 1040384
      %v4956 = vsel %vm4955, %v4928, %v4954
      %4957 = vst [vmem:[%s363] sm:$0x3] %v4956
      %p4958 = scmp.lt.s32.totalorder %s21, 1
      %s4959 = scalar_select %p4958, %s21, 1
      %p4960 = scmp.lt.s32.totalorder %s22, 7
      %s4961 = scalar_select %p4960, %s22, 7
      %s4962 = smul.addr %s4961, 10
      %s4963 = smul.addr %s4959, 80
      %s4964 = sadd.s32 %s4962, %s4963
      %s4965 = smul.addr %s4964, 4
      %s4966 = scalar_lea.vmem %s4, %s4965
      %p4967 = scmp.lt.s32.totalorder %s21, 1
      %s4968 = scalar_select %p4967, %s21, 1
      %p4969 = scmp.lt.s32.totalorder %s22, 7
      %s4970 = scalar_select %p4969, %s22, 7
      %s4971 = smul.addr %s4968, 8
      %s4972 = sadd.s32 %s4970, %s4971
      %s4973 = smul.addr %s4972, 2
      %s4974 = scalar_lea.vmem %s5, %s4973
      // Predicated region
      $region37: #{basic_block_forward.4} parent=35 // pred_check
        %p4975 = pneg %p158
      $region38: #{basic_block_forward.4} parent=35 // pred_check_branch
        %4977 = sbr.rel (%p4975) target = $region40
      $region39: #{basic_block_forward.4} parent=35 // pred_region
        _
      $region40: #{basic_block_forward.4} parent=35 // pred_fallthru
        _
      // Predicated region
      $region41: #{basic_block_forward.4} parent=35 // pred_check
        %p4978 = pneg %p186
      $region42: #{basic_block_forward.4} parent=35 // pred_check_branch
        %4980 = sbr.rel (%p4978) target = $region44
      $region43: #{basic_block_forward.4} parent=35 // pred_region
        _
      $region44: #{basic_block_forward.4} parent=35 // pred_fallthru
        _
    $region36: #{basic_block_forward.4} parent=5 // pred_fallthru
      _
    %p4981 = scmp.le.s32.totalorder 2, %s12
    // Predicated region
    $region45: #{basic_block_forward.4} parent=5 // pred_check
      %p4982 = pneg %p4981
    $region46: #{basic_block_forward.4} parent=5 // pred_check_branch
      %4984 = sbr.rel (%p4982) target = $region48
    $region47: #{basic_block_forward.4} parent=5 // pred_region
      %s4985 = ssub.s32 %s12, 2
      // Predicated region
      $region49: #{basic_block_forward.4} parent=47 // pred_check
        %p4986 = pneg %p164
      $region50: #{basic_block_forward.4} parent=47 // pred_check_branch
        %4988 = sbr.rel (%p4986) target = $region52
      $region51: #{basic_block_forward.4} parent=47 // pred_region
        %p4989 = scmp.lt.s32.totalorder %s23, 1
        %s4990 = scalar_select %p4989, %s23, 1
        %p4991 = scmp.lt.s32.totalorder %s24, 7
        %s4992 = scalar_select %p4991, %s24, 7
        %s4993 = smul.addr %s4992, 10
        %s4994 = smul.addr %s4990, 80
        %s4995 = sadd.s32 %s4993, %s4994
        %s4996 = smul.addr %s4995, 4
        %s4997 = scalar_lea.vmem %s4, %s4996
      $region52: #{basic_block_forward.4} parent=47 // pred_fallthru
        _
      // Predicated region
      $region53: #{basic_block_forward.4} parent=47 // pred_check
        %p4998 = pneg %p192
      $region54: #{basic_block_forward.4} parent=47 // pred_check_branch
        %5000 = sbr.rel (%p4998) target = $region56
      $region55: #{basic_block_forward.4} parent=47 // pred_region
        %p5001 = scmp.lt.s32.totalorder %s23, 1
        %s5002 = scalar_select %p5001, %s23, 1
        %p5003 = scmp.lt.s32.totalorder %s24, 7
        %s5004 = scalar_select %p5003, %s24, 7
        %s5005 = smul.addr %s5002, 8
        %s5006 = sadd.s32 %s5004, %s5005
        %s5007 = smul.addr %s5006, 2
        %s5008 = scalar_lea.vmem %s5, %s5007
      $region56: #{basic_block_forward.4} parent=47 // pred_fallthru
        _
    $region48: #{basic_block_forward.4} parent=5 // pred_fallthru
      _
  $region6: #{basic_block_forward.4} parent=0 // loop_footer
    %s16 = sadd.s32 1, %s12
  $region7: #{basic_block_forward.4} parent=0 // loop_footer_branch
    %11 = sbr.rel target = $region3
  $region8: #{basic_block_forward.4} parent=0 // loop_exit
    _

</llo_original>
